<compile_context>
chip_gen: v6e
topology: v6e:2x2x1
jax: 0.10.0
libtpu: 0.0.40
codegen_flags: <defaults>
</compile_context>

<pallas_src>
import functools

import jax
import jax.numpy as jnp
from jax import lax
from jax.experimental import pallas as pl
from jax.experimental.pallas import tpu as pltpu


# ----------------------------- Pallas kernel -------------------------------

def discriminator_kernel(x_ref, mask_ref,
                         wih_ref, bgi_ref,
                         whh_ref, bhhn_f_ref, bhhn_b_ref,
                         wtf_ref, wtb_ref, bt_ref,
                         out_ref,
                         gi_scr,
                         *, S, Bp, GP, fuse_hidden):
    """Bi-GRU + Linear + sigmoid.

    x_ref    : (S*Bp, E)      time-major, batch padded to 8-sublane multiple
    mask_ref : (S*Bp, GP)     precomputed 0/1 float length masks (full width)
    wih_ref  : (E, 2*3*GP)    fused fwd|bwd input weights, gates lane-padded
    bgi_ref  : (1, 2*3*GP)    b_ih (+ b_hh for r,z) pre-merged, same layout
    whh_ref  : fuse_hidden -> (2*GP, 2*3*GP) block-diag [Wf 0; 0 Wb]
               else        -> (2, GP, 3*GP)  stacked per-direction weights
    bhhn_*   : (1, GP)        b_hh of the n gate (stays inside r*(.))
    wtf/wtb  : (1, GP)        final-linear weights for h_fwd / h_bwd
    bt_ref   : (1, 1)
    out_ref  : (Bp, 1)
    gi_scr   : (S*Bp, 2*3*GP) VMEM scratch for the hoisted input projections
    """
    G3 = 3 * GP

    # ---- one big MXU pass: input projections for all steps & directions ----
    gi_scr[...] = (
        jnp.dot(x_ref[...], wih_ref[...], preferred_element_type=jnp.float32)
        + bgi_ref[...])

    bhhn_f = bhhn_f_ref[...]                     # (1, GP)
    bhhn_b = bhhn_b_ref[...]

    if fuse_hidden:
        whh_bd = whh_ref[...]                    # (2*GP, 2*G3) block-diagonal
    else:
        whh_f = whh_ref[0]                       # (GP, G3)
        whh_b = whh_ref[1]

    h0 = jnp.zeros((Bp, GP), jnp.float32)

    # ---- interleaved fwd/bwd recurrence -------------------------------------
    def step(t, carry):
        h_f, h_b = carry
        tb = S - 1 - t

        off_f = pl.multiple_of(t * Bp, Bp)
        off_b = pl.multiple_of(tb * Bp, Bp)
        gi_f = gi_scr[pl.ds(off_f, Bp), :G3]          # (Bp, G3)
        gi_b = gi_scr[pl.ds(off_b, Bp), G3:]          # (Bp, G3)
        m_f = mask_ref[pl.ds(off_f, Bp), :]           # (Bp, GP) 0/1 floats
        m_b = mask_ref[pl.ds(off_b, Bp), :]

        if fuse_hidden:
            # one block-diagonal hidden matmul per step (256-wide MXU path)
            h_cat = jnp.concatenate([h_f, h_b], axis=-1)      # (Bp, 2*GP)
            gh = jnp.dot(h_cat, whh_bd, preferred_element_type=jnp.float32)
            gh_f = gh[:, :G3]
            gh_b = gh[:, G3:]
        else:
            # 128-wide MXU path (v2-v5): two independent 128-K dots
            gh_f = jnp.dot(h_f, whh_f, preferred_element_type=jnp.float32)
            gh_b = jnp.dot(h_b, whh_b, preferred_element_type=jnp.float32)

        # forward direction gates (r, z, n) — slices are 128-lane aligned
        r_f = jax.nn.sigmoid(gi_f[:, 0:GP] + gh_f[:, 0:GP])
        z_f = jax.nn.sigmoid(gi_f[:, GP:2 * GP] + gh_f[:, GP:2 * GP])
        n_f = jnp.tanh(gi_f[:, 2 * GP:] + r_f * (gh_f[:, 2 * GP:] + bhhn_f))
        h_f_new = (1.0 - z_f) * n_f + z_f * h_f

        # backward direction gates
        r_b = jax.nn.sigmoid(gi_b[:, 0:GP] + gh_b[:, 0:GP])
        z_b = jax.nn.sigmoid(gi_b[:, GP:2 * GP] + gh_b[:, GP:2 * GP])
        n_b = jnp.tanh(gi_b[:, 2 * GP:] + r_b * (gh_b[:, 2 * GP:] + bhhn_b))
        h_b_new = (1.0 - z_b) * n_b + z_b * h_b

        # pack_padded_sequence masking with precomputed full-width masks
        h_f = m_f * h_f_new + (1.0 - m_f) * h_f
        h_b = m_b * h_b_new + (1.0 - m_b) * h_b
        return h_f, h_b

    unroll = True if S <= 32 else 4
    h_f, h_b = lax.fori_loop(0, S, step, (h0, h0), unroll=unroll)

    # ---- Linear(2H -> 1) as VPU multiply + lane reduction, then sigmoid ----
    logit = (jnp.sum(h_f * wtf_ref[...], axis=-1, keepdims=True)
             + jnp.sum(h_b * wtb_ref[...], axis=-1, keepdims=True)
             + bt_ref[...])                      # (Bp, 1)
    out_ref[...] = jax.nn.sigmoid(logit)


# ------------------------------- wrapper ------------------------------------

def _fuse_hidden_matmul():
    """Fuse the two per-step hidden dots into one block-diag dot only on chips
    with a 256-wide MXU (v6e / v7x). On 128-wide MXU chips (v2-v5) a 256-K
    pass splits into two passes and would regress, so keep split dots."""
    try:
        kind = jax.devices()[0].device_kind.lower()
    except Exception:
        return True
    return not any(v in kind for v in ("v2", "v3", "v4", "v5"))


def discriminator_forward(x, lengths, params, fuse_hidden=None):
    """Mirrors Discriminator.forward: sort by length desc, bi-GRU, Linear, sigmoid.

    Returns probs of shape (B, 1) in descending-length-sorted batch order,
    matching the PyTorch reference (which does not un-sort h).
    """
    B, S, E = x.shape
    H = params["hidden_size"]
    GP = max(128, ((H + 127) // 128) * 128)       # per-gate lane-aligned width
    G3 = 3 * GP
    Bp = ((B + 7) // 8) * 8                       # batch padded to 8 sublanes
    if fuse_hidden is None:
        fuse_hidden = _fuse_hidden_matmul()

    # glue in plain JAX: sort by length (descending), like torch.sort(...,descending=True)
    idx_sort = jnp.argsort(-lengths)
    x_sort = x[idx_sort].astype(jnp.float32)
    lengths_sort = lengths[idx_sort].astype(jnp.int32)

    # time-major, batch-padded, flattened: (S*Bp, E)
    x_tm = jnp.transpose(x_sort, (1, 0, 2))                       # (S, B, E)
    x_tm = jnp.pad(x_tm, ((0, 0), (0, Bp - B), (0, 0)))
    x2 = x_tm.reshape(S * Bp, E)

    # precomputed per-timestep length masks, broadcast to full gate width
    # (hoists compare + broadcast_in_dim out of the unrolled recurrence)
    len_p = jnp.pad(lengths_sort, (0, Bp - B))                    # pads -> len 0
    t_idx = jnp.arange(S, dtype=jnp.int32)
    mask2d = (t_idx[:, None] < len_p[None, :]).astype(jnp.float32)   # (S, Bp)
    mask = jnp.broadcast_to(mask2d[:, :, None], (S, Bp, GP)).reshape(S * Bp, GP)

    def prep_ih(w):       # (3H, E) -> (E, 3*GP), gate blocks zero-padded
        w3 = jnp.transpose(w.reshape(3, H, E), (2, 0, 1))         # (E, 3, H)
        return jnp.pad(w3, ((0, 0), (0, 0), (0, GP - H))).reshape(E, G3)

    def prep_hh(w):       # (3H, H) -> (GP, 3*GP); padded rows/cols are zero
        w3 = jnp.transpose(w.reshape(3, H, H), (2, 0, 1))         # (H_in, 3, H_out)
        return jnp.pad(w3, ((0, GP - H), (0, 0), (0, GP - H))).reshape(GP, G3)

    def prep_bgi(b_ih, b_hh):   # merged bias folded into gi: r,z get b_ih+b_hh; n gets b_ih
        bi = b_ih.reshape(3, H)
        bh = b_hh.reshape(3, H)
        b3 = jnp.stack([bi[0] + bh[0], bi[1] + bh[1], bi[2]])
        return jnp.pad(b3, ((0, 0), (0, GP - H))).reshape(1, G3)

    def prep_bhhn(b_hh):        # (3H,) -> (1, GP), n-gate hidden bias only
        return jnp.pad(b_hh.reshape(3, H)[2], (0, GP - H)).reshape(1, GP)

    wih_all = jnp.concatenate(
        [prep_ih(params["w_ih_f"]), prep_ih(params["w_ih_b"])], axis=1)   # (E, 2*G3)
    bgi_all = jnp.concatenate(
        [prep_bgi(params["b_ih_f"], params["b_hh_f"]),
         prep_bgi(params["b_ih_b"], params["b_hh_b"])], axis=1)           # (1, 2*G3)

    whh_f = prep_hh(params["w_hh_f"])
    whh_b = prep_hh(params["w_hh_b"])
    if fuse_hidden:
        zero = jnp.zeros((GP, G3), jnp.float32)
        whh_in = jnp.concatenate(
            [jnp.concatenate([whh_f, zero], axis=1),
             jnp.concatenate([zero, whh_b], axis=1)], axis=0)   # (2*GP, 2*G3)
    else:
        # TODO(synk): on v5e also cast x2/wih/whh to bf16 for the dots once the
        # accuracy budget allows (kept f32 here to preserve 1e-3 tolerance).
        whh_in = jnp.stack([whh_f, whh_b], axis=0)              # (2, GP, G3)

    bhhn_f = prep_bhhn(params["b_hh_f"])
    bhhn_b = prep_bhhn(params["b_hh_b"])

    wtf = jnp.pad(params["w_t"][0, :H], (0, GP - H)).reshape(1, GP)
    wtb = jnp.pad(params["w_t"][0, H:], (0, GP - H)).reshape(1, GP)
    bt = params["b_t"].reshape(1, 1).astype(jnp.float32)

    # explicit scoped-VMEM budget: residents + headroom, capped at v7x physical
    vmem_bytes = 4 * (S * Bp * (2 * G3 + E + GP)        # gi_scr + x2 + mask
                      + whh_in.size                     # hidden weights
                      + E * 2 * G3 + 2 * G3             # wih, bgi
                      + 4 * GP + Bp + 8)                # biases, wt, out
    vmem_limit = int(min(max(2 * vmem_bytes + (8 << 20), 32 << 20), 64 << 20))

    vspec = pl.BlockSpec(memory_space=pltpu.MemorySpace.VMEM)
    kernel = functools.partial(discriminator_kernel, S=S, Bp=Bp, GP=GP,
                               fuse_hidden=fuse_hidden)

    out = pl.pallas_call(
        kernel,
        out_shape=jax.ShapeDtypeStruct((Bp, 1), jnp.float32),
        in_specs=[vspec] * 10,
        out_specs=vspec,
        scratch_shapes=[pltpu.VMEM((S * Bp, 2 * G3), jnp.float32)],
        compiler_params=pltpu.CompilerParams(vmem_limit_bytes=vmem_limit),
    )(x2, mask, wih_all, bgi_all, whh_in, bhhn_f, bhhn_b, wtf, wtb, bt)

    return out[:B]


# --------------------------- pure-JAX reference ------------------------------

def reference_forward(x, lengths, p):
    idx = jnp.argsort(-lengths)
    xs = x[idx]
    ls = lengths[idx]
    B, S, E = x.shape
    H = p["hidden_size"]

    def cell(xt, h, wih, whh, bih, bhh):
        gi = xt @ wih.T + bih
        gh = h @ whh.T + bhh
        r = jax.nn.sigmoid(gi[:, :H] + gh[:, :H])
        z = jax.nn.sigmoid(gi[:, H:2 * H] + gh[:, H:2 * H])
        n = jnp.tanh(gi[:, 2 * H:] + r * gh[:, 2 * H:])
        return (1 - z) * n + z * h

    h_f = jnp.zeros((B, H), jnp.float32)
    for t in range(S):
        hn = cell(xs[:, t], h_f, p["w_ih_f"], p["w_hh_f"], p["b_ih_f"], p["b_hh_f"])
        h_f = jnp.where((t < ls)[:, None], hn, h_f)
    h_b = jnp.zeros((B, H), jnp.float32)
    for t in range(S - 1, -1, -1):
        hn = cell(xs[:, t], h_b, p["w_ih_b"], p["w_hh_b"], p["b_ih_b"], p["b_hh_b"])
        h_b = jnp.where((t < ls)[:, None], hn, h_b)
    h_cat = jnp.concatenate([h_f, h_b], axis=1)
    logit = h_cat @ p["w_t"].T + p["b_t"]
    return jax.nn.sigmoid(logit)


# ---------------------------------- main -------------------------------------

if __name__ == "__main__":
    B, S, E, H = 4, 8, 32, 32

    key = jax.random.PRNGKey(0)
    ks = jax.random.split(key, 12)
    scale = 1.0 / jnp.sqrt(jnp.float32(H))

    def u(k, shape):
        return jax.random.uniform(k, shape, jnp.float32, -scale, scale)

    params = {
        "hidden_size": H,
        # PyTorch GRU parameter shapes (gate order r, z, n)
        "w_ih_f": u(ks[0], (3 * H, E)), "w_hh_f": u(ks[1], (3 * H, H)),
        "b_ih_f": u(ks[2], (3 * H,)),   "b_hh_f": u(ks[3], (3 * H,)),
        "w_ih_b": u(ks[4], (3 * H, E)), "w_hh_b": u(ks[5], (3 * H, H)),
        "b_ih_b": u(ks[6], (3 * H,)),   "b_hh_b": u(ks[7], (3 * H,)),
        # nn.Linear(2H, 1)
        "w_t": u(ks[8], (1, 2 * H)),    "b_t": u(ks[9], (1,)),
    }

    x = jax.random.normal(ks[10], (B, S, E), jnp.float32)
    lengths = jnp.array([5, 8, 3, 7], dtype=jnp.int32)

    prob = discriminator_forward(x, lengths, params)
    prob = jax.block_until_ready(prob)

    ref = reference_forward(x, lengths, params)
    assert prob.shape == (B, 1)
    assert jnp.allclose(prob, ref, atol=1e-3, rtol=1e-3), (prob, ref)

    print("KERNEL_OK")
</pallas_src>

<mosaic_0001>
module attributes {stable_mosaic.version = 11 : i64} {
  func.func @discriminator_kernel(%arg0: memref<64x32xf32, #tpu.memory_space<vmem>>, %arg1: memref<64x128xf32, #tpu.memory_space<vmem>>, %arg2: memref<32x768xf32, #tpu.memory_space<vmem>>, %arg3: memref<1x768xf32, #tpu.memory_space<vmem>>, %arg4: memref<256x768xf32, #tpu.memory_space<vmem>>, %arg5: memref<1x128xf32, #tpu.memory_space<vmem>>, %arg6: memref<1x128xf32, #tpu.memory_space<vmem>>, %arg7: memref<1x128xf32, #tpu.memory_space<vmem>>, %arg8: memref<1x128xf32, #tpu.memory_space<vmem>>, %arg9: memref<1x1xf32, #tpu.memory_space<vmem>>, %arg10: memref<8x1xf32, #tpu.memory_space<vmem>>, %arg11: memref<64x768xf32, #tpu.memory_space<vmem>>) attributes {dimension_semantics = [], scalar_prefetch = 0 : i64, scratch_operands = 1 : i64, tpu.core_type = #tpu.core_type<tc>} {
    %c0 = arith.constant 0 : index
    %c0_0 = arith.constant 0 : index
    %0 = vector.load %arg0[%c0, %c0_0] : memref<64x32xf32, #tpu.memory_space<vmem>>, vector<64x32xf32>
    %c0_1 = arith.constant 0 : index
    %c0_2 = arith.constant 0 : index
    %1 = vector.load %arg2[%c0_1, %c0_2] : memref<32x768xf32, #tpu.memory_space<vmem>>, vector<32x768xf32>
    %cst = arith.constant dense<0.000000e+00> : vector<64x768xf32>
    %2 = tpu.matmul %0, %1, %cst {dimension_numbers = #tpu.dot_dimension_numbers<[1], [0], [0], [1], [0, 0, 1, 1], [], []>} : vector<64x32xf32>, vector<32x768xf32>, vector<64x768xf32> -> vector<64x768xf32>
    %c0_3 = arith.constant 0 : index
    %c0_4 = arith.constant 0 : index
    %3 = vector.load %arg3[%c0_3, %c0_4] : memref<1x768xf32, #tpu.memory_space<vmem>>, vector<1x768xf32>
    %4 = vector.broadcast %3 : vector<1x768xf32> to vector<64x768xf32>
    %5 = arith.addf %2, %4 : vector<64x768xf32>
    %c0_5 = arith.constant 0 : index
    %c0_6 = arith.constant 0 : index
    %6 = vector.load %arg11[%c0_5, %c0_6] : memref<64x768xf32, #tpu.memory_space<vmem>>, vector<64x768xf32>
    tpu.vector_store %arg11[%c0_5, %c0_6], %5 {strides = array<i32>} : memref<64x768xf32, #tpu.memory_space<vmem>>, vector<64x768xf32>,
    %c0_7 = arith.constant 0 : index
    %c0_8 = arith.constant 0 : index
    %7 = vector.load %arg5[%c0_7, %c0_8] : memref<1x128xf32, #tpu.memory_space<vmem>>, vector<1x128xf32>
    %c0_9 = arith.constant 0 : index
    %c0_10 = arith.constant 0 : index
    %8 = vector.load %arg6[%c0_9, %c0_10] : memref<1x128xf32, #tpu.memory_space<vmem>>, vector<1x128xf32>
    %c0_11 = arith.constant 0 : index
    %c0_12 = arith.constant 0 : index
    %9 = vector.load %arg4[%c0_11, %c0_12] : memref<256x768xf32, #tpu.memory_space<vmem>>, vector<256x768xf32>
    %cst_13 = arith.constant 0.000000e+00 : f32
    %10 = vector.broadcast %cst_13 : f32 to vector<8x128xf32>
    %c0_i32 = arith.constant 0 : i32
    %c7_i32 = arith.constant 7 : i32
    %11 = arith.subi %c7_i32, %c0_i32 : i32
    %c8_i32 = arith.constant 8 : i32
    %12 = arith.muli %c0_i32, %c8_i32 : i32
    %13 = tpu.assume_multiple %12, 8 : i32
    %c8_i32_14 = arith.constant 8 : i32
    %14 = arith.muli %11, %c8_i32_14 : i32
    %15 = tpu.assume_multiple %14, 8 : i32
    %16 = arith.index_cast %13 : i32 to index
    %c0_15 = arith.constant 0 : index
    %17 = vector.load %arg11[%16, %c0_15] : memref<64x768xf32, #tpu.memory_space<vmem>>, vector<8x384xf32>
    %18 = arith.index_cast %15 : i32 to index
    %c384 = arith.constant 384 : index
    %19 = vector.load %arg11[%18, %c384] : memref<64x768xf32, #tpu.memory_space<vmem>>, vector<8x384xf32>
    %20 = arith.index_cast %13 : i32 to index
    %c0_16 = arith.constant 0 : index
    %21 = vector.load %arg1[%20, %c0_16] : memref<64x128xf32, #tpu.memory_space<vmem>>, vector<8x128xf32>
    %22 = arith.index_cast %15 : i32 to index
    %c0_17 = arith.constant 0 : index
    %23 = vector.load %arg1[%22, %c0_17] : memref<64x128xf32, #tpu.memory_space<vmem>>, vector<8x128xf32>
    %24 = tpu.concatenate %10, %10 in 1 : vector<8x128xf32>, vector<8x128xf32> -> vector<8x256xf32>
    %cst_18 = arith.constant dense<0.000000e+00> : vector<8x768xf32>
    %25 = tpu.matmul %24, %9, %cst_18 {dimension_numbers = #tpu.dot_dimension_numbers<[1], [0], [0], [1], [0, 0, 1, 1], [], []>} : vector<8x256xf32>, vector<256x768xf32>, vector<8x768xf32> -> vector<8x768xf32>
    %26 = vector.extract_strided_slice %25 {offsets = [0, 0], sizes = [8, 384], strides = [1, 1]} : vector<8x768xf32> to vector<8x384xf32>
    %27 = vector.extract_strided_slice %25 {offsets = [0, 384], sizes = [8, 384], strides = [1, 1]} : vector<8x768xf32> to vector<8x384xf32>
    %28 = vector.extract_strided_slice %17 {offsets = [0, 0], sizes = [8, 128], strides = [1, 1]} : vector<8x384xf32> to vector<8x128xf32>
    %29 = vector.extract_strided_slice %26 {offsets = [0, 0], sizes = [8, 128], strides = [1, 1]} : vector<8x384xf32> to vector<8x128xf32>
    %30 = arith.addf %28, %29 : vector<8x128xf32>
    %31 = arith.negf %30 : vector<8x128xf32>
    %32 = math.exp %31 : vector<8x128xf32>
    %cst_19 = arith.constant 1.000000e+00 : f32
    %33 = vector.broadcast %cst_19 : f32 to vector<8x128xf32>
    %34 = arith.addf %33, %32 : vector<8x128xf32>
    %35 = arith.divf %33, %34 : vector<8x128xf32>
    %36 = vector.extract_strided_slice %17 {offsets = [0, 128], sizes = [8, 128], strides = [1, 1]} : vector<8x384xf32> to vector<8x128xf32>
    %37 = vector.extract_strided_slice %26 {offsets = [0, 128], sizes = [8, 128], strides = [1, 1]} : vector<8x384xf32> to vector<8x128xf32>
    %38 = arith.addf %36, %37 : vector<8x128xf32>
    %39 = arith.negf %38 : vector<8x128xf32>
    %40 = math.exp %39 : vector<8x128xf32>
    %cst_20 = arith.constant 1.000000e+00 : f32
    %41 = vector.broadcast %cst_20 : f32 to vector<8x128xf32>
    %42 = arith.addf %41, %40 : vector<8x128xf32>
    %43 = arith.divf %41, %42 : vector<8x128xf32>
    %44 = vector.extract_strided_slice %17 {offsets = [0, 256], sizes = [8, 128], strides = [1, 1]} : vector<8x384xf32> to vector<8x128xf32>
    %45 = vector.extract_strided_slice %26 {offsets = [0, 256], sizes = [8, 128], strides = [1, 1]} : vector<8x384xf32> to vector<8x128xf32>
    %46 = vector.broadcast %7 : vector<1x128xf32> to vector<8x128xf32>
    %47 = arith.addf %45, %46 : vector<8x128xf32>
    %48 = arith.mulf %35, %47 : vector<8x128xf32>
    %49 = arith.addf %44, %48 : vector<8x128xf32>
    %50 = math.tanh %49 : vector<8x128xf32>
    %cst_21 = arith.constant 1.000000e+00 : f32
    %51 = vector.broadcast %cst_21 : f32 to vector<8x128xf32>
    %52 = arith.subf %51, %43 : vector<8x128xf32>
    %53 = arith.mulf %52, %50 : vector<8x128xf32>
    %54 = arith.mulf %43, %10 : vector<8x128xf32>
    %55 = arith.addf %53, %54 : vector<8x128xf32>
    %56 = vector.extract_strided_slice %19 {offsets = [0, 0], sizes = [8, 128], strides = [1, 1]} : vector<8x384xf32> to vector<8x128xf32>
    %57 = vector.extract_strided_slice %27 {offsets = [0, 0], sizes = [8, 128], strides = [1, 1]} : vector<8x384xf32> to vector<8x128xf32>
    %58 = arith.addf %56, %57 : vector<8x128xf32>
    %59 = arith.negf %58 : vector<8x128xf32>
    %60 = math.exp %59 : vector<8x128xf32>
    %cst_22 = arith.constant 1.000000e+00 : f32
    %61 = vector.broadcast %cst_22 : f32 to vector<8x128xf32>
    %62 = arith.addf %61, %60 : vector<8x128xf32>
    %63 = arith.divf %61, %62 : vector<8x128xf32>
    %64 = vector.extract_strided_slice %19 {offsets = [0, 128], sizes = [8, 128], strides = [1, 1]} : vector<8x384xf32> to vector<8x128xf32>
    %65 = vector.extract_strided_slice %27 {offsets = [0, 128], sizes = [8, 128], strides = [1, 1]} : vector<8x384xf32> to vector<8x128xf32>
    %66 = arith.addf %64, %65 : vector<8x128xf32>
    %67 = arith.negf %66 : vector<8x128xf32>
    %68 = math.exp %67 : vector<8x128xf32>
    %cst_23 = arith.constant 1.000000e+00 : f32
    %69 = vector.broadcast %cst_23 : f32 to vector<8x128xf32>
    %70 = arith.addf %69, %68 : vector<8x128xf32>
    %71 = arith.divf %69, %70 : vector<8x128xf32>
    %72 = vector.extract_strided_slice %19 {offsets = [0, 256], sizes = [8, 128], strides = [1, 1]} : vector<8x384xf32> to vector<8x128xf32>
    %73 = vector.extract_strided_slice %27 {offsets = [0, 256], sizes = [8, 128], strides = [1, 1]} : vector<8x384xf32> to vector<8x128xf32>
    %74 = vector.broadcast %8 : vector<1x128xf32> to vector<8x128xf32>
    %75 = arith.addf %73, %74 : vector<8x128xf32>
    %76 = arith.mulf %63, %75 : vector<8x128xf32>
    %77 = arith.addf %72, %76 : vector<8x128xf32>
    %78 = math.tanh %77 : vector<8x128xf32>
    %cst_24 = arith.constant 1.000000e+00 : f32
    %79 = vector.broadcast %cst_24 : f32 to vector<8x128xf32>
    %80 = arith.subf %79, %71 : vector<8x128xf32>
    %81 = arith.mulf %80, %78 : vector<8x128xf32>
    %82 = arith.mulf %71, %10 : vector<8x128xf32>
    %83 = arith.addf %81, %82 : vector<8x128xf32>
    %84 = arith.mulf %21, %55 : vector<8x128xf32>
    %cst_25 = arith.constant 1.000000e+00 : f32
    %85 = vector.broadcast %cst_25 : f32 to vector<8x128xf32>
    %86 = arith.subf %85, %21 : vector<8x128xf32>
    %87 = arith.mulf %86, %10 : vector<8x128xf32>
    %88 = arith.addf %84, %87 : vector<8x128xf32>
    %89 = arith.mulf %23, %83 : vector<8x128xf32>
    %cst_26 = arith.constant 1.000000e+00 : f32
    %90 = vector.broadcast %cst_26 : f32 to vector<8x128xf32>
    %91 = arith.subf %90, %23 : vector<8x128xf32>
    %92 = arith.mulf %91, %10 : vector<8x128xf32>
    %93 = arith.addf %89, %92 : vector<8x128xf32>
    %c1_i32 = arith.constant 1 : i32
    %c7_i32_27 = arith.constant 7 : i32
    %94 = arith.subi %c7_i32_27, %c1_i32 : i32
    %c8_i32_28 = arith.constant 8 : i32
    %95 = arith.muli %c1_i32, %c8_i32_28 : i32
    %96 = tpu.assume_multiple %95, 8 : i32
    %c8_i32_29 = arith.constant 8 : i32
    %97 = arith.muli %94, %c8_i32_29 : i32
    %98 = tpu.assume_multiple %97, 8 : i32
    %99 = arith.index_cast %96 : i32 to index
    %c0_30 = arith.constant 0 : index
    %100 = vector.load %arg11[%99, %c0_30] : memref<64x768xf32, #tpu.memory_space<vmem>>, vector<8x384xf32>
    %101 = arith.index_cast %98 : i32 to index
    %c384_31 = arith.constant 384 : index
    %102 = vector.load %arg11[%101, %c384_31] : memref<64x768xf32, #tpu.memory_space<vmem>>, vector<8x384xf32>
    %103 = arith.index_cast %96 : i32 to index
    %c0_32 = arith.constant 0 : index
    %104 = vector.load %arg1[%103, %c0_32] : memref<64x128xf32, #tpu.memory_space<vmem>>, vector<8x128xf32>
    %105 = arith.index_cast %98 : i32 to index
    %c0_33 = arith.constant 0 : index
    %106 = vector.load %arg1[%105, %c0_33] : memref<64x128xf32, #tpu.memory_space<vmem>>, vector<8x128xf32>
    %107 = tpu.concatenate %88, %93 in 1 : vector<8x128xf32>, vector<8x128xf32> -> vector<8x256xf32>
    %cst_34 = arith.constant dense<0.000000e+00> : vector<8x768xf32>
    %108 = tpu.matmul %107, %9, %cst_34 {dimension_numbers = #tpu.dot_dimension_numbers<[1], [0], [0], [1], [0, 0, 1, 1], [], []>} : vector<8x256xf32>, vector<256x768xf32>, vector<8x768xf32> -> vector<8x768xf32>
    %109 = vector.extract_strided_slice %108 {offsets = [0, 0], sizes = [8, 384], strides = [1, 1]} : vector<8x768xf32> to vector<8x384xf32>
    %110 = vector.extract_strided_slice %108 {offsets = [0, 384], sizes = [8, 384], strides = [1, 1]} : vector<8x768xf32> to vector<8x384xf32>
    %111 = vector.extract_strided_slice %100 {offsets = [0, 0], sizes = [8, 128], strides = [1, 1]} : vector<8x384xf32> to vector<8x128xf32>
    %112 = vector.extract_strided_slice %109 {offsets = [0, 0], sizes = [8, 128], strides = [1, 1]} : vector<8x384xf32> to vector<8x128xf32>
    %113 = arith.addf %111, %112 : vector<8x128xf32>
    %114 = arith.negf %113 : vector<8x128xf32>
    %115 = math.exp %114 : vector<8x128xf32>
    %cst_35 = arith.constant 1.000000e+00 : f32
    %116 = vector.broadcast %cst_35 : f32 to vector<8x128xf32>
    %117 = arith.addf %116, %115 : vector<8x128xf32>
    %118 = arith.divf %116, %117 : vector<8x128xf32>
    %119 = vector.extract_strided_slice %100 {offsets = [0, 128], sizes = [8, 128], strides = [1, 1]} : vector<8x384xf32> to vector<8x128xf32>
    %120 = vector.extract_strided_slice %109 {offsets = [0, 128], sizes = [8, 128], strides = [1, 1]} : vector<8x384xf32> to vector<8x128xf32>
    %121 = arith.addf %119, %120 : vector<8x128xf32>
    %122 = arith.negf %121 : vector<8x128xf32>
    %123 = math.exp %122 : vector<8x128xf32>
    %cst_36 = arith.constant 1.000000e+00 : f32
    %124 = vector.broadcast %cst_36 : f32 to vector<8x128xf32>
    %125 = arith.addf %124, %123 : vector<8x128xf32>
    %126 = arith.divf %124, %125 : vector<8x128xf32>
    %127 = vector.extract_strided_slice %100 {offsets = [0, 256], sizes = [8, 128], strides = [1, 1]} : vector<8x384xf32> to vector<8x128xf32>
    %128 = vector.extract_strided_slice %109 {offsets = [0, 256], sizes = [8, 128], strides = [1, 1]} : vector<8x384xf32> to vector<8x128xf32>
    %129 = vector.broadcast %7 : vector<1x128xf32> to vector<8x128xf32>
    %130 = arith.addf %128, %129 : vector<8x128xf32>
    %131 = arith.mulf %118, %130 : vector<8x128xf32>
    %132 = arith.addf %127, %131 : vector<8x128xf32>
    %133 = math.tanh %132 : vector<8x128xf32>
    %cst_37 = arith.constant 1.000000e+00 : f32
    %134 = vector.broadcast %cst_37 : f32 to vector<8x128xf32>
    %135 = arith.subf %134, %126 : vector<8x128xf32>
    %136 = arith.mulf %135, %133 : vector<8x128xf32>
    %137 = arith.mulf %126, %88 : vector<8x128xf32>
    %138 = arith.addf %136, %137 : vector<8x128xf32>
    %139 = vector.extract_strided_slice %102 {offsets = [0, 0], sizes = [8, 128], strides = [1, 1]} : vector<8x384xf32> to vector<8x128xf32>
    %140 = vector.extract_strided_slice %110 {offsets = [0, 0], sizes = [8, 128], strides = [1, 1]} : vector<8x384xf32> to vector<8x128xf32>
    %141 = arith.addf %139, %140 : vector<8x128xf32>
    %142 = arith.negf %141 : vector<8x128xf32>
    %143 = math.exp %142 : vector<8x128xf32>
    %cst_38 = arith.constant 1.000000e+00 : f32
    %144 = vector.broadcast %cst_38 : f32 to vector<8x128xf32>
    %145 = arith.addf %144, %143 : vector<8x128xf32>
    %146 = arith.divf %144, %145 : vector<8x128xf32>
    %147 = vector.extract_strided_slice %102 {offsets = [0, 128], sizes = [8, 128], strides = [1, 1]} : vector<8x384xf32> to vector<8x128xf32>
    %148 = vector.extract_strided_slice %110 {offsets = [0, 128], sizes = [8, 128], strides = [1, 1]} : vector<8x384xf32> to vector<8x128xf32>
    %149 = arith.addf %147, %148 : vector<8x128xf32>
    %150 = arith.negf %149 : vector<8x128xf32>
    %151 = math.exp %150 : vector<8x128xf32>
    %cst_39 = arith.constant 1.000000e+00 : f32
    %152 = vector.broadcast %cst_39 : f32 to vector<8x128xf32>
    %153 = arith.addf %152, %151 : vector<8x128xf32>
    %154 = arith.divf %152, %153 : vector<8x128xf32>
    %155 = vector.extract_strided_slice %102 {offsets = [0, 256], sizes = [8, 128], strides = [1, 1]} : vector<8x384xf32> to vector<8x128xf32>
    %156 = vector.extract_strided_slice %110 {offsets = [0, 256], sizes = [8, 128], strides = [1, 1]} : vector<8x384xf32> to vector<8x128xf32>
    %157 = vector.broadcast %8 : vector<1x128xf32> to vector<8x128xf32>
    %158 = arith.addf %156, %157 : vector<8x128xf32>
    %159 = arith.mulf %146, %158 : vector<8x128xf32>
    %160 = arith.addf %155, %159 : vector<8x128xf32>
    %161 = math.tanh %160 : vector<8x128xf32>
    %cst_40 = arith.constant 1.000000e+00 : f32
    %162 = vector.broadcast %cst_40 : f32 to vector<8x128xf32>
    %163 = arith.subf %162, %154 : vector<8x128xf32>
    %164 = arith.mulf %163, %161 : vector<8x128xf32>
    %165 = arith.mulf %154, %93 : vector<8x128xf32>
    %166 = arith.addf %164, %165 : vector<8x128xf32>
    %167 = arith.mulf %104, %138 : vector<8x128xf32>
    %cst_41 = arith.constant 1.000000e+00 : f32
    %168 = vector.broadcast %cst_41 : f32 to vector<8x128xf32>
    %169 = arith.subf %168, %104 : vector<8x128xf32>
    %170 = arith.mulf %169, %88 : vector<8x128xf32>
    %171 = arith.addf %167, %170 : vector<8x128xf32>
    %172 = arith.mulf %106, %166 : vector<8x128xf32>
    %cst_42 = arith.constant 1.000000e+00 : f32
    %173 = vector.broadcast %cst_42 : f32 to vector<8x128xf32>
    %174 = arith.subf %173, %106 : vector<8x128xf32>
    %175 = arith.mulf %174, %93 : vector<8x128xf32>
    %176 = arith.addf %172, %175 : vector<8x128xf32>
    %c2_i32 = arith.constant 2 : i32
    %c7_i32_43 = arith.constant 7 : i32
    %177 = arith.subi %c7_i32_43, %c2_i32 : i32
    %c8_i32_44 = arith.constant 8 : i32
    %178 = arith.muli %c2_i32, %c8_i32_44 : i32
    %179 = tpu.assume_multiple %178, 8 : i32
    %c8_i32_45 = arith.constant 8 : i32
    %180 = arith.muli %177, %c8_i32_45 : i32
    %181 = tpu.assume_multiple %180, 8 : i32
    %182 = arith.index_cast %179 : i32 to index
    %c0_46 = arith.constant 0 : index
    %183 = vector.load %arg11[%182, %c0_46] : memref<64x768xf32, #tpu.memory_space<vmem>>, vector<8x384xf32>
    %184 = arith.index_cast %181 : i32 to index
    %c384_47 = arith.constant 384 : index
    %185 = vector.load %arg11[%184, %c384_47] : memref<64x768xf32, #tpu.memory_space<vmem>>, vector<8x384xf32>
    %186 = arith.index_cast %179 : i32 to index
    %c0_48 = arith.constant 0 : index
    %187 = vector.load %arg1[%186, %c0_48] : memref<64x128xf32, #tpu.memory_space<vmem>>, vector<8x128xf32>
    %188 = arith.index_cast %181 : i32 to index
    %c0_49 = arith.constant 0 : index
    %189 = vector.load %arg1[%188, %c0_49] : memref<64x128xf32, #tpu.memory_space<vmem>>, vector<8x128xf32>
    %190 = tpu.concatenate %171, %176 in 1 : vector<8x128xf32>, vector<8x128xf32> -> vector<8x256xf32>
    %cst_50 = arith.constant dense<0.000000e+00> : vector<8x768xf32>
    %191 = tpu.matmul %190, %9, %cst_50 {dimension_numbers = #tpu.dot_dimension_numbers<[1], [0], [0], [1], [0, 0, 1, 1], [], []>} : vector<8x256xf32>, vector<256x768xf32>, vector<8x768xf32> -> vector<8x768xf32>
    %192 = vector.extract_strided_slice %191 {offsets = [0, 0], sizes = [8, 384], strides = [1, 1]} : vector<8x768xf32> to vector<8x384xf32>
    %193 = vector.extract_strided_slice %191 {offsets = [0, 384], sizes = [8, 384], strides = [1, 1]} : vector<8x768xf32> to vector<8x384xf32>
    %194 = vector.extract_strided_slice %183 {offsets = [0, 0], sizes = [8, 128], strides = [1, 1]} : vector<8x384xf32> to vector<8x128xf32>
    %195 = vector.extract_strided_slice %192 {offsets = [0, 0], sizes = [8, 128], strides = [1, 1]} : vector<8x384xf32> to vector<8x128xf32>
    %196 = arith.addf %194, %195 : vector<8x128xf32>
    %197 = arith.negf %196 : vector<8x128xf32>
    %198 = math.exp %197 : vector<8x128xf32>
    %cst_51 = arith.constant 1.000000e+00 : f32
    %199 = vector.broadcast %cst_51 : f32 to vector<8x128xf32>
    %200 = arith.addf %199, %198 : vector<8x128xf32>
    %201 = arith.divf %199, %200 : vector<8x128xf32>
    %202 = vector.extract_strided_slice %183 {offsets = [0, 128], sizes = [8, 128], strides = [1, 1]} : vector<8x384xf32> to vector<8x128xf32>
    %203 = vector.extract_strided_slice %192 {offsets = [0, 128], sizes = [8, 128], strides = [1, 1]} : vector<8x384xf32> to vector<8x128xf32>
    %204 = arith.addf %202, %203 : vector<8x128xf32>
    %205 = arith.negf %204 : vector<8x128xf32>
    %206 = math.exp %205 : vector<8x128xf32>
    %cst_52 = arith.constant 1.000000e+00 : f32
    %207 = vector.broadcast %cst_52 : f32 to vector<8x128xf32>
    %208 = arith.addf %207, %206 : vector<8x128xf32>
    %209 = arith.divf %207, %208 : vector<8x128xf32>
    %210 = vector.extract_strided_slice %183 {offsets = [0, 256], sizes = [8, 128], strides = [1, 1]} : vector<8x384xf32> to vector<8x128xf32>
    %211 = vector.extract_strided_slice %192 {offsets = [0, 256], sizes = [8, 128], strides = [1, 1]} : vector<8x384xf32> to vector<8x128xf32>
    %212 = vector.broadcast %7 : vector<1x128xf32> to vector<8x128xf32>
    %213 = arith.addf %211, %212 : vector<8x128xf32>
    %214 = arith.mulf %201, %213 : vector<8x128xf32>
    %215 = arith.addf %210, %214 : vector<8x128xf32>
    %216 = math.tanh %215 : vector<8x128xf32>
    %cst_53 = arith.constant 1.000000e+00 : f32
    %217 = vector.broadcast %cst_53 : f32 to vector<8x128xf32>
    %218 = arith.subf %217, %209 : vector<8x128xf32>
    %219 = arith.mulf %218, %216 : vector<8x128xf32>
    %220 = arith.mulf %209, %171 : vector<8x128xf32>
    %221 = arith.addf %219, %220 : vector<8x128xf32>
    %222 = vector.extract_strided_slice %185 {offsets = [0, 0], sizes = [8, 128], strides = [1, 1]} : vector<8x384xf32> to vector<8x128xf32>
    %223 = vector.extract_strided_slice %193 {offsets = [0, 0], sizes = [8, 128], strides = [1, 1]} : vector<8x384xf32> to vector<8x128xf32>
    %224 = arith.addf %222, %223 : vector<8x128xf32>
    %225 = arith.negf %224 : vector<8x128xf32>
    %226 = math.exp %225 : vector<8x128xf32>
    %cst_54 = arith.constant 1.000000e+00 : f32
    %227 = vector.broadcast %cst_54 : f32 to vector<8x128xf32>
    %228 = arith.addf %227, %226 : vector<8x128xf32>
    %229 = arith.divf %227, %228 : vector<8x128xf32>
    %230 = vector.extract_strided_slice %185 {offsets = [0, 128], sizes = [8, 128], strides = [1, 1]} : vector<8x384xf32> to vector<8x128xf32>
    %231 = vector.extract_strided_slice %193 {offsets = [0, 128], sizes = [8, 128], strides = [1, 1]} : vector<8x384xf32> to vector<8x128xf32>
    %232 = arith.addf %230, %231 : vector<8x128xf32>
    %233 = arith.negf %232 : vector<8x128xf32>
    %234 = math.exp %233 : vector<8x128xf32>
    %cst_55 = arith.constant 1.000000e+00 : f32
    %235 = vector.broadcast %cst_55 : f32 to vector<8x128xf32>
    %236 = arith.addf %235, %234 : vector<8x128xf32>
    %237 = arith.divf %235, %236 : vector<8x128xf32>
    %238 = vector.extract_strided_slice %185 {offsets = [0, 256], sizes = [8, 128], strides = [1, 1]} : vector<8x384xf32> to vector<8x128xf32>
    %239 = vector.extract_strided_slice %193 {offsets = [0, 256], sizes = [8, 128], strides = [1, 1]} : vector<8x384xf32> to vector<8x128xf32>
    %240 = vector.broadcast %8 : vector<1x128xf32> to vector<8x128xf32>
    %241 = arith.addf %239, %240 : vector<8x128xf32>
    %242 = arith.mulf %229, %241 : vector<8x128xf32>
    %243 = arith.addf %238, %242 : vector<8x128xf32>
    %244 = math.tanh %243 : vector<8x128xf32>
    %cst_56 = arith.constant 1.000000e+00 : f32
    %245 = vector.broadcast %cst_56 : f32 to vector<8x128xf32>
    %246 = arith.subf %245, %237 : vector<8x128xf32>
    %247 = arith.mulf %246, %244 : vector<8x128xf32>
    %248 = arith.mulf %237, %176 : vector<8x128xf32>
    %249 = arith.addf %247, %248 : vector<8x128xf32>
    %250 = arith.mulf %187, %221 : vector<8x128xf32>
    %cst_57 = arith.constant 1.000000e+00 : f32
    %251 = vector.broadcast %cst_57 : f32 to vector<8x128xf32>
    %252 = arith.subf %251, %187 : vector<8x128xf32>
    %253 = arith.mulf %252, %171 : vector<8x128xf32>
    %254 = arith.addf %250, %253 : vector<8x128xf32>
    %255 = arith.mulf %189, %249 : vector<8x128xf32>
    %cst_58 = arith.constant 1.000000e+00 : f32
    %256 = vector.broadcast %cst_58 : f32 to vector<8x128xf32>
    %257 = arith.subf %256, %189 : vector<8x128xf32>
    %258 = arith.mulf %257, %176 : vector<8x128xf32>
    %259 = arith.addf %255, %258 : vector<8x128xf32>
    %c3_i32 = arith.constant 3 : i32
    %c7_i32_59 = arith.constant 7 : i32
    %260 = arith.subi %c7_i32_59, %c3_i32 : i32
    %c8_i32_60 = arith.constant 8 : i32
    %261 = arith.muli %c3_i32, %c8_i32_60 : i32
    %262 = tpu.assume_multiple %261, 8 : i32
    %c8_i32_61 = arith.constant 8 : i32
    %263 = arith.muli %260, %c8_i32_61 : i32
    %264 = tpu.assume_multiple %263, 8 : i32
    %265 = arith.index_cast %262 : i32 to index
    %c0_62 = arith.constant 0 : index
    %266 = vector.load %arg11[%265, %c0_62] : memref<64x768xf32, #tpu.memory_space<vmem>>, vector<8x384xf32>
    %267 = arith.index_cast %264 : i32 to index
    %c384_63 = arith.constant 384 : index
    %268 = vector.load %arg11[%267, %c384_63] : memref<64x768xf32, #tpu.memory_space<vmem>>, vector<8x384xf32>
    %269 = arith.index_cast %262 : i32 to index
    %c0_64 = arith.constant 0 : index
    %270 = vector.load %arg1[%269, %c0_64] : memref<64x128xf32, #tpu.memory_space<vmem>>, vector<8x128xf32>
    %271 = arith.index_cast %264 : i32 to index
    %c0_65 = arith.constant 0 : index
    %272 = vector.load %arg1[%271, %c0_65] : memref<64x128xf32, #tpu.memory_space<vmem>>, vector<8x128xf32>
    %273 = tpu.concatenate %254, %259 in 1 : vector<8x128xf32>, vector<8x128xf32> -> vector<8x256xf32>
    %cst_66 = arith.constant dense<0.000000e+00> : vector<8x768xf32>
    %274 = tpu.matmul %273, %9, %cst_66 {dimension_numbers = #tpu.dot_dimension_numbers<[1], [0], [0], [1], [0, 0, 1, 1], [], []>} : vector<8x256xf32>, vector<256x768xf32>, vector<8x768xf32> -> vector<8x768xf32>
    %275 = vector.extract_strided_slice %274 {offsets = [0, 0], sizes = [8, 384], strides = [1, 1]} : vector<8x768xf32> to vector<8x384xf32>
    %276 = vector.extract_strided_slice %274 {offsets = [0, 384], sizes = [8, 384], strides = [1, 1]} : vector<8x768xf32> to vector<8x384xf32>
    %277 = vector.extract_strided_slice %266 {offsets = [0, 0], sizes = [8, 128], strides = [1, 1]} : vector<8x384xf32> to vector<8x128xf32>
    %278 = vector.extract_strided_slice %275 {offsets = [0, 0], sizes = [8, 128], strides = [1, 1]} : vector<8x384xf32> to vector<8x128xf32>
    %279 = arith.addf %277, %278 : vector<8x128xf32>
    %280 = arith.negf %279 : vector<8x128xf32>
    %281 = math.exp %280 : vector<8x128xf32>
    %cst_67 = arith.constant 1.000000e+00 : f32
    %282 = vector.broadcast %cst_67 : f32 to vector<8x128xf32>
    %283 = arith.addf %282, %281 : vector<8x128xf32>
    %284 = arith.divf %282, %283 : vector<8x128xf32>
    %285 = vector.extract_strided_slice %266 {offsets = [0, 128], sizes = [8, 128], strides = [1, 1]} : vector<8x384xf32> to vector<8x128xf32>
    %286 = vector.extract_strided_slice %275 {offsets = [0, 128], sizes = [8, 128], strides = [1, 1]} : vector<8x384xf32> to vector<8x128xf32>
    %287 = arith.addf %285, %286 : vector<8x128xf32>
    %288 = arith.negf %287 : vector<8x128xf32>
    %289 = math.exp %288 : vector<8x128xf32>
    %cst_68 = arith.constant 1.000000e+00 : f32
    %290 = vector.broadcast %cst_68 : f32 to vector<8x128xf32>
    %291 = arith.addf %290, %289 : vector<8x128xf32>
    %292 = arith.divf %290, %291 : vector<8x128xf32>
    %293 = vector.extract_strided_slice %266 {offsets = [0, 256], sizes = [8, 128], strides = [1, 1]} : vector<8x384xf32> to vector<8x128xf32>
    %294 = vector.extract_strided_slice %275 {offsets = [0, 256], sizes = [8, 128], strides = [1, 1]} : vector<8x384xf32> to vector<8x128xf32>
    %295 = vector.broadcast %7 : vector<1x128xf32> to vector<8x128xf32>
    %296 = arith.addf %294, %295 : vector<8x128xf32>
    %297 = arith.mulf %284, %296 : vector<8x128xf32>
    %298 = arith.addf %293, %297 : vector<8x128xf32>
    %299 = math.tanh %298 : vector<8x128xf32>
    %cst_69 = arith.constant 1.000000e+00 : f32
    %300 = vector.broadcast %cst_69 : f32 to vector<8x128xf32>
    %301 = arith.subf %300, %292 : vector<8x128xf32>
    %302 = arith.mulf %301, %299 : vector<8x128xf32>
    %303 = arith.mulf %292, %254 : vector<8x128xf32>
    %304 = arith.addf %302, %303 : vector<8x128xf32>
    %305 = vector.extract_strided_slice %268 {offsets = [0, 0], sizes = [8, 128], strides = [1, 1]} : vector<8x384xf32> to vector<8x128xf32>
    %306 = vector.extract_strided_slice %276 {offsets = [0, 0], sizes = [8, 128], strides = [1, 1]} : vector<8x384xf32> to vector<8x128xf32>
    %307 = arith.addf %305, %306 : vector<8x128xf32>
    %308 = arith.negf %307 : vector<8x128xf32>
    %309 = math.exp %308 : vector<8x128xf32>
    %cst_70 = arith.constant 1.000000e+00 : f32
    %310 = vector.broadcast %cst_70 : f32 to vector<8x128xf32>
    %311 = arith.addf %310, %309 : vector<8x128xf32>
    %312 = arith.divf %310, %311 : vector<8x128xf32>
    %313 = vector.extract_strided_slice %268 {offsets = [0, 128], sizes = [8, 128], strides = [1, 1]} : vector<8x384xf32> to vector<8x128xf32>
    %314 = vector.extract_strided_slice %276 {offsets = [0, 128], sizes = [8, 128], strides = [1, 1]} : vector<8x384xf32> to vector<8x128xf32>
    %315 = arith.addf %313, %314 : vector<8x128xf32>
    %316 = arith.negf %315 : vector<8x128xf32>
    %317 = math.exp %316 : vector<8x128xf32>
    %cst_71 = arith.constant 1.000000e+00 : f32
    %318 = vector.broadcast %cst_71 : f32 to vector<8x128xf32>
    %319 = arith.addf %318, %317 : vector<8x128xf32>
    %320 = arith.divf %318, %319 : vector<8x128xf32>
    %321 = vector.extract_strided_slice %268 {offsets = [0, 256], sizes = [8, 128], strides = [1, 1]} : vector<8x384xf32> to vector<8x128xf32>
    %322 = vector.extract_strided_slice %276 {offsets = [0, 256], sizes = [8, 128], strides = [1, 1]} : vector<8x384xf32> to vector<8x128xf32>
    %323 = vector.broadcast %8 : vector<1x128xf32> to vector<8x128xf32>
    %324 = arith.addf %322, %323 : vector<8x128xf32>
    %325 = arith.mulf %312, %324 : vector<8x128xf32>
    %326 = arith.addf %321, %325 : vector<8x128xf32>
    %327 = math.tanh %326 : vector<8x128xf32>
    %cst_72 = arith.constant 1.000000e+00 : f32
    %328 = vector.broadcast %cst_72 : f32 to vector<8x128xf32>
    %329 = arith.subf %328, %320 : vector<8x128xf32>
    %330 = arith.mulf %329, %327 : vector<8x128xf32>
    %331 = arith.mulf %320, %259 : vector<8x128xf32>
    %332 = arith.addf %330, %331 : vector<8x128xf32>
    %333 = arith.mulf %270, %304 : vector<8x128xf32>
    %cst_73 = arith.constant 1.000000e+00 : f32
    %334 = vector.broadcast %cst_73 : f32 to vector<8x128xf32>
    %335 = arith.subf %334, %270 : vector<8x128xf32>
    %336 = arith.mulf %335, %254 : vector<8x128xf32>
    %337 = arith.addf %333, %336 : vector<8x128xf32>
    %338 = arith.mulf %272, %332 : vector<8x128xf32>
    %cst_74 = arith.constant 1.000000e+00 : f32
    %339 = vector.broadcast %cst_74 : f32 to vector<8x128xf32>
    %340 = arith.subf %339, %272 : vector<8x128xf32>
    %341 = arith.mulf %340, %259 : vector<8x128xf32>
    %342 = arith.addf %338, %341 : vector<8x128xf32>
    %c4_i32 = arith.constant 4 : i32
    %c7_i32_75 = arith.constant 7 : i32
    %343 = arith.subi %c7_i32_75, %c4_i32 : i32
    %c8_i32_76 = arith.constant 8 : i32
    %344 = arith.muli %c4_i32, %c8_i32_76 : i32
    %345 = tpu.assume_multiple %344, 8 : i32
    %c8_i32_77 = arith.constant 8 : i32
    %346 = arith.muli %343, %c8_i32_77 : i32
    %347 = tpu.assume_multiple %346, 8 : i32
    %348 = arith.index_cast %345 : i32 to index
    %c0_78 = arith.constant 0 : index
    %349 = vector.load %arg11[%348, %c0_78] : memref<64x768xf32, #tpu.memory_space<vmem>>, vector<8x384xf32>
    %350 = arith.index_cast %347 : i32 to index
    %c384_79 = arith.constant 384 : index
    %351 = vector.load %arg11[%350, %c384_79] : memref<64x768xf32, #tpu.memory_space<vmem>>, vector<8x384xf32>
    %352 = arith.index_cast %345 : i32 to index
    %c0_80 = arith.constant 0 : index
    %353 = vector.load %arg1[%352, %c0_80] : memref<64x128xf32, #tpu.memory_space<vmem>>, vector<8x128xf32>
    %354 = arith.index_cast %347 : i32 to index
    %c0_81 = arith.constant 0 : index
    %355 = vector.load %arg1[%354, %c0_81] : memref<64x128xf32, #tpu.memory_space<vmem>>, vector<8x128xf32>
    %356 = tpu.concatenate %337, %342 in 1 : vector<8x128xf32>, vector<8x128xf32> -> vector<8x256xf32>
    %cst_82 = arith.constant dense<0.000000e+00> : vector<8x768xf32>
    %357 = tpu.matmul %356, %9, %cst_82 {dimension_numbers = #tpu.dot_dimension_numbers<[1], [0], [0], [1], [0, 0, 1, 1], [], []>} : vector<8x256xf32>, vector<256x768xf32>, vector<8x768xf32> -> vector<8x768xf32>
    %358 = vector.extract_strided_slice %357 {offsets = [0, 0], sizes = [8, 384], strides = [1, 1]} : vector<8x768xf32> to vector<8x384xf32>
    %359 = vector.extract_strided_slice %357 {offsets = [0, 384], sizes = [8, 384], strides = [1, 1]} : vector<8x768xf32> to vector<8x384xf32>
    %360 = vector.extract_strided_slice %349 {offsets = [0, 0], sizes = [8, 128], strides = [1, 1]} : vector<8x384xf32> to vector<8x128xf32>
    %361 = vector.extract_strided_slice %358 {offsets = [0, 0], sizes = [8, 128], strides = [1, 1]} : vector<8x384xf32> to vector<8x128xf32>
    %362 = arith.addf %360, %361 : vector<8x128xf32>
    %363 = arith.negf %362 : vector<8x128xf32>
    %364 = math.exp %363 : vector<8x128xf32>
    %cst_83 = arith.constant 1.000000e+00 : f32
    %365 = vector.broadcast %cst_83 : f32 to vector<8x128xf32>
    %366 = arith.addf %365, %364 : vector<8x128xf32>
    %367 = arith.divf %365, %366 : vector<8x128xf32>
    %368 = vector.extract_strided_slice %349 {offsets = [0, 128], sizes = [8, 128], strides = [1, 1]} : vector<8x384xf32> to vector<8x128xf32>
    %369 = vector.extract_strided_slice %358 {offsets = [0, 128], sizes = [8, 128], strides = [1, 1]} : vector<8x384xf32> to vector<8x128xf32>
    %370 = arith.addf %368, %369 : vector<8x128xf32>
    %371 = arith.negf %370 : vector<8x128xf32>
    %372 = math.exp %371 : vector<8x128xf32>
    %cst_84 = arith.constant 1.000000e+00 : f32
    %373 = vector.broadcast %cst_84 : f32 to vector<8x128xf32>
    %374 = arith.addf %373, %372 : vector<8x128xf32>
    %375 = arith.divf %373, %374 : vector<8x128xf32>
    %376 = vector.extract_strided_slice %349 {offsets = [0, 256], sizes = [8, 128], strides = [1, 1]} : vector<8x384xf32> to vector<8x128xf32>
    %377 = vector.extract_strided_slice %358 {offsets = [0, 256], sizes = [8, 128], strides = [1, 1]} : vector<8x384xf32> to vector<8x128xf32>
    %378 = vector.broadcast %7 : vector<1x128xf32> to vector<8x128xf32>
    %379 = arith.addf %377, %378 : vector<8x128xf32>
    %380 = arith.mulf %367, %379 : vector<8x128xf32>
    %381 = arith.addf %376, %380 : vector<8x128xf32>
    %382 = math.tanh %381 : vector<8x128xf32>
    %cst_85 = arith.constant 1.000000e+00 : f32
    %383 = vector.broadcast %cst_85 : f32 to vector<8x128xf32>
    %384 = arith.subf %383, %375 : vector<8x128xf32>
    %385 = arith.mulf %384, %382 : vector<8x128xf32>
    %386 = arith.mulf %375, %337 : vector<8x128xf32>
    %387 = arith.addf %385, %386 : vector<8x128xf32>
    %388 = vector.extract_strided_slice %351 {offsets = [0, 0], sizes = [8, 128], strides = [1, 1]} : vector<8x384xf32> to vector<8x128xf32>
    %389 = vector.extract_strided_slice %359 {offsets = [0, 0], sizes = [8, 128], strides = [1, 1]} : vector<8x384xf32> to vector<8x128xf32>
    %390 = arith.addf %388, %389 : vector<8x128xf32>
    %391 = arith.negf %390 : vector<8x128xf32>
    %392 = math.exp %391 : vector<8x128xf32>
    %cst_86 = arith.constant 1.000000e+00 : f32
    %393 = vector.broadcast %cst_86 : f32 to vector<8x128xf32>
    %394 = arith.addf %393, %392 : vector<8x128xf32>
    %395 = arith.divf %393, %394 : vector<8x128xf32>
    %396 = vector.extract_strided_slice %351 {offsets = [0, 128], sizes = [8, 128], strides = [1, 1]} : vector<8x384xf32> to vector<8x128xf32>
    %397 = vector.extract_strided_slice %359 {offsets = [0, 128], sizes = [8, 128], strides = [1, 1]} : vector<8x384xf32> to vector<8x128xf32>
    %398 = arith.addf %396, %397 : vector<8x128xf32>
    %399 = arith.negf %398 : vector<8x128xf32>
    %400 = math.exp %399 : vector<8x128xf32>
    %cst_87 = arith.constant 1.000000e+00 : f32
    %401 = vector.broadcast %cst_87 : f32 to vector<8x128xf32>
    %402 = arith.addf %401, %400 : vector<8x128xf32>
    %403 = arith.divf %401, %402 : vector<8x128xf32>
    %404 = vector.extract_strided_slice %351 {offsets = [0, 256], sizes = [8, 128], strides = [1, 1]} : vector<8x384xf32> to vector<8x128xf32>
    %405 = vector.extract_strided_slice %359 {offsets = [0, 256], sizes = [8, 128], strides = [1, 1]} : vector<8x384xf32> to vector<8x128xf32>
    %406 = vector.broadcast %8 : vector<1x128xf32> to vector<8x128xf32>
    %407 = arith.addf %405, %406 : vector<8x128xf32>
    %408 = arith.mulf %395, %407 : vector<8x128xf32>
    %409 = arith.addf %404, %408 : vector<8x128xf32>
    %410 = math.tanh %409 : vector<8x128xf32>
    %cst_88 = arith.constant 1.000000e+00 : f32
    %411 = vector.broadcast %cst_88 : f32 to vector<8x128xf32>
    %412 = arith.subf %411, %403 : vector<8x128xf32>
    %413 = arith.mulf %412, %410 : vector<8x128xf32>
    %414 = arith.mulf %403, %342 : vector<8x128xf32>
    %415 = arith.addf %413, %414 : vector<8x128xf32>
    %416 = arith.mulf %353, %387 : vector<8x128xf32>
    %cst_89 = arith.constant 1.000000e+00 : f32
    %417 = vector.broadcast %cst_89 : f32 to vector<8x128xf32>
    %418 = arith.subf %417, %353 : vector<8x128xf32>
    %419 = arith.mulf %418, %337 : vector<8x128xf32>
    %420 = arith.addf %416, %419 : vector<8x128xf32>
    %421 = arith.mulf %355, %415 : vector<8x128xf32>
    %cst_90 = arith.constant 1.000000e+00 : f32
    %422 = vector.broadcast %cst_90 : f32 to vector<8x128xf32>
    %423 = arith.subf %422, %355 : vector<8x128xf32>
    %424 = arith.mulf %423, %342 : vector<8x128xf32>
    %425 = arith.addf %421, %424 : vector<8x128xf32>
    %c5_i32 = arith.constant 5 : i32
    %c7_i32_91 = arith.constant 7 : i32
    %426 = arith.subi %c7_i32_91, %c5_i32 : i32
    %c8_i32_92 = arith.constant 8 : i32
    %427 = arith.muli %c5_i32, %c8_i32_92 : i32
    %428 = tpu.assume_multiple %427, 8 : i32
    %c8_i32_93 = arith.constant 8 : i32
    %429 = arith.muli %426, %c8_i32_93 : i32
    %430 = tpu.assume_multiple %429, 8 : i32
    %431 = arith.index_cast %428 : i32 to index
    %c0_94 = arith.constant 0 : index
    %432 = vector.load %arg11[%431, %c0_94] : memref<64x768xf32, #tpu.memory_space<vmem>>, vector<8x384xf32>
    %433 = arith.index_cast %430 : i32 to index
    %c384_95 = arith.constant 384 : index
    %434 = vector.load %arg11[%433, %c384_95] : memref<64x768xf32, #tpu.memory_space<vmem>>, vector<8x384xf32>
    %435 = arith.index_cast %428 : i32 to index
    %c0_96 = arith.constant 0 : index
    %436 = vector.load %arg1[%435, %c0_96] : memref<64x128xf32, #tpu.memory_space<vmem>>, vector<8x128xf32>
    %437 = arith.index_cast %430 : i32 to index
    %c0_97 = arith.constant 0 : index
    %438 = vector.load %arg1[%437, %c0_97] : memref<64x128xf32, #tpu.memory_space<vmem>>, vector<8x128xf32>
    %439 = tpu.concatenate %420, %425 in 1 : vector<8x128xf32>, vector<8x128xf32> -> vector<8x256xf32>
    %cst_98 = arith.constant dense<0.000000e+00> : vector<8x768xf32>
    %440 = tpu.matmul %439, %9, %cst_98 {dimension_numbers = #tpu.dot_dimension_numbers<[1], [0], [0], [1], [0, 0, 1, 1], [], []>} : vector<8x256xf32>, vector<256x768xf32>, vector<8x768xf32> -> vector<8x768xf32>
    %441 = vector.extract_strided_slice %440 {offsets = [0, 0], sizes = [8, 384], strides = [1, 1]} : vector<8x768xf32> to vector<8x384xf32>
    %442 = vector.extract_strided_slice %440 {offsets = [0, 384], sizes = [8, 384], strides = [1, 1]} : vector<8x768xf32> to vector<8x384xf32>
    %443 = vector.extract_strided_slice %432 {offsets = [0, 0], sizes = [8, 128], strides = [1, 1]} : vector<8x384xf32> to vector<8x128xf32>
    %444 = vector.extract_strided_slice %441 {offsets = [0, 0], sizes = [8, 128], strides = [1, 1]} : vector<8x384xf32> to vector<8x128xf32>
    %445 = arith.addf %443, %444 : vector<8x128xf32>
    %446 = arith.negf %445 : vector<8x128xf32>
    %447 = math.exp %446 : vector<8x128xf32>
    %cst_99 = arith.constant 1.000000e+00 : f32
    %448 = vector.broadcast %cst_99 : f32 to vector<8x128xf32>
    %449 = arith.addf %448, %447 : vector<8x128xf32>
    %450 = arith.divf %448, %449 : vector<8x128xf32>
    %451 = vector.extract_strided_slice %432 {offsets = [0, 128], sizes = [8, 128], strides = [1, 1]} : vector<8x384xf32> to vector<8x128xf32>
    %452 = vector.extract_strided_slice %441 {offsets = [0, 128], sizes = [8, 128], strides = [1, 1]} : vector<8x384xf32> to vector<8x128xf32>
    %453 = arith.addf %451, %452 : vector<8x128xf32>
    %454 = arith.negf %453 : vector<8x128xf32>
    %455 = math.exp %454 : vector<8x128xf32>
    %cst_100 = arith.constant 1.000000e+00 : f32
    %456 = vector.broadcast %cst_100 : f32 to vector<8x128xf32>
    %457 = arith.addf %456, %455 : vector<8x128xf32>
    %458 = arith.divf %456, %457 : vector<8x128xf32>
    %459 = vector.extract_strided_slice %432 {offsets = [0, 256], sizes = [8, 128], strides = [1, 1]} : vector<8x384xf32> to vector<8x128xf32>
    %460 = vector.extract_strided_slice %441 {offsets = [0, 256], sizes = [8, 128], strides = [1, 1]} : vector<8x384xf32> to vector<8x128xf32>
    %461 = vector.broadcast %7 : vector<1x128xf32> to vector<8x128xf32>
    %462 = arith.addf %460, %461 : vector<8x128xf32>
    %463 = arith.mulf %450, %462 : vector<8x128xf32>
    %464 = arith.addf %459, %463 : vector<8x128xf32>
    %465 = math.tanh %464 : vector<8x128xf32>
    %cst_101 = arith.constant 1.000000e+00 : f32
    %466 = vector.broadcast %cst_101 : f32 to vector<8x128xf32>
    %467 = arith.subf %466, %458 : vector<8x128xf32>
    %468 = arith.mulf %467, %465 : vector<8x128xf32>
    %469 = arith.mulf %458, %420 : vector<8x128xf32>
    %470 = arith.addf %468, %469 : vector<8x128xf32>
    %471 = vector.extract_strided_slice %434 {offsets = [0, 0], sizes = [8, 128], strides = [1, 1]} : vector<8x384xf32> to vector<8x128xf32>
    %472 = vector.extract_strided_slice %442 {offsets = [0, 0], sizes = [8, 128], strides = [1, 1]} : vector<8x384xf32> to vector<8x128xf32>
    %473 = arith.addf %471, %472 : vector<8x128xf32>
    %474 = arith.negf %473 : vector<8x128xf32>
    %475 = math.exp %474 : vector<8x128xf32>
    %cst_102 = arith.constant 1.000000e+00 : f32
    %476 = vector.broadcast %cst_102 : f32 to vector<8x128xf32>
    %477 = arith.addf %476, %475 : vector<8x128xf32>
    %478 = arith.divf %476, %477 : vector<8x128xf32>
    %479 = vector.extract_strided_slice %434 {offsets = [0, 128], sizes = [8, 128], strides = [1, 1]} : vector<8x384xf32> to vector<8x128xf32>
    %480 = vector.extract_strided_slice %442 {offsets = [0, 128], sizes = [8, 128], strides = [1, 1]} : vector<8x384xf32> to vector<8x128xf32>
    %481 = arith.addf %479, %480 : vector<8x128xf32>
    %482 = arith.negf %481 : vector<8x128xf32>
    %483 = math.exp %482 : vector<8x128xf32>
    %cst_103 = arith.constant 1.000000e+00 : f32
    %484 = vector.broadcast %cst_103 : f32 to vector<8x128xf32>
    %485 = arith.addf %484, %483 : vector<8x128xf32>
    %486 = arith.divf %484, %485 : vector<8x128xf32>
    %487 = vector.extract_strided_slice %434 {offsets = [0, 256], sizes = [8, 128], strides = [1, 1]} : vector<8x384xf32> to vector<8x128xf32>
    %488 = vector.extract_strided_slice %442 {offsets = [0, 256], sizes = [8, 128], strides = [1, 1]} : vector<8x384xf32> to vector<8x128xf32>
    %489 = vector.broadcast %8 : vector<1x128xf32> to vector<8x128xf32>
    %490 = arith.addf %488, %489 : vector<8x128xf32>
    %491 = arith.mulf %478, %490 : vector<8x128xf32>
    %492 = arith.addf %487, %491 : vector<8x128xf32>
    %493 = math.tanh %492 : vector<8x128xf32>
    %cst_104 = arith.constant 1.000000e+00 : f32
    %494 = vector.broadcast %cst_104 : f32 to vector<8x128xf32>
    %495 = arith.subf %494, %486 : vector<8x128xf32>
    %496 = arith.mulf %495, %493 : vector<8x128xf32>
    %497 = arith.mulf %486, %425 : vector<8x128xf32>
    %498 = arith.addf %496, %497 : vector<8x128xf32>
    %499 = arith.mulf %436, %470 : vector<8x128xf32>
    %cst_105 = arith.constant 1.000000e+00 : f32
    %500 = vector.broadcast %cst_105 : f32 to vector<8x128xf32>
    %501 = arith.subf %500, %436 : vector<8x128xf32>
    %502 = arith.mulf %501, %420 : vector<8x128xf32>
    %503 = arith.addf %499, %502 : vector<8x128xf32>
    %504 = arith.mulf %438, %498 : vector<8x128xf32>
    %cst_106 = arith.constant 1.000000e+00 : f32
    %505 = vector.broadcast %cst_106 : f32 to vector<8x128xf32>
    %506 = arith.subf %505, %438 : vector<8x128xf32>
    %507 = arith.mulf %506, %425 : vector<8x128xf32>
    %508 = arith.addf %504, %507 : vector<8x128xf32>
    %c6_i32 = arith.constant 6 : i32
    %c7_i32_107 = arith.constant 7 : i32
    %509 = arith.subi %c7_i32_107, %c6_i32 : i32
    %c8_i32_108 = arith.constant 8 : i32
    %510 = arith.muli %c6_i32, %c8_i32_108 : i32
    %511 = tpu.assume_multiple %510, 8 : i32
    %c8_i32_109 = arith.constant 8 : i32
    %512 = arith.muli %509, %c8_i32_109 : i32
    %513 = tpu.assume_multiple %512, 8 : i32
    %514 = arith.index_cast %511 : i32 to index
    %c0_110 = arith.constant 0 : index
    %515 = vector.load %arg11[%514, %c0_110] : memref<64x768xf32, #tpu.memory_space<vmem>>, vector<8x384xf32>
    %516 = arith.index_cast %513 : i32 to index
    %c384_111 = arith.constant 384 : index
    %517 = vector.load %arg11[%516, %c384_111] : memref<64x768xf32, #tpu.memory_space<vmem>>, vector<8x384xf32>
    %518 = arith.index_cast %511 : i32 to index
    %c0_112 = arith.constant 0 : index
    %519 = vector.load %arg1[%518, %c0_112] : memref<64x128xf32, #tpu.memory_space<vmem>>, vector<8x128xf32>
    %520 = arith.index_cast %513 : i32 to index
    %c0_113 = arith.constant 0 : index
    %521 = vector.load %arg1[%520, %c0_113] : memref<64x128xf32, #tpu.memory_space<vmem>>, vector<8x128xf32>
    %522 = tpu.concatenate %503, %508 in 1 : vector<8x128xf32>, vector<8x128xf32> -> vector<8x256xf32>
    %cst_114 = arith.constant dense<0.000000e+00> : vector<8x768xf32>
    %523 = tpu.matmul %522, %9, %cst_114 {dimension_numbers = #tpu.dot_dimension_numbers<[1], [0], [0], [1], [0, 0, 1, 1], [], []>} : vector<8x256xf32>, vector<256x768xf32>, vector<8x768xf32> -> vector<8x768xf32>
    %524 = vector.extract_strided_slice %523 {offsets = [0, 0], sizes = [8, 384], strides = [1, 1]} : vector<8x768xf32> to vector<8x384xf32>
    %525 = vector.extract_strided_slice %523 {offsets = [0, 384], sizes = [8, 384], strides = [1, 1]} : vector<8x768xf32> to vector<8x384xf32>
    %526 = vector.extract_strided_slice %515 {offsets = [0, 0], sizes = [8, 128], strides = [1, 1]} : vector<8x384xf32> to vector<8x128xf32>
    %527 = vector.extract_strided_slice %524 {offsets = [0, 0], sizes = [8, 128], strides = [1, 1]} : vector<8x384xf32> to vector<8x128xf32>
    %528 = arith.addf %526, %527 : vector<8x128xf32>
    %529 = arith.negf %528 : vector<8x128xf32>
    %530 = math.exp %529 : vector<8x128xf32>
    %cst_115 = arith.constant 1.000000e+00 : f32
    %531 = vector.broadcast %cst_115 : f32 to vector<8x128xf32>
    %532 = arith.addf %531, %530 : vector<8x128xf32>
    %533 = arith.divf %531, %532 : vector<8x128xf32>
    %534 = vector.extract_strided_slice %515 {offsets = [0, 128], sizes = [8, 128], strides = [1, 1]} : vector<8x384xf32> to vector<8x128xf32>
    %535 = vector.extract_strided_slice %524 {offsets = [0, 128], sizes = [8, 128], strides = [1, 1]} : vector<8x384xf32> to vector<8x128xf32>
    %536 = arith.addf %534, %535 : vector<8x128xf32>
    %537 = arith.negf %536 : vector<8x128xf32>
    %538 = math.exp %537 : vector<8x128xf32>
    %cst_116 = arith.constant 1.000000e+00 : f32
    %539 = vector.broadcast %cst_116 : f32 to vector<8x128xf32>
    %540 = arith.addf %539, %538 : vector<8x128xf32>
    %541 = arith.divf %539, %540 : vector<8x128xf32>
    %542 = vector.extract_strided_slice %515 {offsets = [0, 256], sizes = [8, 128], strides = [1, 1]} : vector<8x384xf32> to vector<8x128xf32>
    %543 = vector.extract_strided_slice %524 {offsets = [0, 256], sizes = [8, 128], strides = [1, 1]} : vector<8x384xf32> to vector<8x128xf32>
    %544 = vector.broadcast %7 : vector<1x128xf32> to vector<8x128xf32>
    %545 = arith.addf %543, %544 : vector<8x128xf32>
    %546 = arith.mulf %533, %545 : vector<8x128xf32>
    %547 = arith.addf %542, %546 : vector<8x128xf32>
    %548 = math.tanh %547 : vector<8x128xf32>
    %cst_117 = arith.constant 1.000000e+00 : f32
    %549 = vector.broadcast %cst_117 : f32 to vector<8x128xf32>
    %550 = arith.subf %549, %541 : vector<8x128xf32>
    %551 = arith.mulf %550, %548 : vector<8x128xf32>
    %552 = arith.mulf %541, %503 : vector<8x128xf32>
    %553 = arith.addf %551, %552 : vector<8x128xf32>
    %554 = vector.extract_strided_slice %517 {offsets = [0, 0], sizes = [8, 128], strides = [1, 1]} : vector<8x384xf32> to vector<8x128xf32>
    %555 = vector.extract_strided_slice %525 {offsets = [0, 0], sizes = [8, 128], strides = [1, 1]} : vector<8x384xf32> to vector<8x128xf32>
    %556 = arith.addf %554, %555 : vector<8x128xf32>
    %557 = arith.negf %556 : vector<8x128xf32>
    %558 = math.exp %557 : vector<8x128xf32>
    %cst_118 = arith.constant 1.000000e+00 : f32
    %559 = vector.broadcast %cst_118 : f32 to vector<8x128xf32>
    %560 = arith.addf %559, %558 : vector<8x128xf32>
    %561 = arith.divf %559, %560 : vector<8x128xf32>
    %562 = vector.extract_strided_slice %517 {offsets = [0, 128], sizes = [8, 128], strides = [1, 1]} : vector<8x384xf32> to vector<8x128xf32>
    %563 = vector.extract_strided_slice %525 {offsets = [0, 128], sizes = [8, 128], strides = [1, 1]} : vector<8x384xf32> to vector<8x128xf32>
    %564 = arith.addf %562, %563 : vector<8x128xf32>
    %565 = arith.negf %564 : vector<8x128xf32>
    %566 = math.exp %565 : vector<8x128xf32>
    %cst_119 = arith.constant 1.000000e+00 : f32
    %567 = vector.broadcast %cst_119 : f32 to vector<8x128xf32>
    %568 = arith.addf %567, %566 : vector<8x128xf32>
    %569 = arith.divf %567, %568 : vector<8x128xf32>
    %570 = vector.extract_strided_slice %517 {offsets = [0, 256], sizes = [8, 128], strides = [1, 1]} : vector<8x384xf32> to vector<8x128xf32>
    %571 = vector.extract_strided_slice %525 {offsets = [0, 256], sizes = [8, 128], strides = [1, 1]} : vector<8x384xf32> to vector<8x128xf32>
    %572 = vector.broadcast %8 : vector<1x128xf32> to vector<8x128xf32>
    %573 = arith.addf %571, %572 : vector<8x128xf32>
    %574 = arith.mulf %561, %573 : vector<8x128xf32>
    %575 = arith.addf %570, %574 : vector<8x128xf32>
    %576 = math.tanh %575 : vector<8x128xf32>
    %cst_120 = arith.constant 1.000000e+00 : f32
    %577 = vector.broadcast %cst_120 : f32 to vector<8x128xf32>
    %578 = arith.subf %577, %569 : vector<8x128xf32>
    %579 = arith.mulf %578, %576 : vector<8x128xf32>
    %580 = arith.mulf %569, %508 : vector<8x128xf32>
    %581 = arith.addf %579, %580 : vector<8x128xf32>
    %582 = arith.mulf %519, %553 : vector<8x128xf32>
    %cst_121 = arith.constant 1.000000e+00 : f32
    %583 = vector.broadcast %cst_121 : f32 to vector<8x128xf32>
    %584 = arith.subf %583, %519 : vector<8x128xf32>
    %585 = arith.mulf %584, %503 : vector<8x128xf32>
    %586 = arith.addf %582, %585 : vector<8x128xf32>
    %587 = arith.mulf %521, %581 : vector<8x128xf32>
    %cst_122 = arith.constant 1.000000e+00 : f32
    %588 = vector.broadcast %cst_122 : f32 to vector<8x128xf32>
    %589 = arith.subf %588, %521 : vector<8x128xf32>
    %590 = arith.mulf %589, %508 : vector<8x128xf32>
    %591 = arith.addf %587, %590 : vector<8x128xf32>
    %c7_i32_123 = arith.constant 7 : i32
    %c7_i32_124 = arith.constant 7 : i32
    %592 = arith.subi %c7_i32_124, %c7_i32_123 : i32
    %c8_i32_125 = arith.constant 8 : i32
    %593 = arith.muli %c7_i32_123, %c8_i32_125 : i32
    %594 = tpu.assume_multiple %593, 8 : i32
    %c8_i32_126 = arith.constant 8 : i32
    %595 = arith.muli %592, %c8_i32_126 : i32
    %596 = tpu.assume_multiple %595, 8 : i32
    %597 = arith.index_cast %594 : i32 to index
    %c0_127 = arith.constant 0 : index
    %598 = vector.load %arg11[%597, %c0_127] : memref<64x768xf32, #tpu.memory_space<vmem>>, vector<8x384xf32>
    %599 = arith.index_cast %596 : i32 to index
    %c384_128 = arith.constant 384 : index
    %600 = vector.load %arg11[%599, %c384_128] : memref<64x768xf32, #tpu.memory_space<vmem>>, vector<8x384xf32>
    %601 = arith.index_cast %594 : i32 to index
    %c0_129 = arith.constant 0 : index
    %602 = vector.load %arg1[%601, %c0_129] : memref<64x128xf32, #tpu.memory_space<vmem>>, vector<8x128xf32>
    %603 = arith.index_cast %596 : i32 to index
    %c0_130 = arith.constant 0 : index
    %604 = vector.load %arg1[%603, %c0_130] : memref<64x128xf32, #tpu.memory_space<vmem>>, vector<8x128xf32>
    %605 = tpu.concatenate %586, %591 in 1 : vector<8x128xf32>, vector<8x128xf32> -> vector<8x256xf32>
    %cst_131 = arith.constant dense<0.000000e+00> : vector<8x768xf32>
    %606 = tpu.matmul %605, %9, %cst_131 {dimension_numbers = #tpu.dot_dimension_numbers<[1], [0], [0], [1], [0, 0, 1, 1], [], []>} : vector<8x256xf32>, vector<256x768xf32>, vector<8x768xf32> -> vector<8x768xf32>
    %607 = vector.extract_strided_slice %606 {offsets = [0, 0], sizes = [8, 384], strides = [1, 1]} : vector<8x768xf32> to vector<8x384xf32>
    %608 = vector.extract_strided_slice %606 {offsets = [0, 384], sizes = [8, 384], strides = [1, 1]} : vector<8x768xf32> to vector<8x384xf32>
    %609 = vector.extract_strided_slice %598 {offsets = [0, 0], sizes = [8, 128], strides = [1, 1]} : vector<8x384xf32> to vector<8x128xf32>
    %610 = vector.extract_strided_slice %607 {offsets = [0, 0], sizes = [8, 128], strides = [1, 1]} : vector<8x384xf32> to vector<8x128xf32>
    %611 = arith.addf %609, %610 : vector<8x128xf32>
    %612 = arith.negf %611 : vector<8x128xf32>
    %613 = math.exp %612 : vector<8x128xf32>
    %cst_132 = arith.constant 1.000000e+00 : f32
    %614 = vector.broadcast %cst_132 : f32 to vector<8x128xf32>
    %615 = arith.addf %614, %613 : vector<8x128xf32>
    %616 = arith.divf %614, %615 : vector<8x128xf32>
    %617 = vector.extract_strided_slice %598 {offsets = [0, 128], sizes = [8, 128], strides = [1, 1]} : vector<8x384xf32> to vector<8x128xf32>
    %618 = vector.extract_strided_slice %607 {offsets = [0, 128], sizes = [8, 128], strides = [1, 1]} : vector<8x384xf32> to vector<8x128xf32>
    %619 = arith.addf %617, %618 : vector<8x128xf32>
    %620 = arith.negf %619 : vector<8x128xf32>
    %621 = math.exp %620 : vector<8x128xf32>
    %cst_133 = arith.constant 1.000000e+00 : f32
    %622 = vector.broadcast %cst_133 : f32 to vector<8x128xf32>
    %623 = arith.addf %622, %621 : vector<8x128xf32>
    %624 = arith.divf %622, %623 : vector<8x128xf32>
    %625 = vector.extract_strided_slice %598 {offsets = [0, 256], sizes = [8, 128], strides = [1, 1]} : vector<8x384xf32> to vector<8x128xf32>
    %626 = vector.extract_strided_slice %607 {offsets = [0, 256], sizes = [8, 128], strides = [1, 1]} : vector<8x384xf32> to vector<8x128xf32>
    %627 = vector.broadcast %7 : vector<1x128xf32> to vector<8x128xf32>
    %628 = arith.addf %626, %627 : vector<8x128xf32>
    %629 = arith.mulf %616, %628 : vector<8x128xf32>
    %630 = arith.addf %625, %629 : vector<8x128xf32>
    %631 = math.tanh %630 : vector<8x128xf32>
    %cst_134 = arith.constant 1.000000e+00 : f32
    %632 = vector.broadcast %cst_134 : f32 to vector<8x128xf32>
    %633 = arith.subf %632, %624 : vector<8x128xf32>
    %634 = arith.mulf %633, %631 : vector<8x128xf32>
    %635 = arith.mulf %624, %586 : vector<8x128xf32>
    %636 = arith.addf %634, %635 : vector<8x128xf32>
    %637 = vector.extract_strided_slice %600 {offsets = [0, 0], sizes = [8, 128], strides = [1, 1]} : vector<8x384xf32> to vector<8x128xf32>
    %638 = vector.extract_strided_slice %608 {offsets = [0, 0], sizes = [8, 128], strides = [1, 1]} : vector<8x384xf32> to vector<8x128xf32>
    %639 = arith.addf %637, %638 : vector<8x128xf32>
    %640 = arith.negf %639 : vector<8x128xf32>
    %641 = math.exp %640 : vector<8x128xf32>
    %cst_135 = arith.constant 1.000000e+00 : f32
    %642 = vector.broadcast %cst_135 : f32 to vector<8x128xf32>
    %643 = arith.addf %642, %641 : vector<8x128xf32>
    %644 = arith.divf %642, %643 : vector<8x128xf32>
    %645 = vector.extract_strided_slice %600 {offsets = [0, 128], sizes = [8, 128], strides = [1, 1]} : vector<8x384xf32> to vector<8x128xf32>
    %646 = vector.extract_strided_slice %608 {offsets = [0, 128], sizes = [8, 128], strides = [1, 1]} : vector<8x384xf32> to vector<8x128xf32>
    %647 = arith.addf %645, %646 : vector<8x128xf32>
    %648 = arith.negf %647 : vector<8x128xf32>
    %649 = math.exp %648 : vector<8x128xf32>
    %cst_136 = arith.constant 1.000000e+00 : f32
    %650 = vector.broadcast %cst_136 : f32 to vector<8x128xf32>
    %651 = arith.addf %650, %649 : vector<8x128xf32>
    %652 = arith.divf %650, %651 : vector<8x128xf32>
    %653 = vector.extract_strided_slice %600 {offsets = [0, 256], sizes = [8, 128], strides = [1, 1]} : vector<8x384xf32> to vector<8x128xf32>
    %654 = vector.extract_strided_slice %608 {offsets = [0, 256], sizes = [8, 128], strides = [1, 1]} : vector<8x384xf32> to vector<8x128xf32>
    %655 = vector.broadcast %8 : vector<1x128xf32> to vector<8x128xf32>
    %656 = arith.addf %654, %655 : vector<8x128xf32>
    %657 = arith.mulf %644, %656 : vector<8x128xf32>
    %658 = arith.addf %653, %657 : vector<8x128xf32>
    %659 = math.tanh %658 : vector<8x128xf32>
    %cst_137 = arith.constant 1.000000e+00 : f32
    %660 = vector.broadcast %cst_137 : f32 to vector<8x128xf32>
    %661 = arith.subf %660, %652 : vector<8x128xf32>
    %662 = arith.mulf %661, %659 : vector<8x128xf32>
    %663 = arith.mulf %652, %591 : vector<8x128xf32>
    %664 = arith.addf %662, %663 : vector<8x128xf32>
    %665 = arith.mulf %602, %636 : vector<8x128xf32>
    %cst_138 = arith.constant 1.000000e+00 : f32
    %666 = vector.broadcast %cst_138 : f32 to vector<8x128xf32>
    %667 = arith.subf %666, %602 : vector<8x128xf32>
    %668 = arith.mulf %667, %586 : vector<8x128xf32>
    %669 = arith.addf %665, %668 : vector<8x128xf32>
    %670 = arith.mulf %604, %664 : vector<8x128xf32>
    %cst_139 = arith.constant 1.000000e+00 : f32
    %671 = vector.broadcast %cst_139 : f32 to vector<8x128xf32>
    %672 = arith.subf %671, %604 : vector<8x128xf32>
    %673 = arith.mulf %672, %591 : vector<8x128xf32>
    %674 = arith.addf %670, %673 : vector<8x128xf32>
    %c8_i32_140 = arith.constant 8 : i32
    %c0_141 = arith.constant 0 : index
    %c0_142 = arith.constant 0 : index
    %675 = vector.load %arg7[%c0_141, %c0_142] : memref<1x128xf32, #tpu.memory_space<vmem>>, vector<1x128xf32>
    %676 = vector.broadcast %675 : vector<1x128xf32> to vector<8x128xf32>
    %677 = arith.mulf %669, %676 : vector<8x128xf32>
    %cst_143 = arith.constant dense<0.000000e+00> : vector<8xf32>
    %678 = vector.multi_reduction <add>, %677, %cst_143 [1] : vector<8x128xf32> to vector<8xf32>
    %679 = vector.shape_cast %678 : vector<8xf32> to vector<8x1xf32>
    %c0_144 = arith.constant 0 : index
    %c0_145 = arith.constant 0 : index
    %680 = vector.load %arg8[%c0_144, %c0_145] : memref<1x128xf32, #tpu.memory_space<vmem>>, vector<1x128xf32>
    %681 = vector.broadcast %680 : vector<1x128xf32> to vector<8x128xf32>
    %682 = arith.mulf %674, %681 : vector<8x128xf32>
    %cst_146 = arith.constant dense<0.000000e+00> : vector<8xf32>
    %683 = vector.multi_reduction <add>, %682, %cst_146 [1] : vector<8x128xf32> to vector<8xf32>
    %684 = vector.shape_cast %683 : vector<8xf32> to vector<8x1xf32>
    %685 = arith.addf %679, %684 : vector<8x1xf32>
    %c0_147 = arith.constant 0 : index
    %c0_148 = arith.constant 0 : index
    %686 = vector.load %arg9[%c0_147, %c0_148] : memref<1x1xf32, #tpu.memory_space<vmem>>, vector<1x1xf32>
    %687 = vector.broadcast %686 : vector<1x1xf32> to vector<8x1xf32>
    %688 = arith.addf %685, %687 : vector<8x1xf32>
    %689 = arith.negf %688 : vector<8x1xf32>
    %690 = math.exp %689 : vector<8x1xf32>
    %cst_149 = arith.constant 1.000000e+00 : f32
    %691 = vector.broadcast %cst_149 : f32 to vector<8x1xf32>
    %692 = arith.addf %691, %690 : vector<8x1xf32>
    %693 = arith.divf %691, %692 : vector<8x1xf32>
    %c0_150 = arith.constant 0 : index
    %c0_151 = arith.constant 0 : index
    %694 = vector.load %arg10[%c0_150, %c0_151] : memref<8x1xf32, #tpu.memory_space<vmem>>, vector<8x1xf32>
    tpu.vector_store %arg10[%c0_150, %c0_151], %693 {strides = array<i32>} : memref<8x1xf32, #tpu.memory_space<vmem>>, vector<8x1xf32>,
    return
  }
}

</mosaic_0001>

<llo_original>
// kernel: tpu_custom_call.1
$region0: #{tpu_custom_call.1}
  #allocation0 [shape = 'u32[]', space=smem, size = 0x4, offset = 0x4, fixed_abs, tag = 'smem constant byte address 0x4 - core index']
  #allocation1 [shape = 'u32[144,128]{1,0:T(1,128)}', space=vmem, size = 0x12000, scoped, tag = 'internal scratch']
  #allocation2 [shape = 'f32[64,768]{1,0:T(8,128)}', space=vmem, size = 0x30000, scoped, tag = 'scratch operand']
  #allocation3 [shape = 'f32[1,1]{1,0:T(1,128)S(1)}', space=vmem, size = 0x200, scoped, tag = 'scoped memory for tpu_custom_call.1']
  %s0 = inlined_call_operand.vmem [shape: f32[64,32], index: 0, kind: input, shape index: {}]
  %s1 = inlined_call_operand.vmem [shape: f32[64,128], index: 1, kind: input, shape index: {}]
  %s2 = inlined_call_operand.hbm [shape: f32[32,768], index: 2, kind: input, shape index: {}]
  %s3 = inlined_call_operand.vmem [shape: f32[1,768], index: 3, kind: input, shape index: {}]
  %s4 = inlined_call_operand.hbm [shape: f32[256,768], index: 4, kind: input, shape index: {}]
  %s5 = inlined_call_operand.vmem [shape: f32[1,128], index: 5, kind: input, shape index: {}]
  %s6 = inlined_call_operand.vmem [shape: f32[1,128], index: 6, kind: input, shape index: {}]
  %s7 = inlined_call_operand.vmem [shape: f32[1,128], index: 7, kind: input, shape index: {}]
  %s8 = inlined_call_operand.vmem [shape: f32[1,128], index: 8, kind: input, shape index: {}]
  %s9 = inlined_call_operand.<no memory space> [shape: f32[1,1], index: 9, kind: input, shape index: {}]
  %s10 = inlined_call_operand.vmem [shape: f32[8,1], index: 10, kind: output, shape index: {}]
  %s11 = sld [smem:[#allocation0]]
  $region58: #{tpu_custom_call.1} parent=0
    _
  %s13 = ssub.s32 1, %s11
  %s14 = scalar_select 0, %s13, %s11
  %v15 = vstv %s9
  %16 = vst [vmem:[#allocation3] sm:$0x1] %v15
  $region1: #{tpu_custom_call.1} parent=0
    #allocation4 [shape = 'u8[98304]{0}', space=vmem, size = 0x18000, scoped, tag = 'input window, operand 2, single buffered']
    #allocation5 [shape = 's32[1]{0}', space=sflag, size = 0x4, scoped, tag = 'scoped memory for tpu_custom_call.1']
    #allocation6 [shape = 'u8[786432]{0}', space=vmem, size = 0xc0000, scoped, tag = 'input window, operand 4, single buffered']
    #allocation7 [shape = 's32[1]{0}', space=sflag, size = 0x4, scoped, tag = 'scoped memory for tpu_custom_call.1']
    %17 = vsyncpa [#allocation5], 0
    %18 = vsyncpa [#allocation7], 0
    // Predicated region
    $region2: #{tpu_custom_call.1} parent=1 // pred_check
      _
    $region3: #{tpu_custom_call.1} parent=1 // pred_check_branch
      %20 = sbr.rel (0) target = $region5
    $region4: #{tpu_custom_call.1} parent=1 // pred_region
      _
    $region5: #{tpu_custom_call.1} parent=1 // pred_fallthru
      _
    // Predicated region
    $region6: #{tpu_custom_call.1} parent=1 // pred_check
      _
    $region7: #{tpu_custom_call.1} parent=1 // pred_check_branch
      %22 = sbr.rel (0) target = $region9
    $region8: #{tpu_custom_call.1} parent=1 // pred_region
      _
    $region9: #{tpu_custom_call.1} parent=1 // pred_fallthru
      _
    // Predicated region
    $region10: #{tpu_custom_call.1} parent=1 // pred_check
      _
    $region11: #{tpu_custom_call.1} parent=1 // pred_check_branch
      %24 = sbr.rel (0) target = $region13
    $region12: #{tpu_custom_call.1} parent=1 // pred_region
      %s26 = ssub.s32 3072, 3072
      %27 = vsyncadd [#allocation5], %s26
      %s28 = sshll.u32 [#allocation4], 4
      %s29 = int_to_ptr.vmem [resolvable:$true] %s28
      %34 = dma.hbm_to_vmem [thread:$0]  %s2, 3072, %s29, [#allocation5], 768, 768, 48
    $region13: #{tpu_custom_call.1} parent=1 // pred_fallthru
      _
    // Predicated region
    $region14: #{tpu_custom_call.1} parent=1 // pred_check
      _
    $region15: #{tpu_custom_call.1} parent=1 // pred_check_branch
      %36 = sbr.rel (0) target = $region17
    $region16: #{tpu_custom_call.1} parent=1 // pred_region
      _
    $region17: #{tpu_custom_call.1} parent=1 // pred_fallthru
      _
    // Predicated region
    $region18: #{tpu_custom_call.1} parent=1 // pred_check
      _
    $region19: #{tpu_custom_call.1} parent=1 // pred_check_branch
      %38 = sbr.rel (0) target = $region21
    $region20: #{tpu_custom_call.1} parent=1 // pred_region
      %s40 = ssub.s32 24576, 24576
      %41 = vsyncadd [#allocation7], %s40
      %s42 = sshll.u32 [#allocation6], 4
      %s43 = int_to_ptr.vmem [resolvable:$true] %s42
      %48 = dma.hbm_to_vmem [thread:$0]  %s4, 24576, %s43, [#allocation7], 768, 768, 48
    $region21: #{tpu_custom_call.1} parent=1 // pred_fallthru
      _
    // Predicated region
    $region22: #{tpu_custom_call.1} parent=1 // pred_check
      _
    $region23: #{tpu_custom_call.1} parent=1 // pred_check_branch
      %50 = sbr.rel (0) target = $region25
    $region24: #{tpu_custom_call.1} parent=1 // pred_region
      _
    $region25: #{tpu_custom_call.1} parent=1 // pred_fallthru
      _
    // Predicated region
    $region26: #{tpu_custom_call.1} parent=1 // pred_check
      _
    $region27: #{tpu_custom_call.1} parent=1 // pred_check_branch
      %52 = sbr.rel (0) target = $region29
    $region28: #{tpu_custom_call.1} parent=1 // pred_region
      _
    $region29: #{tpu_custom_call.1} parent=1 // pred_fallthru
      _
    // Predicated region
    $region30: #{tpu_custom_call.1} parent=1 // pred_check
      _
    $region31: #{tpu_custom_call.1} parent=1 // pred_check_branch
      %54 = sbr.rel (0) target = $region33
    $region32: #{tpu_custom_call.1} parent=1 // pred_region
      _
    $region33: #{tpu_custom_call.1} parent=1 // pred_fallthru
      _
    // Predicated region
    $region34: #{tpu_custom_call.1} parent=1 // pred_check
      _
    $region35: #{tpu_custom_call.1} parent=1 // pred_check_branch
      %56 = sbr.rel (0) target = $region37
    $region36: #{tpu_custom_call.1} parent=1 // pred_region
      _
    $region37: #{tpu_custom_call.1} parent=1 // pred_fallthru
      _
    // Predicated region
    $region38: #{tpu_custom_call.1} parent=1 // pred_check
      _
    $region39: #{tpu_custom_call.1} parent=1 // pred_check_branch
      %58 = sbr.rel (0) target = $region41
    $region40: #{tpu_custom_call.1} parent=1 // pred_region
      _
    $region41: #{tpu_custom_call.1} parent=1 // pred_fallthru
      _
    // Predicated region
    $region42: #{tpu_custom_call.1} parent=1 // pred_check
      _
    $region43: #{tpu_custom_call.1} parent=1 // pred_check_branch
      %60 = sbr.rel (0) target = $region45
    $region44: #{tpu_custom_call.1} parent=1 // pred_region
      %61 = dma.done [#allocation5], 3072
    $region45: #{tpu_custom_call.1} parent=1 // pred_fallthru
      _
    // Predicated region
    $region46: #{tpu_custom_call.1} parent=1 // pred_check
      _
    $region47: #{tpu_custom_call.1} parent=1 // pred_check_branch
      %63 = sbr.rel (0) target = $region49
    $region48: #{tpu_custom_call.1} parent=1 // pred_region
      %64 = dma.done [#allocation7], 24576
    $region49: #{tpu_custom_call.1} parent=1 // pred_fallthru
      _
    %v65 = vld [vmem:[%s0] sm:$0xff]
    %v66 = vld [vmem:[%s0 + $0x8] sm:$0xff]
    %v67 = vld [vmem:[%s0 + $0x10] sm:$0xff]
    %v68 = vld [vmem:[%s0 + $0x18] sm:$0xff]
    %v69 = vld [vmem:[%s0 + $0x20] sm:$0xff]
    %v70 = vld [vmem:[%s0 + $0x28] sm:$0xff]
    %v71 = vld [vmem:[%s0 + $0x30] sm:$0xff]
    %v72 = vld [vmem:[%s0 + $0x38] sm:$0xff]
    %v73 = vld [vmem:[#allocation4] sm:$0xff]
    %v74 = vld [vmem:[#allocation4 + $0x8] sm:$0xff]
    %v75 = vld [vmem:[#allocation4 + $0x10] sm:$0xff]
    %v76 = vld [vmem:[#allocation4 + $0x18] sm:$0xff]
    %v77 = vld [vmem:[#allocation4 + $0x20] sm:$0xff]
    %v78 = vld [vmem:[#allocation4 + $0x28] sm:$0xff]
    %v79 = vld [vmem:[#allocation4 + $0x30] sm:$0xff]
    %v80 = vld [vmem:[#allocation4 + $0x38] sm:$0xff]
    %v81 = vld [vmem:[#allocation4 + $0x40] sm:$0xff]
    %v82 = vld [vmem:[#allocation4 + $0x48] sm:$0xff]
    %v83 = vld [vmem:[#allocation4 + $0x50] sm:$0xff]
    %v84 = vld [vmem:[#allocation4 + $0x58] sm:$0xff]
    %v85 = vld [vmem:[#allocation4 + $0x60] sm:$0xff]
    %v86 = vld [vmem:[#allocation4 + $0x68] sm:$0xff]
    %v87 = vld [vmem:[#allocation4 + $0x70] sm:$0xff]
    %v88 = vld [vmem:[#allocation4 + $0x78] sm:$0xff]
    %v89 = vld [vmem:[#allocation4 + $0x80] sm:$0xff]
    %v90 = vld [vmem:[#allocation4 + $0x88] sm:$0xff]
    %v91 = vld [vmem:[#allocation4 + $0x90] sm:$0xff]
    %v92 = vld [vmem:[#allocation4 + $0x98] sm:$0xff]
    %v93 = vld [vmem:[#allocation4 + $0xa0] sm:$0xff]
    %v94 = vld [vmem:[#allocation4 + $0xa8] sm:$0xff]
    %v95 = vld [vmem:[#allocation4 + $0xb0] sm:$0xff]
    %v96 = vld [vmem:[#allocation4 + $0xb8] sm:$0xff]
    %v97 = vld [vmem:[%s3] sm:$0x3f]
    %v99 = vlaneseq
    %v100 = vshrl.u32 %v99, 7
    %v101 = vsub.s32 0, %v100
    %v102 = vrot.slane %v97, %v101
    %v103 = vlaneseq
    %v104 = vshrl.u32 %v103, 7
    %v105 = vsub.s32 1, %v104
    %v106 = vrot.slane %v97, %v105
    %v107 = vlaneseq
    %v108 = vshrl.u32 %v107, 7
    %v109 = vsub.s32 2, %v108
    %v110 = vrot.slane %v97, %v109
    %v111 = vlaneseq
    %v112 = vshrl.u32 %v111, 7
    %v113 = vsub.s32 3, %v112
    %v114 = vrot.slane %v97, %v113
    %v115 = vlaneseq
    %v116 = vshrl.u32 %v115, 7
    %v117 = vsub.s32 4, %v116
    %v118 = vrot.slane %v97, %v117
    %v119 = vlaneseq
    %v120 = vshrl.u32 %v119, 7
    %v121 = vsub.s32 5, %v120
    %v122 = vrot.slane %v97, %v121
    %vm129 = vcmask 261120
    %v131 = vsel %vm129, %v65, 0
    %v134 = vsel %vm129, %v66, 0
    %v137 = vsel %vm129, %v67, 0
    %v140 = vsel %vm129, %v68, 0
    %v143 = vsel %vm129, %v69, 0
    %v146 = vsel %vm129, %v70, 0
    %v149 = vsel %vm129, %v71, 0
    %v152 = vsel %vm129, %v72, 0
    %154 = vmatprep.subr.mxu0 0.0
    %155 = vmatpush1.msra.mxu0 0.0
    %156 = vmatprep.subr.mxu0 0.0
    %157 = vmatpush1.msra.mxu0 0.0
    %158 = vmatprep.subr.mxu0 0.0
    %159 = vmatpush1.msra.mxu0 0.0
    %160 = vmatprep.subr.mxu0 0.0
    %161 = vmatpush1.msra.mxu0 0.0
    %162 = vmatprep.subr.mxu0 0.0
    %163 = vmatpush1.msra.mxu0 0.0
    %164 = vmatprep.subr.mxu0 0.0
    %165 = vmatpush1.msra.mxu0 0.0
    %166 = vmatprep.subr.mxu0 0.0
    %167 = vmatpush1.msra.mxu0 0.0
    %168 = vmatprep.subr.mxu0 0.0
    %169 = vmatpush1.msra.mxu0 0.0
    %170 = vmatprep.subr.mxu0 0.0
    %171 = vmatpush1.msra.mxu0 0.0
    %172 = vmatprep.subr.mxu0 0.0
    %173 = vmatpush1.msra.mxu0 0.0
    %174 = vmatprep.subr.mxu0 0.0
    %175 = vmatpush1.msra.mxu0 0.0
    %176 = vmatprep.subr.mxu0 0.0
    %177 = vmatpush1.msra.mxu0 0.0
    %178 = vmatprep.subr.mxu0 %v92
    %179 = vmatpush1.msra.mxu0 %v91
    %180 = vmatprep.subr.mxu0 %v86
    %181 = vmatpush1.msra.mxu0 %v85
    %182 = vmatprep.subr.mxu0 %v80
    %183 = vmatpush1.msra.mxu0 %v79
    %184 = vmatprep.subr.mxu0 %v74
    %185 = vmatpush1.msra.mxu0 %v73
    %186 = vmatprep.subr.mxu0 0.0
    %187 = vmatpush2.msra.mxu0 0.0
    %188 = vmatprep.subr.mxu0 0.0
    %189 = vmatpush2.msra.mxu0 0.0
    %190 = vmatprep.subr.mxu0 0.0
    %191 = vmatpush2.msra.mxu0 0.0
    %192 = vmatprep.subr.mxu0 0.0
    %193 = vmatpush2.msra.mxu0 0.0
    %194 = vmatprep.subr.mxu0 0.0
    %195 = vmatpush2.msra.mxu0 0.0
    %196 = vmatprep.subr.mxu0 0.0
    %197 = vmatpush2.msra.mxu0 0.0
    %198 = vmatprep.subr.mxu0 0.0
    %199 = vmatpush2.msra.mxu0 0.0
    %200 = vmatprep.subr.mxu0 0.0
    %201 = vmatpush2.msra.mxu0 0.0
    %202 = vmatprep.subr.mxu0 0.0
    %203 = vmatpush2.msra.mxu0 0.0
    %204 = vmatprep.subr.mxu0 0.0
    %205 = vmatpush2.msra.mxu0 0.0
    %206 = vmatprep.subr.mxu0 0.0
    %207 = vmatpush2.msra.mxu0 0.0
    %208 = vmatprep.subr.mxu0 0.0
    %209 = vmatpush2.msra.mxu0 0.0
    %210 = vmatprep.subr.mxu0 0.0
    %211 = vmatpush2.msra.mxu0 0.0
    %212 = vmatprep.subr.mxu0 0.0
    %213 = vmatpush2.msra.mxu0 0.0
    %214 = vmatprep.subr.mxu0 0.0
    %215 = vmatpush2.msra.mxu0 0.0
    %216 = vmatprep.subr.mxu0 0.0
    %217 = vmatpush2.msra.mxu0 0.0
    %218 = vmatprep.mubr.f32.mxu0 0.0
    %219 = vmatmul.mubr.f32.gmra.mxu0 %v131
    %v220 = vpop.f32.mrf.mxu0
    %v221 = vadd.f32 %v102, %v220
    %v222 = vpop.f32.mrf.mxu0
    %v223 = vadd.f32 %v106, %v222
    %224 = vmatprep.mubr.f32.mxu0 0.0
    %225 = vmatmul.mubr.f32.gmra.mxu0 %v134
    %v226 = vpop.f32.mrf.mxu0
    %v227 = vadd.f32 %v102, %v226
    %v228 = vpop.f32.mrf.mxu0
    %v229 = vadd.f32 %v106, %v228
    %230 = vmatprep.mubr.f32.mxu0 0.0
    %231 = vmatmul.mubr.f32.gmra.mxu0 %v137
    %v232 = vpop.f32.mrf.mxu0
    %v233 = vadd.f32 %v102, %v232
    %v234 = vpop.f32.mrf.mxu0
    %v235 = vadd.f32 %v106, %v234
    %236 = vmatprep.mubr.f32.mxu0 0.0
    %237 = vmatmul.mubr.f32.gmra.mxu0 %v140
    %v238 = vpop.f32.mrf.mxu0
    %v239 = vadd.f32 %v102, %v238
    %v240 = vpop.f32.mrf.mxu0
    %v241 = vadd.f32 %v106, %v240
    %242 = vmatprep.mubr.f32.mxu0 0.0
    %243 = vmatmul.mubr.f32.gmra.mxu0 %v143
    %v244 = vpop.f32.mrf.mxu0
    %v245 = vadd.f32 %v102, %v244
    %v246 = vpop.f32.mrf.mxu0
    %v247 = vadd.f32 %v106, %v246
    %248 = vmatprep.mubr.f32.mxu0 0.0
    %249 = vmatmul.mubr.f32.gmra.mxu0 %v146
    %v250 = vpop.f32.mrf.mxu0
    %v251 = vadd.f32 %v102, %v250
    %v252 = vpop.f32.mrf.mxu0
    %v253 = vadd.f32 %v106, %v252
    %254 = vmatprep.mubr.f32.mxu0 0.0
    %255 = vmatmul.mubr.f32.gmra.mxu0 %v149
    %v256 = vpop.f32.mrf.mxu0
    %v257 = vadd.f32 %v102, %v256
    %v258 = vpop.f32.mrf.mxu0
    %v259 = vadd.f32 %v106, %v258
    %260 = vmatprep.mubr.f32.mxu0 0.0
    %261 = vmatmul.mubr.f32.gmra.mxu0 %v152
    %v262 = vpop.f32.mrf.mxu0
    %v263 = vadd.f32 %v102, %v262
    %v264 = vpop.f32.mrf.mxu0
    %v265 = vadd.f32 %v106, %v264
    %266 = vdwg.mxu0
    %267 = vmatprep.subr.mxu0 0.0
    %268 = vmatpush1.msra.mxu0 0.0
    %269 = vmatprep.subr.mxu0 0.0
    %270 = vmatpush1.msra.mxu0 0.0
    %271 = vmatprep.subr.mxu0 0.0
    %272 = vmatpush1.msra.mxu0 0.0
    %273 = vmatprep.subr.mxu0 0.0
    %274 = vmatpush1.msra.mxu0 0.0
    %275 = vmatprep.subr.mxu0 0.0
    %276 = vmatpush1.msra.mxu0 0.0
    %277 = vmatprep.subr.mxu0 0.0
    %278 = vmatpush1.msra.mxu0 0.0
    %279 = vmatprep.subr.mxu0 0.0
    %280 = vmatpush1.msra.mxu0 0.0
    %281 = vmatprep.subr.mxu0 0.0
    %282 = vmatpush1.msra.mxu0 0.0
    %283 = vmatprep.subr.mxu0 0.0
    %284 = vmatpush1.msra.mxu0 0.0
    %285 = vmatprep.subr.mxu0 0.0
    %286 = vmatpush1.msra.mxu0 0.0
    %287 = vmatprep.subr.mxu0 0.0
    %288 = vmatpush1.msra.mxu0 0.0
    %289 = vmatprep.subr.mxu0 0.0
    %290 = vmatpush1.msra.mxu0 0.0
    %291 = vmatprep.subr.mxu0 %v94
    %292 = vmatpush1.msra.mxu0 %v93
    %293 = vmatprep.subr.mxu0 %v88
    %294 = vmatpush1.msra.mxu0 %v87
    %295 = vmatprep.subr.mxu0 %v82
    %296 = vmatpush1.msra.mxu0 %v81
    %297 = vmatprep.subr.mxu0 %v76
    %298 = vmatpush1.msra.mxu0 %v75
    %299 = vmatprep.subr.mxu0 0.0
    %300 = vmatpush2.msra.mxu0 0.0
    %301 = vmatprep.subr.mxu0 0.0
    %302 = vmatpush2.msra.mxu0 0.0
    %303 = vmatprep.subr.mxu0 0.0
    %304 = vmatpush2.msra.mxu0 0.0
    %305 = vmatprep.subr.mxu0 0.0
    %306 = vmatpush2.msra.mxu0 0.0
    %307 = vmatprep.subr.mxu0 0.0
    %308 = vmatpush2.msra.mxu0 0.0
    %309 = vmatprep.subr.mxu0 0.0
    %310 = vmatpush2.msra.mxu0 0.0
    %311 = vmatprep.subr.mxu0 0.0
    %312 = vmatpush2.msra.mxu0 0.0
    %313 = vmatprep.subr.mxu0 0.0
    %314 = vmatpush2.msra.mxu0 0.0
    %315 = vmatprep.subr.mxu0 0.0
    %316 = vmatpush2.msra.mxu0 0.0
    %317 = vmatprep.subr.mxu0 0.0
    %318 = vmatpush2.msra.mxu0 0.0
    %319 = vmatprep.subr.mxu0 0.0
    %320 = vmatpush2.msra.mxu0 0.0
    %321 = vmatprep.subr.mxu0 0.0
    %322 = vmatpush2.msra.mxu0 0.0
    %323 = vmatprep.subr.mxu0 0.0
    %324 = vmatpush2.msra.mxu0 0.0
    %325 = vmatprep.subr.mxu0 0.0
    %326 = vmatpush2.msra.mxu0 0.0
    %327 = vmatprep.subr.mxu0 0.0
    %328 = vmatpush2.msra.mxu0 0.0
    %329 = vmatprep.subr.mxu0 0.0
    %330 = vmatpush2.msra.mxu0 0.0
    %331 = vmatprep.mubr.f32.mxu0 0.0
    %332 = vmatmul.mubr.f32.gmra.mxu0 %v131
    %v333 = vpop.f32.mrf.mxu0
    %v334 = vadd.f32 %v110, %v333
    %v335 = vpop.f32.mrf.mxu0
    %v336 = vadd.f32 %v114, %v335
    %337 = vmatprep.mubr.f32.mxu0 0.0
    %338 = vmatmul.mubr.f32.gmra.mxu0 %v134
    %v339 = vpop.f32.mrf.mxu0
    %v340 = vadd.f32 %v110, %v339
    %v341 = vpop.f32.mrf.mxu0
    %v342 = vadd.f32 %v114, %v341
    %343 = vmatprep.mubr.f32.mxu0 0.0
    %344 = vmatmul.mubr.f32.gmra.mxu0 %v137
    %v345 = vpop.f32.mrf.mxu0
    %v346 = vadd.f32 %v110, %v345
    %v347 = vpop.f32.mrf.mxu0
    %v348 = vadd.f32 %v114, %v347
    %349 = vmatprep.mubr.f32.mxu0 0.0
    %350 = vmatmul.mubr.f32.gmra.mxu0 %v140
    %v351 = vpop.f32.mrf.mxu0
    %v352 = vadd.f32 %v110, %v351
    %v353 = vpop.f32.mrf.mxu0
    %v354 = vadd.f32 %v114, %v353
    %355 = vmatprep.mubr.f32.mxu0 0.0
    %356 = vmatmul.mubr.f32.gmra.mxu0 %v143
    %v357 = vpop.f32.mrf.mxu0
    %v358 = vadd.f32 %v110, %v357
    %v359 = vpop.f32.mrf.mxu0
    %v360 = vadd.f32 %v114, %v359
    %361 = vmatprep.mubr.f32.mxu0 0.0
    %362 = vmatmul.mubr.f32.gmra.mxu0 %v146
    %v363 = vpop.f32.mrf.mxu0
    %v364 = vadd.f32 %v110, %v363
    %v365 = vpop.f32.mrf.mxu0
    %v366 = vadd.f32 %v114, %v365
    %367 = vmatprep.mubr.f32.mxu0 0.0
    %368 = vmatmul.mubr.f32.gmra.mxu0 %v149
    %v369 = vpop.f32.mrf.mxu0
    %v370 = vadd.f32 %v110, %v369
    %v371 = vpop.f32.mrf.mxu0
    %v372 = vadd.f32 %v114, %v371
    %373 = vmatprep.mubr.f32.mxu0 0.0
    %374 = vmatmul.mubr.f32.gmra.mxu0 %v152
    %v375 = vpop.f32.mrf.mxu0
    %v376 = vadd.f32 %v110, %v375
    %v377 = vpop.f32.mrf.mxu0
    %v378 = vadd.f32 %v114, %v377
    %379 = vdwg.mxu0
    %380 = vmatprep.subr.mxu0 0.0
    %381 = vmatpush1.msra.mxu0 0.0
    %382 = vmatprep.subr.mxu0 0.0
    %383 = vmatpush1.msra.mxu0 0.0
    %384 = vmatprep.subr.mxu0 0.0
    %385 = vmatpush1.msra.mxu0 0.0
    %386 = vmatprep.subr.mxu0 0.0
    %387 = vmatpush1.msra.mxu0 0.0
    %388 = vmatprep.subr.mxu0 0.0
    %389 = vmatpush1.msra.mxu0 0.0
    %390 = vmatprep.subr.mxu0 0.0
    %391 = vmatpush1.msra.mxu0 0.0
    %392 = vmatprep.subr.mxu0 0.0
    %393 = vmatpush1.msra.mxu0 0.0
    %394 = vmatprep.subr.mxu0 0.0
    %395 = vmatpush1.msra.mxu0 0.0
    %396 = vmatprep.subr.mxu0 0.0
    %397 = vmatpush1.msra.mxu0 0.0
    %398 = vmatprep.subr.mxu0 0.0
    %399 = vmatpush1.msra.mxu0 0.0
    %400 = vmatprep.subr.mxu0 0.0
    %401 = vmatpush1.msra.mxu0 0.0
    %402 = vmatprep.subr.mxu0 0.0
    %403 = vmatpush1.msra.mxu0 0.0
    %404 = vmatprep.subr.mxu0 %v96
    %405 = vmatpush1.msra.mxu0 %v95
    %406 = vmatprep.subr.mxu0 %v90
    %407 = vmatpush1.msra.mxu0 %v89
    %408 = vmatprep.subr.mxu0 %v84
    %409 = vmatpush1.msra.mxu0 %v83
    %410 = vmatprep.subr.mxu0 %v78
    %411 = vmatpush1.msra.mxu0 %v77
    %412 = vmatprep.subr.mxu0 0.0
    %413 = vmatpush2.msra.mxu0 0.0
    %414 = vmatprep.subr.mxu0 0.0
    %415 = vmatpush2.msra.mxu0 0.0
    %416 = vmatprep.subr.mxu0 0.0
    %417 = vmatpush2.msra.mxu0 0.0
    %418 = vmatprep.subr.mxu0 0.0
    %419 = vmatpush2.msra.mxu0 0.0
    %420 = vmatprep.subr.mxu0 0.0
    %421 = vmatpush2.msra.mxu0 0.0
    %422 = vmatprep.subr.mxu0 0.0
    %423 = vmatpush2.msra.mxu0 0.0
    %424 = vmatprep.subr.mxu0 0.0
    %425 = vmatpush2.msra.mxu0 0.0
    %426 = vmatprep.subr.mxu0 0.0
    %427 = vmatpush2.msra.mxu0 0.0
    %428 = vmatprep.subr.mxu0 0.0
    %429 = vmatpush2.msra.mxu0 0.0
    %430 = vmatprep.subr.mxu0 0.0
    %431 = vmatpush2.msra.mxu0 0.0
    %432 = vmatprep.subr.mxu0 0.0
    %433 = vmatpush2.msra.mxu0 0.0
    %434 = vmatprep.subr.mxu0 0.0
    %435 = vmatpush2.msra.mxu0 0.0
    %436 = vmatprep.subr.mxu0 0.0
    %437 = vmatpush2.msra.mxu0 0.0
    %438 = vmatprep.subr.mxu0 0.0
    %439 = vmatpush2.msra.mxu0 0.0
    %440 = vmatprep.subr.mxu0 0.0
    %441 = vmatpush2.msra.mxu0 0.0
    %442 = vmatprep.subr.mxu0 0.0
    %443 = vmatpush2.msra.mxu0 0.0
    %444 = vmatprep.mubr.f32.mxu0 0.0
    %445 = vmatmul.mubr.f32.gmra.mxu0 %v131
    %v446 = vpop.f32.mrf.mxu0
    %v447 = vadd.f32 %v118, %v446
    %v448 = vpop.f32.mrf.mxu0
    %v449 = vadd.f32 %v122, %v448
    %450 = vmatprep.mubr.f32.mxu0 0.0
    %451 = vmatmul.mubr.f32.gmra.mxu0 %v134
    %v452 = vpop.f32.mrf.mxu0
    %v453 = vadd.f32 %v118, %v452
    %v454 = vpop.f32.mrf.mxu0
    %v455 = vadd.f32 %v122, %v454
    %456 = vmatprep.mubr.f32.mxu0 0.0
    %457 = vmatmul.mubr.f32.gmra.mxu0 %v137
    %v458 = vpop.f32.mrf.mxu0
    %v459 = vadd.f32 %v118, %v458
    %v460 = vpop.f32.mrf.mxu0
    %v461 = vadd.f32 %v122, %v460
    %462 = vmatprep.mubr.f32.mxu0 0.0
    %463 = vmatmul.mubr.f32.gmra.mxu0 %v140
    %v464 = vpop.f32.mrf.mxu0
    %v465 = vadd.f32 %v118, %v464
    %v466 = vpop.f32.mrf.mxu0
    %v467 = vadd.f32 %v122, %v466
    %468 = vmatprep.mubr.f32.mxu0 0.0
    %469 = vmatmul.mubr.f32.gmra.mxu0 %v143
    %v470 = vpop.f32.mrf.mxu0
    %v471 = vadd.f32 %v118, %v470
    %v472 = vpop.f32.mrf.mxu0
    %v473 = vadd.f32 %v122, %v472
    %474 = vmatprep.mubr.f32.mxu0 0.0
    %475 = vmatmul.mubr.f32.gmra.mxu0 %v146
    %v476 = vpop.f32.mrf.mxu0
    %v477 = vadd.f32 %v118, %v476
    %v478 = vpop.f32.mrf.mxu0
    %v479 = vadd.f32 %v122, %v478
    %480 = vmatprep.mubr.f32.mxu0 0.0
    %481 = vmatmul.mubr.f32.gmra.mxu0 %v149
    %v482 = vpop.f32.mrf.mxu0
    %v483 = vadd.f32 %v118, %v482
    %v484 = vpop.f32.mrf.mxu0
    %v485 = vadd.f32 %v122, %v484
    %486 = vmatprep.mubr.f32.mxu0 0.0
    %487 = vmatmul.mubr.f32.gmra.mxu0 %v152
    %v488 = vpop.f32.mrf.mxu0
    %v489 = vadd.f32 %v118, %v488
    %v490 = vpop.f32.mrf.mxu0
    %v491 = vadd.f32 %v122, %v490
    %492 = vdwg.mxu0
    %493 = vst [vmem:[#allocation2] sm:$0xff] %v221
    %494 = vst [vmem:[#allocation2 + $0x8] sm:$0xff] %v223
    %495 = vst [vmem:[#allocation2 + $0x10] sm:$0xff] %v334
    %496 = vst [vmem:[#allocation2 + $0x18] sm:$0xff] %v336
    %497 = vst [vmem:[#allocation2 + $0x20] sm:$0xff] %v447
    %498 = vst [vmem:[#allocation2 + $0x28] sm:$0xff] %v449
    %499 = vst [vmem:[#allocation2 + $0x30] sm:$0xff] %v227
    %500 = vst [vmem:[#allocation2 + $0x38] sm:$0xff] %v229
    %501 = vst [vmem:[#allocation2 + $0x40] sm:$0xff] %v340
    %502 = vst [vmem:[#allocation2 + $0x48] sm:$0xff] %v342
    %503 = vst [vmem:[#allocation2 + $0x50] sm:$0xff] %v453
    %504 = vst [vmem:[#allocation2 + $0x58] sm:$0xff] %v455
    %505 = vst [vmem:[#allocation2 + $0x60] sm:$0xff] %v233
    %506 = vst [vmem:[#allocation2 + $0x68] sm:$0xff] %v235
    %507 = vst [vmem:[#allocation2 + $0x70] sm:$0xff] %v346
    %508 = vst [vmem:[#allocation2 + $0x78] sm:$0xff] %v348
    %509 = vst [vmem:[#allocation2 + $0x80] sm:$0xff] %v459
    %510 = vst [vmem:[#allocation2 + $0x88] sm:$0xff] %v461
    %511 = vst [vmem:[#allocation2 + $0x90] sm:$0xff] %v239
    %512 = vst [vmem:[#allocation2 + $0x98] sm:$0xff] %v241
    %513 = vst [vmem:[#allocation2 + $0xa0] sm:$0xff] %v352
    %514 = vst [vmem:[#allocation2 + $0xa8] sm:$0xff] %v354
    %515 = vst [vmem:[#allocation2 + $0xb0] sm:$0xff] %v465
    %516 = vst [vmem:[#allocation2 + $0xb8] sm:$0xff] %v467
    %517 = vst [vmem:[#allocation2 + $0xc0] sm:$0xff] %v245
    %518 = vst [vmem:[#allocation2 + $0xc8] sm:$0xff] %v247
    %519 = vst [vmem:[#allocation2 + $0xd0] sm:$0xff] %v358
    %520 = vst [vmem:[#allocation2 + $0xd8] sm:$0xff] %v360
    %521 = vst [vmem:[#allocation2 + $0xe0] sm:$0xff] %v471
    %522 = vst [vmem:[#allocation2 + $0xe8] sm:$0xff] %v473
    %523 = vst [vmem:[#allocation2 + $0xf0] sm:$0xff] %v251
    %524 = vst [vmem:[#allocation2 + $0xf8] sm:$0xff] %v253
    %525 = vst [vmem:[#allocation2 + $0x100] sm:$0xff] %v364
    %526 = vst [vmem:[#allocation2 + $0x108] sm:$0xff] %v366
    %527 = vst [vmem:[#allocation2 + $0x110] sm:$0xff] %v477
    %528 = vst [vmem:[#allocation2 + $0x118] sm:$0xff] %v479
    %529 = vst [vmem:[#allocation2 + $0x120] sm:$0xff] %v257
    %530 = vst [vmem:[#allocation2 + $0x128] sm:$0xff] %v259
    %531 = vst [vmem:[#allocation2 + $0x130] sm:$0xff] %v370
    %532 = vst [vmem:[#allocation2 + $0x138] sm:$0xff] %v372
    %533 = vst [vmem:[#allocation2 + $0x140] sm:$0xff] %v483
    %534 = vst [vmem:[#allocation2 + $0x148] sm:$0xff] %v485
    %535 = vst [vmem:[#allocation2 + $0x150] sm:$0xff] %v263
    %536 = vst [vmem:[#allocation2 + $0x158] sm:$0xff] %v265
    %537 = vst [vmem:[#allocation2 + $0x160] sm:$0xff] %v376
    %538 = vst [vmem:[#allocation2 + $0x168] sm:$0xff] %v378
    %539 = vst [vmem:[#allocation2 + $0x170] sm:$0xff] %v489
    %540 = vst [vmem:[#allocation2 + $0x178] sm:$0xff] %v491
    %v541 = vld [vmem:[%s5] sm:$0x1]
    %v542 = vld [vmem:[%s6] sm:$0x1]
    %v543 = vld [vmem:[#allocation6] sm:$0xff]
    %v544 = vld [vmem:[#allocation6 + $0x8] sm:$0xff]
    %v545 = vld [vmem:[#allocation6 + $0x10] sm:$0xff]
    %v546 = vld [vmem:[#allocation6 + $0x18] sm:$0xff]
    %v547 = vld [vmem:[#allocation6 + $0x20] sm:$0xff]
    %v548 = vld [vmem:[#allocation6 + $0x28] sm:$0xff]
    %v549 = vld [vmem:[#allocation6 + $0x30] sm:$0xff]
    %v550 = vld [vmem:[#allocation6 + $0x38] sm:$0xff]
    %v551 = vld [vmem:[#allocation6 + $0x40] sm:$0xff]
    %v552 = vld [vmem:[#allocation6 + $0x48] sm:$0xff]
    %v553 = vld [vmem:[#allocation6 + $0x50] sm:$0xff]
    %v554 = vld [vmem:[#allocation6 + $0x58] sm:$0xff]
    %v555 = vld [vmem:[#allocation6 + $0x60] sm:$0xff]
    %v556 = vld [vmem:[#allocation6 + $0x68] sm:$0xff]
    %v557 = vld [vmem:[#allocation6 + $0x70] sm:$0xff]
    %v558 = vld [vmem:[#allocation6 + $0x78] sm:$0xff]
    %v559 = vld [vmem:[#allocation6 + $0x80] sm:$0xff]
    %v560 = vld [vmem:[#allocation6 + $0x88] sm:$0xff]
    %v561 = vld [vmem:[#allocation6 + $0x90] sm:$0xff]
    %v562 = vld [vmem:[#allocation6 + $0x98] sm:$0xff]
    %v563 = vld [vmem:[#allocation6 + $0xa0] sm:$0xff]
    %v564 = vld [vmem:[#allocation6 + $0xa8] sm:$0xff]
    %v565 = vld [vmem:[#allocation6 + $0xb0] sm:$0xff]
    %v566 = vld [vmem:[#allocation6 + $0xb8] sm:$0xff]
    %v567 = vld [vmem:[#allocation6 + $0xc0] sm:$0xff]
    %v568 = vld [vmem:[#allocation6 + $0xc8] sm:$0xff]
    %v569 = vld [vmem:[#allocation6 + $0xd0] sm:$0xff]
    %v570 = vld [vmem:[#allocation6 + $0xd8] sm:$0xff]
    %v571 = vld [vmem:[#allocation6 + $0xe0] sm:$0xff]
    %v572 = vld [vmem:[#allocation6 + $0xe8] sm:$0xff]
    %v573 = vld [vmem:[#allocation6 + $0xf0] sm:$0xff]
    %v574 = vld [vmem:[#allocation6 + $0xf8] sm:$0xff]
    %v575 = vld [vmem:[#allocation6 + $0x100] sm:$0xff]
    %v576 = vld [vmem:[#allocation6 + $0x108] sm:$0xff]
    %v577 = vld [vmem:[#allocation6 + $0x110] sm:$0xff]
    %v578 = vld [vmem:[#allocation6 + $0x118] sm:$0xff]
    %v579 = vld [vmem:[#allocation6 + $0x120] sm:$0xff]
    %v580 = vld [vmem:[#allocation6 + $0x128] sm:$0xff]
    %v581 = vld [vmem:[#allocation6 + $0x130] sm:$0xff]
    %v582 = vld [vmem:[#allocation6 + $0x138] sm:$0xff]
    %v583 = vld [vmem:[#allocation6 + $0x140] sm:$0xff]
    %v584 = vld [vmem:[#allocation6 + $0x148] sm:$0xff]
    %v585 = vld [vmem:[#allocation6 + $0x150] sm:$0xff]
    %v586 = vld [vmem:[#allocation6 + $0x158] sm:$0xff]
    %v587 = vld [vmem:[#allocation6 + $0x160] sm:$0xff]
    %v588 = vld [vmem:[#allocation6 + $0x168] sm:$0xff]
    %v589 = vld [vmem:[#allocation6 + $0x170] sm:$0xff]
    %v590 = vld [vmem:[#allocation6 + $0x178] sm:$0xff]
    %v591 = vld [vmem:[#allocation6 + $0x180] sm:$0xff]
    %v592 = vld [vmem:[#allocation6 + $0x188] sm:$0xff]
    %v593 = vld [vmem:[#allocation6 + $0x190] sm:$0xff]
    %v594 = vld [vmem:[#allocation6 + $0x198] sm:$0xff]
    %v595 = vld [vmem:[#allocation6 + $0x1a0] sm:$0xff]
    %v596 = vld [vmem:[#allocation6 + $0x1a8] sm:$0xff]
    %v597 = vld [vmem:[#allocation6 + $0x1b0] sm:$0xff]
    %v598 = vld [vmem:[#allocation6 + $0x1b8] sm:$0xff]
    %v599 = vld [vmem:[#allocation6 + $0x1c0] sm:$0xff]
    %v600 = vld [vmem:[#allocation6 + $0x1c8] sm:$0xff]
    %v601 = vld [vmem:[#allocation6 + $0x1d0] sm:$0xff]
    %v602 = vld [vmem:[#allocation6 + $0x1d8] sm:$0xff]
    %v603 = vld [vmem:[#allocation6 + $0x1e0] sm:$0xff]
    %v604 = vld [vmem:[#allocation6 + $0x1e8] sm:$0xff]
    %v605 = vld [vmem:[#allocation6 + $0x1f0] sm:$0xff]
    %v606 = vld [vmem:[#allocation6 + $0x1f8] sm:$0xff]
    %v607 = vld [vmem:[#allocation6 + $0x200] sm:$0xff]
    %v608 = vld [vmem:[#allocation6 + $0x208] sm:$0xff]
    %v609 = vld [vmem:[#allocation6 + $0x210] sm:$0xff]
    %v610 = vld [vmem:[#allocation6 + $0x218] sm:$0xff]
    %v611 = vld [vmem:[#allocation6 + $0x220] sm:$0xff]
    %v612 = vld [vmem:[#allocation6 + $0x228] sm:$0xff]
    %v613 = vld [vmem:[#allocation6 + $0x230] sm:$0xff]
    %v614 = vld [vmem:[#allocation6 + $0x238] sm:$0xff]
    %v615 = vld [vmem:[#allocation6 + $0x240] sm:$0xff]
    %v616 = vld [vmem:[#allocation6 + $0x248] sm:$0xff]
    %v617 = vld [vmem:[#allocation6 + $0x250] sm:$0xff]
    %v618 = vld [vmem:[#allocation6 + $0x258] sm:$0xff]
    %v619 = vld [vmem:[#allocation6 + $0x260] sm:$0xff]
    %v620 = vld [vmem:[#allocation6 + $0x268] sm:$0xff]
    %v621 = vld [vmem:[#allocation6 + $0x270] sm:$0xff]
    %v622 = vld [vmem:[#allocation6 + $0x278] sm:$0xff]
    %v623 = vld [vmem:[#allocation6 + $0x280] sm:$0xff]
    %v624 = vld [vmem:[#allocation6 + $0x288] sm:$0xff]
    %v625 = vld [vmem:[#allocation6 + $0x290] sm:$0xff]
    %v626 = vld [vmem:[#allocation6 + $0x298] sm:$0xff]
    %v627 = vld [vmem:[#allocation6 + $0x2a0] sm:$0xff]
    %v628 = vld [vmem:[#allocation6 + $0x2a8] sm:$0xff]
    %v629 = vld [vmem:[#allocation6 + $0x2b0] sm:$0xff]
    %v630 = vld [vmem:[#allocation6 + $0x2b8] sm:$0xff]
    %v631 = vld [vmem:[#allocation6 + $0x2c0] sm:$0xff]
    %v632 = vld [vmem:[#allocation6 + $0x2c8] sm:$0xff]
    %v633 = vld [vmem:[#allocation6 + $0x2d0] sm:$0xff]
    %v634 = vld [vmem:[#allocation6 + $0x2d8] sm:$0xff]
    %v635 = vld [vmem:[#allocation6 + $0x2e0] sm:$0xff]
    %v636 = vld [vmem:[#allocation6 + $0x2e8] sm:$0xff]
    %v637 = vld [vmem:[#allocation6 + $0x2f0] sm:$0xff]
    %v638 = vld [vmem:[#allocation6 + $0x2f8] sm:$0xff]
    %v639 = vld [vmem:[#allocation6 + $0x300] sm:$0xff]
    %v640 = vld [vmem:[#allocation6 + $0x308] sm:$0xff]
    %v641 = vld [vmem:[#allocation6 + $0x310] sm:$0xff]
    %v642 = vld [vmem:[#allocation6 + $0x318] sm:$0xff]
    %v643 = vld [vmem:[#allocation6 + $0x320] sm:$0xff]
    %v644 = vld [vmem:[#allocation6 + $0x328] sm:$0xff]
    %v645 = vld [vmem:[#allocation6 + $0x330] sm:$0xff]
    %v646 = vld [vmem:[#allocation6 + $0x338] sm:$0xff]
    %v647 = vld [vmem:[#allocation6 + $0x340] sm:$0xff]
    %v648 = vld [vmem:[#allocation6 + $0x348] sm:$0xff]
    %v649 = vld [vmem:[#allocation6 + $0x350] sm:$0xff]
    %v650 = vld [vmem:[#allocation6 + $0x358] sm:$0xff]
    %v651 = vld [vmem:[#allocation6 + $0x360] sm:$0xff]
    %v652 = vld [vmem:[#allocation6 + $0x368] sm:$0xff]
    %v653 = vld [vmem:[#allocation6 + $0x370] sm:$0xff]
    %v654 = vld [vmem:[#allocation6 + $0x378] sm:$0xff]
    %v655 = vld [vmem:[#allocation6 + $0x380] sm:$0xff]
    %v656 = vld [vmem:[#allocation6 + $0x388] sm:$0xff]
    %v657 = vld [vmem:[#allocation6 + $0x390] sm:$0xff]
    %v658 = vld [vmem:[#allocation6 + $0x398] sm:$0xff]
    %v659 = vld [vmem:[#allocation6 + $0x3a0] sm:$0xff]
    %v660 = vld [vmem:[#allocation6 + $0x3a8] sm:$0xff]
    %v661 = vld [vmem:[#allocation6 + $0x3b0] sm:$0xff]
    %v662 = vld [vmem:[#allocation6 + $0x3b8] sm:$0xff]
    %v663 = vld [vmem:[#allocation6 + $0x3c0] sm:$0xff]
    %v664 = vld [vmem:[#allocation6 + $0x3c8] sm:$0xff]
    %v665 = vld [vmem:[#allocation6 + $0x3d0] sm:$0xff]
    %v666 = vld [vmem:[#allocation6 + $0x3d8] sm:$0xff]
    %v667 = vld [vmem:[#allocation6 + $0x3e0] sm:$0xff]
    %v668 = vld [vmem:[#allocation6 + $0x3e8] sm:$0xff]
    %v669 = vld [vmem:[#allocation6 + $0x3f0] sm:$0xff]
    %v670 = vld [vmem:[#allocation6 + $0x3f8] sm:$0xff]
    %v671 = vld [vmem:[#allocation6 + $0x400] sm:$0xff]
    %v672 = vld [vmem:[#allocation6 + $0x408] sm:$0xff]
    %v673 = vld [vmem:[#allocation6 + $0x410] sm:$0xff]
    %v674 = vld [vmem:[#allocation6 + $0x418] sm:$0xff]
    %v675 = vld [vmem:[#allocation6 + $0x420] sm:$0xff]
    %v676 = vld [vmem:[#allocation6 + $0x428] sm:$0xff]
    %v677 = vld [vmem:[#allocation6 + $0x430] sm:$0xff]
    %v678 = vld [vmem:[#allocation6 + $0x438] sm:$0xff]
    %v679 = vld [vmem:[#allocation6 + $0x440] sm:$0xff]
    %v680 = vld [vmem:[#allocation6 + $0x448] sm:$0xff]
    %v681 = vld [vmem:[#allocation6 + $0x450] sm:$0xff]
    %v682 = vld [vmem:[#allocation6 + $0x458] sm:$0xff]
    %v683 = vld [vmem:[#allocation6 + $0x460] sm:$0xff]
    %v684 = vld [vmem:[#allocation6 + $0x468] sm:$0xff]
    %v685 = vld [vmem:[#allocation6 + $0x470] sm:$0xff]
    %v686 = vld [vmem:[#allocation6 + $0x478] sm:$0xff]
    %v687 = vld [vmem:[#allocation6 + $0x480] sm:$0xff]
    %v688 = vld [vmem:[#allocation6 + $0x488] sm:$0xff]
    %v689 = vld [vmem:[#allocation6 + $0x490] sm:$0xff]
    %v690 = vld [vmem:[#allocation6 + $0x498] sm:$0xff]
    %v691 = vld [vmem:[#allocation6 + $0x4a0] sm:$0xff]
    %v692 = vld [vmem:[#allocation6 + $0x4a8] sm:$0xff]
    %v693 = vld [vmem:[#allocation6 + $0x4b0] sm:$0xff]
    %v694 = vld [vmem:[#allocation6 + $0x4b8] sm:$0xff]
    %v695 = vld [vmem:[#allocation6 + $0x4c0] sm:$0xff]
    %v696 = vld [vmem:[#allocation6 + $0x4c8] sm:$0xff]
    %v697 = vld [vmem:[#allocation6 + $0x4d0] sm:$0xff]
    %v698 = vld [vmem:[#allocation6 + $0x4d8] sm:$0xff]
    %v699 = vld [vmem:[#allocation6 + $0x4e0] sm:$0xff]
    %v700 = vld [vmem:[#allocation6 + $0x4e8] sm:$0xff]
    %v701 = vld [vmem:[#allocation6 + $0x4f0] sm:$0xff]
    %v702 = vld [vmem:[#allocation6 + $0x4f8] sm:$0xff]
    %v703 = vld [vmem:[#allocation6 + $0x500] sm:$0xff]
    %v704 = vld [vmem:[#allocation6 + $0x508] sm:$0xff]
    %v705 = vld [vmem:[#allocation6 + $0x510] sm:$0xff]
    %v706 = vld [vmem:[#allocation6 + $0x518] sm:$0xff]
    %v707 = vld [vmem:[#allocation6 + $0x520] sm:$0xff]
    %v708 = vld [vmem:[#allocation6 + $0x528] sm:$0xff]
    %v709 = vld [vmem:[#allocation6 + $0x530] sm:$0xff]
    %v710 = vld [vmem:[#allocation6 + $0x538] sm:$0xff]
    %v711 = vld [vmem:[#allocation6 + $0x540] sm:$0xff]
    %v712 = vld [vmem:[#allocation6 + $0x548] sm:$0xff]
    %v713 = vld [vmem:[#allocation6 + $0x550] sm:$0xff]
    %v714 = vld [vmem:[#allocation6 + $0x558] sm:$0xff]
    %v715 = vld [vmem:[#allocation6 + $0x560] sm:$0xff]
    %v716 = vld [vmem:[#allocation6 + $0x568] sm:$0xff]
    %v717 = vld [vmem:[#allocation6 + $0x570] sm:$0xff]
    %v718 = vld [vmem:[#allocation6 + $0x578] sm:$0xff]
    %v719 = vld [vmem:[#allocation6 + $0x580] sm:$0xff]
    %v720 = vld [vmem:[#allocation6 + $0x588] sm:$0xff]
    %v721 = vld [vmem:[#allocation6 + $0x590] sm:$0xff]
    %v722 = vld [vmem:[#allocation6 + $0x598] sm:$0xff]
    %v723 = vld [vmem:[#allocation6 + $0x5a0] sm:$0xff]
    %v724 = vld [vmem:[#allocation6 + $0x5a8] sm:$0xff]
    %v725 = vld [vmem:[#allocation6 + $0x5b0] sm:$0xff]
    %v726 = vld [vmem:[#allocation6 + $0x5b8] sm:$0xff]
    %v727 = vld [vmem:[#allocation6 + $0x5c0] sm:$0xff]
    %v728 = vld [vmem:[#allocation6 + $0x5c8] sm:$0xff]
    %v729 = vld [vmem:[#allocation6 + $0x5d0] sm:$0xff]
    %v730 = vld [vmem:[#allocation6 + $0x5d8] sm:$0xff]
    %v731 = vld [vmem:[#allocation6 + $0x5e0] sm:$0xff]
    %v732 = vld [vmem:[#allocation6 + $0x5e8] sm:$0xff]
    %v733 = vld [vmem:[#allocation6 + $0x5f0] sm:$0xff]
    %v734 = vld [vmem:[#allocation6 + $0x5f8] sm:$0xff]
    %s735 = smul.u32 0, 6
    %s736 = smul.addr %s735, 8
    %s737 = scalar_lea.vmem [#allocation2], %s736
    %v738 = vld [vmem:[%s737] sm:$0xff]
    %v739 = vld [vmem:[%s737 + $0x8] sm:$0xff]
    %v740 = vld [vmem:[%s737 + $0x10] sm:$0xff]
    %s741 = smul.u32 7, 6
    %s742 = smul.addr %s741, 8
    %s743 = scalar_lea.vmem [#allocation2], %s742
    %v744 = vld [vmem:[%s743 + $0x18] sm:$0xff]
    %v745 = vld [vmem:[%s743 + $0x20] sm:$0xff]
    %v746 = vld [vmem:[%s743 + $0x28] sm:$0xff]
    %v747 = vld [vmem:[%s1] sm:$0xff]
    %s748 = scalar_lea.vmem %s1, 56
    %v749 = vld [vmem:[%s748] sm:$0xff]
    %750 = vmatprep.subr.mxu0 %v634
    %751 = vmatpush1.msra.mxu0 %v633
    %752 = vmatprep.subr.mxu0 %v628
    %753 = vmatpush1.msra.mxu0 %v627
    %754 = vmatprep.subr.mxu0 %v622
    %755 = vmatpush1.msra.mxu0 %v621
    %756 = vmatprep.subr.mxu0 %v616
    %757 = vmatpush1.msra.mxu0 %v615
    %758 = vmatprep.subr.mxu0 %v610
    %759 = vmatpush1.msra.mxu0 %v609
    %760 = vmatprep.subr.mxu0 %v604
    %761 = vmatpush1.msra.mxu0 %v603
    %762 = vmatprep.subr.mxu0 %v598
    %763 = vmatpush1.msra.mxu0 %v597
    %764 = vmatprep.subr.mxu0 %v592
    %765 = vmatpush1.msra.mxu0 %v591
    %766 = vmatprep.subr.mxu0 %v586
    %767 = vmatpush1.msra.mxu0 %v585
    %768 = vmatprep.subr.mxu0 %v580
    %769 = vmatpush1.msra.mxu0 %v579
    %770 = vmatprep.subr.mxu0 %v574
    %771 = vmatpush1.msra.mxu0 %v573
    %772 = vmatprep.subr.mxu0 %v568
    %773 = vmatpush1.msra.mxu0 %v567
    %774 = vmatprep.subr.mxu0 %v562
    %775 = vmatpush1.msra.mxu0 %v561
    %776 = vmatprep.subr.mxu0 %v556
    %777 = vmatpush1.msra.mxu0 %v555
    %778 = vmatprep.subr.mxu0 %v550
    %779 = vmatpush1.msra.mxu0 %v549
    %780 = vmatprep.subr.mxu0 %v544
    %781 = vmatpush1.msra.mxu0 %v543
    %782 = vmatprep.subr.mxu0 %v730
    %783 = vmatpush2.msra.mxu0 %v729
    %784 = vmatprep.subr.mxu0 %v724
    %785 = vmatpush2.msra.mxu0 %v723
    %786 = vmatprep.subr.mxu0 %v718
    %787 = vmatpush2.msra.mxu0 %v717
    %788 = vmatprep.subr.mxu0 %v712
    %789 = vmatpush2.msra.mxu0 %v711
    %790 = vmatprep.subr.mxu0 %v706
    %791 = vmatpush2.msra.mxu0 %v705
    %792 = vmatprep.subr.mxu0 %v700
    %793 = vmatpush2.msra.mxu0 %v699
    %794 = vmatprep.subr.mxu0 %v694
    %795 = vmatpush2.msra.mxu0 %v693
    %796 = vmatprep.subr.mxu0 %v688
    %797 = vmatpush2.msra.mxu0 %v687
    %798 = vmatprep.subr.mxu0 %v682
    %799 = vmatpush2.msra.mxu0 %v681
    %800 = vmatprep.subr.mxu0 %v676
    %801 = vmatpush2.msra.mxu0 %v675
    %802 = vmatprep.subr.mxu0 %v670
    %803 = vmatpush2.msra.mxu0 %v669
    %804 = vmatprep.subr.mxu0 %v664
    %805 = vmatpush2.msra.mxu0 %v663
    %806 = vmatprep.subr.mxu0 %v658
    %807 = vmatpush2.msra.mxu0 %v657
    %808 = vmatprep.subr.mxu0 %v652
    %809 = vmatpush2.msra.mxu0 %v651
    %810 = vmatprep.subr.mxu0 %v646
    %811 = vmatpush2.msra.mxu0 %v645
    %812 = vmatprep.subr.mxu0 %v640
    %813 = vmatpush2.msra.mxu0 %v639
    %814 = vmatprep.mubr.f32.mxu0 0.0
    %815 = vmatmul.mubr.f32.gmra.mxu0 0.0
    %v816 = vpop.f32.mrf.mxu0
    %v817 = vadd.f32 0.0, %v816
    %v818 = vpop.f32.mrf.mxu0
    %v819 = vadd.f32 0.0, %v818
    %820 = vdwg.mxu0
    %821 = vmatprep.subr.mxu0 %v636
    %822 = vmatpush1.msra.mxu0 %v635
    %823 = vmatprep.subr.mxu0 %v630
    %824 = vmatpush1.msra.mxu0 %v629
    %825 = vmatprep.subr.mxu0 %v624
    %826 = vmatpush1.msra.mxu0 %v623
    %827 = vmatprep.subr.mxu0 %v618
    %828 = vmatpush1.msra.mxu0 %v617
    %829 = vmatprep.subr.mxu0 %v612
    %830 = vmatpush1.msra.mxu0 %v611
    %831 = vmatprep.subr.mxu0 %v606
    %832 = vmatpush1.msra.mxu0 %v605
    %833 = vmatprep.subr.mxu0 %v600
    %834 = vmatpush1.msra.mxu0 %v599
    %835 = vmatprep.subr.mxu0 %v594
    %836 = vmatpush1.msra.mxu0 %v593
    %837 = vmatprep.subr.mxu0 %v588
    %838 = vmatpush1.msra.mxu0 %v587
    %839 = vmatprep.subr.mxu0 %v582
    %840 = vmatpush1.msra.mxu0 %v581
    %841 = vmatprep.subr.mxu0 %v576
    %842 = vmatpush1.msra.mxu0 %v575
    %843 = vmatprep.subr.mxu0 %v570
    %844 = vmatpush1.msra.mxu0 %v569
    %845 = vmatprep.subr.mxu0 %v564
    %846 = vmatpush1.msra.mxu0 %v563
    %847 = vmatprep.subr.mxu0 %v558
    %848 = vmatpush1.msra.mxu0 %v557
    %849 = vmatprep.subr.mxu0 %v552
    %850 = vmatpush1.msra.mxu0 %v551
    %851 = vmatprep.subr.mxu0 %v546
    %852 = vmatpush1.msra.mxu0 %v545
    %853 = vmatprep.subr.mxu0 %v732
    %854 = vmatpush2.msra.mxu0 %v731
    %855 = vmatprep.subr.mxu0 %v726
    %856 = vmatpush2.msra.mxu0 %v725
    %857 = vmatprep.subr.mxu0 %v720
    %858 = vmatpush2.msra.mxu0 %v719
    %859 = vmatprep.subr.mxu0 %v714
    %860 = vmatpush2.msra.mxu0 %v713
    %861 = vmatprep.subr.mxu0 %v708
    %862 = vmatpush2.msra.mxu0 %v707
    %863 = vmatprep.subr.mxu0 %v702
    %864 = vmatpush2.msra.mxu0 %v701
    %865 = vmatprep.subr.mxu0 %v696
    %866 = vmatpush2.msra.mxu0 %v695
    %867 = vmatprep.subr.mxu0 %v690
    %868 = vmatpush2.msra.mxu0 %v689
    %869 = vmatprep.subr.mxu0 %v684
    %870 = vmatpush2.msra.mxu0 %v683
    %871 = vmatprep.subr.mxu0 %v678
    %872 = vmatpush2.msra.mxu0 %v677
    %873 = vmatprep.subr.mxu0 %v672
    %874 = vmatpush2.msra.mxu0 %v671
    %875 = vmatprep.subr.mxu0 %v666
    %876 = vmatpush2.msra.mxu0 %v665
    %877 = vmatprep.subr.mxu0 %v660
    %878 = vmatpush2.msra.mxu0 %v659
    %879 = vmatprep.subr.mxu0 %v654
    %880 = vmatpush2.msra.mxu0 %v653
    %881 = vmatprep.subr.mxu0 %v648
    %882 = vmatpush2.msra.mxu0 %v647
    %883 = vmatprep.subr.mxu0 %v642
    %884 = vmatpush2.msra.mxu0 %v641
    %885 = vmatprep.mubr.f32.mxu0 0.0
    %886 = vmatmul.mubr.f32.gmra.mxu0 0.0
    %v887 = vpop.f32.mrf.mxu0
    %v888 = vadd.f32 0.0, %v887
    %v889 = vpop.f32.mrf.mxu0
    %v890 = vadd.f32 0.0, %v889
    %891 = vdwg.mxu0
    %892 = vmatprep.subr.mxu0 %v638
    %893 = vmatpush1.msra.mxu0 %v637
    %894 = vmatprep.subr.mxu0 %v632
    %895 = vmatpush1.msra.mxu0 %v631
    %896 = vmatprep.subr.mxu0 %v626
    %897 = vmatpush1.msra.mxu0 %v625
    %898 = vmatprep.subr.mxu0 %v620
    %899 = vmatpush1.msra.mxu0 %v619
    %900 = vmatprep.subr.mxu0 %v614
    %901 = vmatpush1.msra.mxu0 %v613
    %902 = vmatprep.subr.mxu0 %v608
    %903 = vmatpush1.msra.mxu0 %v607
    %904 = vmatprep.subr.mxu0 %v602
    %905 = vmatpush1.msra.mxu0 %v601
    %906 = vmatprep.subr.mxu0 %v596
    %907 = vmatpush1.msra.mxu0 %v595
    %908 = vmatprep.subr.mxu0 %v590
    %909 = vmatpush1.msra.mxu0 %v589
    %910 = vmatprep.subr.mxu0 %v584
    %911 = vmatpush1.msra.mxu0 %v583
    %912 = vmatprep.subr.mxu0 %v578
    %913 = vmatpush1.msra.mxu0 %v577
    %914 = vmatprep.subr.mxu0 %v572
    %915 = vmatpush1.msra.mxu0 %v571
    %916 = vmatprep.subr.mxu0 %v566
    %917 = vmatpush1.msra.mxu0 %v565
    %918 = vmatprep.subr.mxu0 %v560
    %919 = vmatpush1.msra.mxu0 %v559
    %920 = vmatprep.subr.mxu0 %v554
    %921 = vmatpush1.msra.mxu0 %v553
    %922 = vmatprep.subr.mxu0 %v548
    %923 = vmatpush1.msra.mxu0 %v547
    %924 = vmatprep.subr.mxu0 %v734
    %925 = vmatpush2.msra.mxu0 %v733
    %926 = vmatprep.subr.mxu0 %v728
    %927 = vmatpush2.msra.mxu0 %v727
    %928 = vmatprep.subr.mxu0 %v722
    %929 = vmatpush2.msra.mxu0 %v721
    %930 = vmatprep.subr.mxu0 %v716
    %931 = vmatpush2.msra.mxu0 %v715
    %932 = vmatprep.subr.mxu0 %v710
    %933 = vmatpush2.msra.mxu0 %v709
    %934 = vmatprep.subr.mxu0 %v704
    %935 = vmatpush2.msra.mxu0 %v703
    %936 = vmatprep.subr.mxu0 %v698
    %937 = vmatpush2.msra.mxu0 %v697
    %938 = vmatprep.subr.mxu0 %v692
    %939 = vmatpush2.msra.mxu0 %v691
    %940 = vmatprep.subr.mxu0 %v686
    %941 = vmatpush2.msra.mxu0 %v685
    %942 = vmatprep.subr.mxu0 %v680
    %943 = vmatpush2.msra.mxu0 %v679
    %944 = vmatprep.subr.mxu0 %v674
    %945 = vmatpush2.msra.mxu0 %v673
    %946 = vmatprep.subr.mxu0 %v668
    %947 = vmatpush2.msra.mxu0 %v667
    %948 = vmatprep.subr.mxu0 %v662
    %949 = vmatpush2.msra.mxu0 %v661
    %950 = vmatprep.subr.mxu0 %v656
    %951 = vmatpush2.msra.mxu0 %v655
    %952 = vmatprep.subr.mxu0 %v650
    %953 = vmatpush2.msra.mxu0 %v649
    %954 = vmatprep.subr.mxu0 %v644
    %955 = vmatpush2.msra.mxu0 %v643
    %956 = vmatprep.mubr.f32.mxu0 0.0
    %957 = vmatmul.mubr.f32.gmra.mxu0 0.0
    %v958 = vpop.f32.mrf.mxu0
    %v959 = vadd.f32 0.0, %v958
    %v960 = vpop.f32.mrf.mxu0
    %v961 = vadd.f32 0.0, %v960
    %962 = vdwg.mxu0
    %v963 = vadd.f32 %v738, %v817
    %v964 = vxor.u32 %v963, 2147483648
    %v965 = vmul.f32 %v964, 1.442695
    %v966 = vpow.pop %v965
    %v967 = vadd.f32 %v966, 1.0
    %v968 = vrcp.pop %v967
    %v969 = vmul.f32 1.0, %v968
    %v970 = vadd.f32 %v739, %v819
    %v971 = vxor.u32 %v970, 2147483648
    %v972 = vmul.f32 %v971, 1.442695
    %v973 = vpow.pop %v972
    %v974 = vadd.f32 %v973, 1.0
    %v975 = vrcp.pop %v974
    %v976 = vmul.f32 1.0, %v975
    %v978 = vlaneseq
    %v979 = vshrl.u32 %v978, 7
    %v980 = vsub.s32 0, %v979
    %v981 = vrot.slane %v541, %v980
    %v983 = vadd.f32 %v888, %v981
    %v984 = vmul.f32 %v969, %v983
    %v985 = vadd.f32 %v740, %v984
    %v986 = vtanh.pop %v985
    %v987 = vsub.f32 1.0, %v976
    %v988 = vmul.f32 %v987, %v986
    %v989 = vmul.f32 %v976, 0.0
    %v990 = vadd.f32 %v988, %v989
    %v991 = vadd.f32 %v744, %v890
    %v992 = vxor.u32 %v991, 2147483648
    %v993 = vmul.f32 %v992, 1.442695
    %v994 = vpow.pop %v993
    %v995 = vadd.f32 %v994, 1.0
    %v996 = vrcp.pop %v995
    %v997 = vmul.f32 1.0, %v996
    %v998 = vadd.f32 %v745, %v959
    %v999 = vxor.u32 %v998, 2147483648
    %v1000 = vmul.f32 %v999, 1.442695
    %v1001 = vpow.pop %v1000
    %v1002 = vadd.f32 %v1001, 1.0
    %v1003 = vrcp.pop %v1002
    %v1004 = vmul.f32 1.0, %v1003
    %v1006 = vlaneseq
    %v1007 = vshrl.u32 %v1006, 7
    %v1008 = vsub.s32 0, %v1007
    %v1009 = vrot.slane %v542, %v1008
    %v1011 = vadd.f32 %v961, %v1009
    %v1012 = vmul.f32 %v997, %v1011
    %v1013 = vadd.f32 %v746, %v1012
    %v1014 = vtanh.pop %v1013
    %v1015 = vsub.f32 1.0, %v1004
    %v1016 = vmul.f32 %v1015, %v1014
    %v1017 = vmul.f32 %v1004, 0.0
    %v1018 = vadd.f32 %v1016, %v1017
    %v1019 = vmul.f32 %v747, %v990
    %v1020 = vsub.f32 1.0, %v747
    %v1021 = vmul.f32 %v1020, 0.0
    %v1022 = vadd.f32 %v1019, %v1021
    %v1023 = vmul.f32 %v749, %v1018
    %v1024 = vsub.f32 1.0, %v749
    %v1025 = vmul.f32 %v1024, 0.0
    %v1026 = vadd.f32 %v1023, %v1025
    %s1027 = smul.u32 1, 6
    %s1028 = smul.addr %s1027, 8
    %s1029 = scalar_lea.vmem [#allocation2], %s1028
    %v1030 = vld [vmem:[%s1029] sm:$0xff]
    %v1031 = vld [vmem:[%s1029 + $0x8] sm:$0xff]
    %v1032 = vld [vmem:[%s1029 + $0x10] sm:$0xff]
    %s1033 = smul.u32 6, 6
    %s1034 = smul.addr %s1033, 8
    %s1035 = scalar_lea.vmem [#allocation2], %s1034
    %v1036 = vld [vmem:[%s1035 + $0x18] sm:$0xff]
    %v1037 = vld [vmem:[%s1035 + $0x20] sm:$0xff]
    %v1038 = vld [vmem:[%s1035 + $0x28] sm:$0xff]
    %s1039 = scalar_lea.vmem %s1, 8
    %v1040 = vld [vmem:[%s1039] sm:$0xff]
    %s1041 = scalar_lea.vmem %s1, 48
    %v1042 = vld [vmem:[%s1041] sm:$0xff]
    %1043 = vmatprep.subr.mxu0 %v634
    %1044 = vmatpush1.msra.mxu0 %v633
    %1045 = vmatprep.subr.mxu0 %v628
    %1046 = vmatpush1.msra.mxu0 %v627
    %1047 = vmatprep.subr.mxu0 %v622
    %1048 = vmatpush1.msra.mxu0 %v621
    %1049 = vmatprep.subr.mxu0 %v616
    %1050 = vmatpush1.msra.mxu0 %v615
    %1051 = vmatprep.subr.mxu0 %v610
    %1052 = vmatpush1.msra.mxu0 %v609
    %1053 = vmatprep.subr.mxu0 %v604
    %1054 = vmatpush1.msra.mxu0 %v603
    %1055 = vmatprep.subr.mxu0 %v598
    %1056 = vmatpush1.msra.mxu0 %v597
    %1057 = vmatprep.subr.mxu0 %v592
    %1058 = vmatpush1.msra.mxu0 %v591
    %1059 = vmatprep.subr.mxu0 %v586
    %1060 = vmatpush1.msra.mxu0 %v585
    %1061 = vmatprep.subr.mxu0 %v580
    %1062 = vmatpush1.msra.mxu0 %v579
    %1063 = vmatprep.subr.mxu0 %v574
    %1064 = vmatpush1.msra.mxu0 %v573
    %1065 = vmatprep.subr.mxu0 %v568
    %1066 = vmatpush1.msra.mxu0 %v567
    %1067 = vmatprep.subr.mxu0 %v562
    %1068 = vmatpush1.msra.mxu0 %v561
    %1069 = vmatprep.subr.mxu0 %v556
    %1070 = vmatpush1.msra.mxu0 %v555
    %1071 = vmatprep.subr.mxu0 %v550
    %1072 = vmatpush1.msra.mxu0 %v549
    %1073 = vmatprep.subr.mxu0 %v544
    %1074 = vmatpush1.msra.mxu0 %v543
    %1075 = vmatprep.subr.mxu0 %v730
    %1076 = vmatpush2.msra.mxu0 %v729
    %1077 = vmatprep.subr.mxu0 %v724
    %1078 = vmatpush2.msra.mxu0 %v723
    %1079 = vmatprep.subr.mxu0 %v718
    %1080 = vmatpush2.msra.mxu0 %v717
    %1081 = vmatprep.subr.mxu0 %v712
    %1082 = vmatpush2.msra.mxu0 %v711
    %1083 = vmatprep.subr.mxu0 %v706
    %1084 = vmatpush2.msra.mxu0 %v705
    %1085 = vmatprep.subr.mxu0 %v700
    %1086 = vmatpush2.msra.mxu0 %v699
    %1087 = vmatprep.subr.mxu0 %v694
    %1088 = vmatpush2.msra.mxu0 %v693
    %1089 = vmatprep.subr.mxu0 %v688
    %1090 = vmatpush2.msra.mxu0 %v687
    %1091 = vmatprep.subr.mxu0 %v682
    %1092 = vmatpush2.msra.mxu0 %v681
    %1093 = vmatprep.subr.mxu0 %v676
    %1094 = vmatpush2.msra.mxu0 %v675
    %1095 = vmatprep.subr.mxu0 %v670
    %1096 = vmatpush2.msra.mxu0 %v669
    %1097 = vmatprep.subr.mxu0 %v664
    %1098 = vmatpush2.msra.mxu0 %v663
    %1099 = vmatprep.subr.mxu0 %v658
    %1100 = vmatpush2.msra.mxu0 %v657
    %1101 = vmatprep.subr.mxu0 %v652
    %1102 = vmatpush2.msra.mxu0 %v651
    %1103 = vmatprep.subr.mxu0 %v646
    %1104 = vmatpush2.msra.mxu0 %v645
    %1105 = vmatprep.subr.mxu0 %v640
    %1106 = vmatpush2.msra.mxu0 %v639
    %1107 = vmatprep.mubr.f32.mxu0 %v1026
    %1108 = vmatmul.mubr.f32.gmra.mxu0 %v1022
    %v1109 = vpop.f32.mrf.mxu0
    %v1110 = vadd.f32 0.0, %v1109
    %v1111 = vpop.f32.mrf.mxu0
    %v1112 = vadd.f32 0.0, %v1111
    %1113 = vdwg.mxu0
    %1114 = vmatprep.subr.mxu0 %v636
    %1115 = vmatpush1.msra.mxu0 %v635
    %1116 = vmatprep.subr.mxu0 %v630
    %1117 = vmatpush1.msra.mxu0 %v629
    %1118 = vmatprep.subr.mxu0 %v624
    %1119 = vmatpush1.msra.mxu0 %v623
    %1120 = vmatprep.subr.mxu0 %v618
    %1121 = vmatpush1.msra.mxu0 %v617
    %1122 = vmatprep.subr.mxu0 %v612
    %1123 = vmatpush1.msra.mxu0 %v611
    %1124 = vmatprep.subr.mxu0 %v606
    %1125 = vmatpush1.msra.mxu0 %v605
    %1126 = vmatprep.subr.mxu0 %v600
    %1127 = vmatpush1.msra.mxu0 %v599
    %1128 = vmatprep.subr.mxu0 %v594
    %1129 = vmatpush1.msra.mxu0 %v593
    %1130 = vmatprep.subr.mxu0 %v588
    %1131 = vmatpush1.msra.mxu0 %v587
    %1132 = vmatprep.subr.mxu0 %v582
    %1133 = vmatpush1.msra.mxu0 %v581
    %1134 = vmatprep.subr.mxu0 %v576
    %1135 = vmatpush1.msra.mxu0 %v575
    %1136 = vmatprep.subr.mxu0 %v570
    %1137 = vmatpush1.msra.mxu0 %v569
    %1138 = vmatprep.subr.mxu0 %v564
    %1139 = vmatpush1.msra.mxu0 %v563
    %1140 = vmatprep.subr.mxu0 %v558
    %1141 = vmatpush1.msra.mxu0 %v557
    %1142 = vmatprep.subr.mxu0 %v552
    %1143 = vmatpush1.msra.mxu0 %v551
    %1144 = vmatprep.subr.mxu0 %v546
    %1145 = vmatpush1.msra.mxu0 %v545
    %1146 = vmatprep.subr.mxu0 %v732
    %1147 = vmatpush2.msra.mxu0 %v731
    %1148 = vmatprep.subr.mxu0 %v726
    %1149 = vmatpush2.msra.mxu0 %v725
    %1150 = vmatprep.subr.mxu0 %v720
    %1151 = vmatpush2.msra.mxu0 %v719
    %1152 = vmatprep.subr.mxu0 %v714
    %1153 = vmatpush2.msra.mxu0 %v713
    %1154 = vmatprep.subr.mxu0 %v708
    %1155 = vmatpush2.msra.mxu0 %v707
    %1156 = vmatprep.subr.mxu0 %v702
    %1157 = vmatpush2.msra.mxu0 %v701
    %1158 = vmatprep.subr.mxu0 %v696
    %1159 = vmatpush2.msra.mxu0 %v695
    %1160 = vmatprep.subr.mxu0 %v690
    %1161 = vmatpush2.msra.mxu0 %v689
    %1162 = vmatprep.subr.mxu0 %v684
    %1163 = vmatpush2.msra.mxu0 %v683
    %1164 = vmatprep.subr.mxu0 %v678
    %1165 = vmatpush2.msra.mxu0 %v677
    %1166 = vmatprep.subr.mxu0 %v672
    %1167 = vmatpush2.msra.mxu0 %v671
    %1168 = vmatprep.subr.mxu0 %v666
    %1169 = vmatpush2.msra.mxu0 %v665
    %1170 = vmatprep.subr.mxu0 %v660
    %1171 = vmatpush2.msra.mxu0 %v659
    %1172 = vmatprep.subr.mxu0 %v654
    %1173 = vmatpush2.msra.mxu0 %v653
    %1174 = vmatprep.subr.mxu0 %v648
    %1175 = vmatpush2.msra.mxu0 %v647
    %1176 = vmatprep.subr.mxu0 %v642
    %1177 = vmatpush2.msra.mxu0 %v641
    %1178 = vmatprep.mubr.f32.mxu0 %v1026
    %1179 = vmatmul.mubr.f32.gmra.mxu0 %v1022
    %v1180 = vpop.f32.mrf.mxu0
    %v1181 = vadd.f32 0.0, %v1180
    %v1182 = vpop.f32.mrf.mxu0
    %v1183 = vadd.f32 0.0, %v1182
    %1184 = vdwg.mxu0
    %1185 = vmatprep.subr.mxu0 %v638
    %1186 = vmatpush1.msra.mxu0 %v637
    %1187 = vmatprep.subr.mxu0 %v632
    %1188 = vmatpush1.msra.mxu0 %v631
    %1189 = vmatprep.subr.mxu0 %v626
    %1190 = vmatpush1.msra.mxu0 %v625
    %1191 = vmatprep.subr.mxu0 %v620
    %1192 = vmatpush1.msra.mxu0 %v619
    %1193 = vmatprep.subr.mxu0 %v614
    %1194 = vmatpush1.msra.mxu0 %v613
    %1195 = vmatprep.subr.mxu0 %v608
    %1196 = vmatpush1.msra.mxu0 %v607
    %1197 = vmatprep.subr.mxu0 %v602
    %1198 = vmatpush1.msra.mxu0 %v601
    %1199 = vmatprep.subr.mxu0 %v596
    %1200 = vmatpush1.msra.mxu0 %v595
    %1201 = vmatprep.subr.mxu0 %v590
    %1202 = vmatpush1.msra.mxu0 %v589
    %1203 = vmatprep.subr.mxu0 %v584
    %1204 = vmatpush1.msra.mxu0 %v583
    %1205 = vmatprep.subr.mxu0 %v578
    %1206 = vmatpush1.msra.mxu0 %v577
    %1207 = vmatprep.subr.mxu0 %v572
    %1208 = vmatpush1.msra.mxu0 %v571
    %1209 = vmatprep.subr.mxu0 %v566
    %1210 = vmatpush1.msra.mxu0 %v565
    %1211 = vmatprep.subr.mxu0 %v560
    %1212 = vmatpush1.msra.mxu0 %v559
    %1213 = vmatprep.subr.mxu0 %v554
    %1214 = vmatpush1.msra.mxu0 %v553
    %1215 = vmatprep.subr.mxu0 %v548
    %1216 = vmatpush1.msra.mxu0 %v547
    %1217 = vmatprep.subr.mxu0 %v734
    %1218 = vmatpush2.msra.mxu0 %v733
    %1219 = vmatprep.subr.mxu0 %v728
    %1220 = vmatpush2.msra.mxu0 %v727
    %1221 = vmatprep.subr.mxu0 %v722
    %1222 = vmatpush2.msra.mxu0 %v721
    %1223 = vmatprep.subr.mxu0 %v716
    %1224 = vmatpush2.msra.mxu0 %v715
    %1225 = vmatprep.subr.mxu0 %v710
    %1226 = vmatpush2.msra.mxu0 %v709
    %1227 = vmatprep.subr.mxu0 %v704
    %1228 = vmatpush2.msra.mxu0 %v703
    %1229 = vmatprep.subr.mxu0 %v698
    %1230 = vmatpush2.msra.mxu0 %v697
    %1231 = vmatprep.subr.mxu0 %v692
    %1232 = vmatpush2.msra.mxu0 %v691
    %1233 = vmatprep.subr.mxu0 %v686
    %1234 = vmatpush2.msra.mxu0 %v685
    %1235 = vmatprep.subr.mxu0 %v680
    %1236 = vmatpush2.msra.mxu0 %v679
    %1237 = vmatprep.subr.mxu0 %v674
    %1238 = vmatpush2.msra.mxu0 %v673
    %1239 = vmatprep.subr.mxu0 %v668
    %1240 = vmatpush2.msra.mxu0 %v667
    %1241 = vmatprep.subr.mxu0 %v662
    %1242 = vmatpush2.msra.mxu0 %v661
    %1243 = vmatprep.subr.mxu0 %v656
    %1244 = vmatpush2.msra.mxu0 %v655
    %1245 = vmatprep.subr.mxu0 %v650
    %1246 = vmatpush2.msra.mxu0 %v649
    %1247 = vmatprep.subr.mxu0 %v644
    %1248 = vmatpush2.msra.mxu0 %v643
    %1249 = vmatprep.mubr.f32.mxu0 %v1026
    %1250 = vmatmul.mubr.f32.gmra.mxu0 %v1022
    %v1251 = vpop.f32.mrf.mxu0
    %v1252 = vadd.f32 0.0, %v1251
    %v1253 = vpop.f32.mrf.mxu0
    %v1254 = vadd.f32 0.0, %v1253
    %1255 = vdwg.mxu0
    %v1256 = vadd.f32 %v1030, %v1110
    %v1257 = vxor.u32 %v1256, 2147483648
    %v1258 = vmul.f32 %v1257, 1.442695
    %v1259 = vpow.pop %v1258
    %v1260 = vadd.f32 %v1259, 1.0
    %v1261 = vrcp.pop %v1260
    %v1262 = vmul.f32 1.0, %v1261
    %v1263 = vadd.f32 %v1031, %v1112
    %v1264 = vxor.u32 %v1263, 2147483648
    %v1265 = vmul.f32 %v1264, 1.442695
    %v1266 = vpow.pop %v1265
    %v1267 = vadd.f32 %v1266, 1.0
    %v1268 = vrcp.pop %v1267
    %v1269 = vmul.f32 1.0, %v1268
    %v1270 = vadd.f32 %v1181, %v981
    %v1271 = vmul.f32 %v1262, %v1270
    %v1272 = vadd.f32 %v1032, %v1271
    %v1273 = vtanh.pop %v1272
    %v1274 = vsub.f32 1.0, %v1269
    %v1275 = vmul.f32 %v1274, %v1273
    %v1276 = vmul.f32 %v1269, %v1022
    %v1277 = vadd.f32 %v1275, %v1276
    %v1278 = vadd.f32 %v1036, %v1183
    %v1279 = vxor.u32 %v1278, 2147483648
    %v1280 = vmul.f32 %v1279, 1.442695
    %v1281 = vpow.pop %v1280
    %v1282 = vadd.f32 %v1281, 1.0
    %v1283 = vrcp.pop %v1282
    %v1284 = vmul.f32 1.0, %v1283
    %v1285 = vadd.f32 %v1037, %v1252
    %v1286 = vxor.u32 %v1285, 2147483648
    %v1287 = vmul.f32 %v1286, 1.442695
    %v1288 = vpow.pop %v1287
    %v1289 = vadd.f32 %v1288, 1.0
    %v1290 = vrcp.pop %v1289
    %v1291 = vmul.f32 1.0, %v1290
    %v1292 = vadd.f32 %v1254, %v1009
    %v1293 = vmul.f32 %v1284, %v1292
    %v1294 = vadd.f32 %v1038, %v1293
    %v1295 = vtanh.pop %v1294
    %v1296 = vsub.f32 1.0, %v1291
    %v1297 = vmul.f32 %v1296, %v1295
    %v1298 = vmul.f32 %v1291, %v1026
    %v1299 = vadd.f32 %v1297, %v1298
    %v1300 = vmul.f32 %v1040, %v1277
    %v1301 = vsub.f32 1.0, %v1040
    %v1302 = vmul.f32 %v1301, %v1022
    %v1303 = vadd.f32 %v1300, %v1302
    %v1304 = vmul.f32 %v1042, %v1299
    %v1305 = vsub.f32 1.0, %v1042
    %v1306 = vmul.f32 %v1305, %v1026
    %v1307 = vadd.f32 %v1304, %v1306
    %s1308 = smul.u32 2, 6
    %s1309 = smul.addr %s1308, 8
    %s1310 = scalar_lea.vmem [#allocation2], %s1309
    %v1311 = vld [vmem:[%s1310] sm:$0xff]
    %v1312 = vld [vmem:[%s1310 + $0x8] sm:$0xff]
    %v1313 = vld [vmem:[%s1310 + $0x10] sm:$0xff]
    %s1314 = smul.u32 5, 6
    %s1315 = smul.addr %s1314, 8
    %s1316 = scalar_lea.vmem [#allocation2], %s1315
    %v1317 = vld [vmem:[%s1316 + $0x18] sm:$0xff]
    %v1318 = vld [vmem:[%s1316 + $0x20] sm:$0xff]
    %v1319 = vld [vmem:[%s1316 + $0x28] sm:$0xff]
    %s1320 = scalar_lea.vmem %s1, 16
    %v1321 = vld [vmem:[%s1320] sm:$0xff]
    %s1322 = scalar_lea.vmem %s1, 40
    %v1323 = vld [vmem:[%s1322] sm:$0xff]
    %1324 = vmatprep.subr.mxu0 %v634
    %1325 = vmatpush1.msra.mxu0 %v633
    %1326 = vmatprep.subr.mxu0 %v628
    %1327 = vmatpush1.msra.mxu0 %v627
    %1328 = vmatprep.subr.mxu0 %v622
    %1329 = vmatpush1.msra.mxu0 %v621
    %1330 = vmatprep.subr.mxu0 %v616
    %1331 = vmatpush1.msra.mxu0 %v615
    %1332 = vmatprep.subr.mxu0 %v610
    %1333 = vmatpush1.msra.mxu0 %v609
    %1334 = vmatprep.subr.mxu0 %v604
    %1335 = vmatpush1.msra.mxu0 %v603
    %1336 = vmatprep.subr.mxu0 %v598
    %1337 = vmatpush1.msra.mxu0 %v597
    %1338 = vmatprep.subr.mxu0 %v592
    %1339 = vmatpush1.msra.mxu0 %v591
    %1340 = vmatprep.subr.mxu0 %v586
    %1341 = vmatpush1.msra.mxu0 %v585
    %1342 = vmatprep.subr.mxu0 %v580
    %1343 = vmatpush1.msra.mxu0 %v579
    %1344 = vmatprep.subr.mxu0 %v574
    %1345 = vmatpush1.msra.mxu0 %v573
    %1346 = vmatprep.subr.mxu0 %v568
    %1347 = vmatpush1.msra.mxu0 %v567
    %1348 = vmatprep.subr.mxu0 %v562
    %1349 = vmatpush1.msra.mxu0 %v561
    %1350 = vmatprep.subr.mxu0 %v556
    %1351 = vmatpush1.msra.mxu0 %v555
    %1352 = vmatprep.subr.mxu0 %v550
    %1353 = vmatpush1.msra.mxu0 %v549
    %1354 = vmatprep.subr.mxu0 %v544
    %1355 = vmatpush1.msra.mxu0 %v543
    %1356 = vmatprep.subr.mxu0 %v730
    %1357 = vmatpush2.msra.mxu0 %v729
    %1358 = vmatprep.subr.mxu0 %v724
    %1359 = vmatpush2.msra.mxu0 %v723
    %1360 = vmatprep.subr.mxu0 %v718
    %1361 = vmatpush2.msra.mxu0 %v717
    %1362 = vmatprep.subr.mxu0 %v712
    %1363 = vmatpush2.msra.mxu0 %v711
    %1364 = vmatprep.subr.mxu0 %v706
    %1365 = vmatpush2.msra.mxu0 %v705
    %1366 = vmatprep.subr.mxu0 %v700
    %1367 = vmatpush2.msra.mxu0 %v699
    %1368 = vmatprep.subr.mxu0 %v694
    %1369 = vmatpush2.msra.mxu0 %v693
    %1370 = vmatprep.subr.mxu0 %v688
    %1371 = vmatpush2.msra.mxu0 %v687
    %1372 = vmatprep.subr.mxu0 %v682
    %1373 = vmatpush2.msra.mxu0 %v681
    %1374 = vmatprep.subr.mxu0 %v676
    %1375 = vmatpush2.msra.mxu0 %v675
    %1376 = vmatprep.subr.mxu0 %v670
    %1377 = vmatpush2.msra.mxu0 %v669
    %1378 = vmatprep.subr.mxu0 %v664
    %1379 = vmatpush2.msra.mxu0 %v663
    %1380 = vmatprep.subr.mxu0 %v658
    %1381 = vmatpush2.msra.mxu0 %v657
    %1382 = vmatprep.subr.mxu0 %v652
    %1383 = vmatpush2.msra.mxu0 %v651
    %1384 = vmatprep.subr.mxu0 %v646
    %1385 = vmatpush2.msra.mxu0 %v645
    %1386 = vmatprep.subr.mxu0 %v640
    %1387 = vmatpush2.msra.mxu0 %v639
    %1388 = vmatprep.mubr.f32.mxu0 %v1307
    %1389 = vmatmul.mubr.f32.gmra.mxu0 %v1303
    %v1390 = vpop.f32.mrf.mxu0
    %v1391 = vadd.f32 0.0, %v1390
    %v1392 = vpop.f32.mrf.mxu0
    %v1393 = vadd.f32 0.0, %v1392
    %1394 = vdwg.mxu0
    %1395 = vmatprep.subr.mxu0 %v636
    %1396 = vmatpush1.msra.mxu0 %v635
    %1397 = vmatprep.subr.mxu0 %v630
    %1398 = vmatpush1.msra.mxu0 %v629
    %1399 = vmatprep.subr.mxu0 %v624
    %1400 = vmatpush1.msra.mxu0 %v623
    %1401 = vmatprep.subr.mxu0 %v618
    %1402 = vmatpush1.msra.mxu0 %v617
    %1403 = vmatprep.subr.mxu0 %v612
    %1404 = vmatpush1.msra.mxu0 %v611
    %1405 = vmatprep.subr.mxu0 %v606
    %1406 = vmatpush1.msra.mxu0 %v605
    %1407 = vmatprep.subr.mxu0 %v600
    %1408 = vmatpush1.msra.mxu0 %v599
    %1409 = vmatprep.subr.mxu0 %v594
    %1410 = vmatpush1.msra.mxu0 %v593
    %1411 = vmatprep.subr.mxu0 %v588
    %1412 = vmatpush1.msra.mxu0 %v587
    %1413 = vmatprep.subr.mxu0 %v582
    %1414 = vmatpush1.msra.mxu0 %v581
    %1415 = vmatprep.subr.mxu0 %v576
    %1416 = vmatpush1.msra.mxu0 %v575
    %1417 = vmatprep.subr.mxu0 %v570
    %1418 = vmatpush1.msra.mxu0 %v569
    %1419 = vmatprep.subr.mxu0 %v564
    %1420 = vmatpush1.msra.mxu0 %v563
    %1421 = vmatprep.subr.mxu0 %v558
    %1422 = vmatpush1.msra.mxu0 %v557
    %1423 = vmatprep.subr.mxu0 %v552
    %1424 = vmatpush1.msra.mxu0 %v551
    %1425 = vmatprep.subr.mxu0 %v546
    %1426 = vmatpush1.msra.mxu0 %v545
    %1427 = vmatprep.subr.mxu0 %v732
    %1428 = vmatpush2.msra.mxu0 %v731
    %1429 = vmatprep.subr.mxu0 %v726
    %1430 = vmatpush2.msra.mxu0 %v725
    %1431 = vmatprep.subr.mxu0 %v720
    %1432 = vmatpush2.msra.mxu0 %v719
    %1433 = vmatprep.subr.mxu0 %v714
    %1434 = vmatpush2.msra.mxu0 %v713
    %1435 = vmatprep.subr.mxu0 %v708
    %1436 = vmatpush2.msra.mxu0 %v707
    %1437 = vmatprep.subr.mxu0 %v702
    %1438 = vmatpush2.msra.mxu0 %v701
    %1439 = vmatprep.subr.mxu0 %v696
    %1440 = vmatpush2.msra.mxu0 %v695
    %1441 = vmatprep.subr.mxu0 %v690
    %1442 = vmatpush2.msra.mxu0 %v689
    %1443 = vmatprep.subr.mxu0 %v684
    %1444 = vmatpush2.msra.mxu0 %v683
    %1445 = vmatprep.subr.mxu0 %v678
    %1446 = vmatpush2.msra.mxu0 %v677
    %1447 = vmatprep.subr.mxu0 %v672
    %1448 = vmatpush2.msra.mxu0 %v671
    %1449 = vmatprep.subr.mxu0 %v666
    %1450 = vmatpush2.msra.mxu0 %v665
    %1451 = vmatprep.subr.mxu0 %v660
    %1452 = vmatpush2.msra.mxu0 %v659
    %1453 = vmatprep.subr.mxu0 %v654
    %1454 = vmatpush2.msra.mxu0 %v653
    %1455 = vmatprep.subr.mxu0 %v648
    %1456 = vmatpush2.msra.mxu0 %v647
    %1457 = vmatprep.subr.mxu0 %v642
    %1458 = vmatpush2.msra.mxu0 %v641
    %1459 = vmatprep.mubr.f32.mxu0 %v1307
    %1460 = vmatmul.mubr.f32.gmra.mxu0 %v1303
    %v1461 = vpop.f32.mrf.mxu0
    %v1462 = vadd.f32 0.0, %v1461
    %v1463 = vpop.f32.mrf.mxu0
    %v1464 = vadd.f32 0.0, %v1463
    %1465 = vdwg.mxu0
    %1466 = vmatprep.subr.mxu0 %v638
    %1467 = vmatpush1.msra.mxu0 %v637
    %1468 = vmatprep.subr.mxu0 %v632
    %1469 = vmatpush1.msra.mxu0 %v631
    %1470 = vmatprep.subr.mxu0 %v626
    %1471 = vmatpush1.msra.mxu0 %v625
    %1472 = vmatprep.subr.mxu0 %v620
    %1473 = vmatpush1.msra.mxu0 %v619
    %1474 = vmatprep.subr.mxu0 %v614
    %1475 = vmatpush1.msra.mxu0 %v613
    %1476 = vmatprep.subr.mxu0 %v608
    %1477 = vmatpush1.msra.mxu0 %v607
    %1478 = vmatprep.subr.mxu0 %v602
    %1479 = vmatpush1.msra.mxu0 %v601
    %1480 = vmatprep.subr.mxu0 %v596
    %1481 = vmatpush1.msra.mxu0 %v595
    %1482 = vmatprep.subr.mxu0 %v590
    %1483 = vmatpush1.msra.mxu0 %v589
    %1484 = vmatprep.subr.mxu0 %v584
    %1485 = vmatpush1.msra.mxu0 %v583
    %1486 = vmatprep.subr.mxu0 %v578
    %1487 = vmatpush1.msra.mxu0 %v577
    %1488 = vmatprep.subr.mxu0 %v572
    %1489 = vmatpush1.msra.mxu0 %v571
    %1490 = vmatprep.subr.mxu0 %v566
    %1491 = vmatpush1.msra.mxu0 %v565
    %1492 = vmatprep.subr.mxu0 %v560
    %1493 = vmatpush1.msra.mxu0 %v559
    %1494 = vmatprep.subr.mxu0 %v554
    %1495 = vmatpush1.msra.mxu0 %v553
    %1496 = vmatprep.subr.mxu0 %v548
    %1497 = vmatpush1.msra.mxu0 %v547
    %1498 = vmatprep.subr.mxu0 %v734
    %1499 = vmatpush2.msra.mxu0 %v733
    %1500 = vmatprep.subr.mxu0 %v728
    %1501 = vmatpush2.msra.mxu0 %v727
    %1502 = vmatprep.subr.mxu0 %v722
    %1503 = vmatpush2.msra.mxu0 %v721
    %1504 = vmatprep.subr.mxu0 %v716
    %1505 = vmatpush2.msra.mxu0 %v715
    %1506 = vmatprep.subr.mxu0 %v710
    %1507 = vmatpush2.msra.mxu0 %v709
    %1508 = vmatprep.subr.mxu0 %v704
    %1509 = vmatpush2.msra.mxu0 %v703
    %1510 = vmatprep.subr.mxu0 %v698
    %1511 = vmatpush2.msra.mxu0 %v697
    %1512 = vmatprep.subr.mxu0 %v692
    %1513 = vmatpush2.msra.mxu0 %v691
    %1514 = vmatprep.subr.mxu0 %v686
    %1515 = vmatpush2.msra.mxu0 %v685
    %1516 = vmatprep.subr.mxu0 %v680
    %1517 = vmatpush2.msra.mxu0 %v679
    %1518 = vmatprep.subr.mxu0 %v674
    %1519 = vmatpush2.msra.mxu0 %v673
    %1520 = vmatprep.subr.mxu0 %v668
    %1521 = vmatpush2.msra.mxu0 %v667
    %1522 = vmatprep.subr.mxu0 %v662
    %1523 = vmatpush2.msra.mxu0 %v661
    %1524 = vmatprep.subr.mxu0 %v656
    %1525 = vmatpush2.msra.mxu0 %v655
    %1526 = vmatprep.subr.mxu0 %v650
    %1527 = vmatpush2.msra.mxu0 %v649
    %1528 = vmatprep.subr.mxu0 %v644
    %1529 = vmatpush2.msra.mxu0 %v643
    %1530 = vmatprep.mubr.f32.mxu0 %v1307
    %1531 = vmatmul.mubr.f32.gmra.mxu0 %v1303
    %v1532 = vpop.f32.mrf.mxu0
    %v1533 = vadd.f32 0.0, %v1532
    %v1534 = vpop.f32.mrf.mxu0
    %v1535 = vadd.f32 0.0, %v1534
    %1536 = vdwg.mxu0
    %v1537 = vadd.f32 %v1311, %v1391
    %v1538 = vxor.u32 %v1537, 2147483648
    %v1539 = vmul.f32 %v1538, 1.442695
    %v1540 = vpow.pop %v1539
    %v1541 = vadd.f32 %v1540, 1.0
    %v1542 = vrcp.pop %v1541
    %v1543 = vmul.f32 1.0, %v1542
    %v1544 = vadd.f32 %v1312, %v1393
    %v1545 = vxor.u32 %v1544, 2147483648
    %v1546 = vmul.f32 %v1545, 1.442695
    %v1547 = vpow.pop %v1546
    %v1548 = vadd.f32 %v1547, 1.0
    %v1549 = vrcp.pop %v1548
    %v1550 = vmul.f32 1.0, %v1549
    %v1551 = vadd.f32 %v1462, %v981
    %v1552 = vmul.f32 %v1543, %v1551
    %v1553 = vadd.f32 %v1313, %v1552
    %v1554 = vtanh.pop %v1553
    %v1555 = vsub.f32 1.0, %v1550
    %v1556 = vmul.f32 %v1555, %v1554
    %v1557 = vmul.f32 %v1550, %v1303
    %v1558 = vadd.f32 %v1556, %v1557
    %v1559 = vadd.f32 %v1317, %v1464
    %v1560 = vxor.u32 %v1559, 2147483648
    %v1561 = vmul.f32 %v1560, 1.442695
    %v1562 = vpow.pop %v1561
    %v1563 = vadd.f32 %v1562, 1.0
    %v1564 = vrcp.pop %v1563
    %v1565 = vmul.f32 1.0, %v1564
    %v1566 = vadd.f32 %v1318, %v1533
    %v1567 = vxor.u32 %v1566, 2147483648
    %v1568 = vmul.f32 %v1567, 1.442695
    %v1569 = vpow.pop %v1568
    %v1570 = vadd.f32 %v1569, 1.0
    %v1571 = vrcp.pop %v1570
    %v1572 = vmul.f32 1.0, %v1571
    %v1573 = vadd.f32 %v1535, %v1009
    %v1574 = vmul.f32 %v1565, %v1573
    %v1575 = vadd.f32 %v1319, %v1574
    %v1576 = vtanh.pop %v1575
    %v1577 = vsub.f32 1.0, %v1572
    %v1578 = vmul.f32 %v1577, %v1576
    %v1579 = vmul.f32 %v1572, %v1307
    %v1580 = vadd.f32 %v1578, %v1579
    %v1581 = vmul.f32 %v1321, %v1558
    %v1582 = vsub.f32 1.0, %v1321
    %v1583 = vmul.f32 %v1582, %v1303
    %v1584 = vadd.f32 %v1581, %v1583
    %v1585 = vmul.f32 %v1323, %v1580
    %v1586 = vsub.f32 1.0, %v1323
    %v1587 = vmul.f32 %v1586, %v1307
    %v1588 = vadd.f32 %v1585, %v1587
    %s1589 = smul.u32 3, 6
    %s1590 = smul.addr %s1589, 8
    %s1591 = scalar_lea.vmem [#allocation2], %s1590
    %v1592 = vld [vmem:[%s1591] sm:$0xff]
    %v1593 = vld [vmem:[%s1591 + $0x8] sm:$0xff]
    %v1594 = vld [vmem:[%s1591 + $0x10] sm:$0xff]
    %s1595 = smul.u32 4, 6
    %s1596 = smul.addr %s1595, 8
    %s1597 = scalar_lea.vmem [#allocation2], %s1596
    %v1598 = vld [vmem:[%s1597 + $0x18] sm:$0xff]
    %v1599 = vld [vmem:[%s1597 + $0x20] sm:$0xff]
    %v1600 = vld [vmem:[%s1597 + $0x28] sm:$0xff]
    %s1601 = scalar_lea.vmem %s1, 24
    %v1602 = vld [vmem:[%s1601] sm:$0xff]
    %s1603 = scalar_lea.vmem %s1, 32
    %v1604 = vld [vmem:[%s1603] sm:$0xff]
    %1605 = vmatprep.subr.mxu0 %v634
    %1606 = vmatpush1.msra.mxu0 %v633
    %1607 = vmatprep.subr.mxu0 %v628
    %1608 = vmatpush1.msra.mxu0 %v627
    %1609 = vmatprep.subr.mxu0 %v622
    %1610 = vmatpush1.msra.mxu0 %v621
    %1611 = vmatprep.subr.mxu0 %v616
    %1612 = vmatpush1.msra.mxu0 %v615
    %1613 = vmatprep.subr.mxu0 %v610
    %1614 = vmatpush1.msra.mxu0 %v609
    %1615 = vmatprep.subr.mxu0 %v604
    %1616 = vmatpush1.msra.mxu0 %v603
    %1617 = vmatprep.subr.mxu0 %v598
    %1618 = vmatpush1.msra.mxu0 %v597
    %1619 = vmatprep.subr.mxu0 %v592
    %1620 = vmatpush1.msra.mxu0 %v591
    %1621 = vmatprep.subr.mxu0 %v586
    %1622 = vmatpush1.msra.mxu0 %v585
    %1623 = vmatprep.subr.mxu0 %v580
    %1624 = vmatpush1.msra.mxu0 %v579
    %1625 = vmatprep.subr.mxu0 %v574
    %1626 = vmatpush1.msra.mxu0 %v573
    %1627 = vmatprep.subr.mxu0 %v568
    %1628 = vmatpush1.msra.mxu0 %v567
    %1629 = vmatprep.subr.mxu0 %v562
    %1630 = vmatpush1.msra.mxu0 %v561
    %1631 = vmatprep.subr.mxu0 %v556
    %1632 = vmatpush1.msra.mxu0 %v555
    %1633 = vmatprep.subr.mxu0 %v550
    %1634 = vmatpush1.msra.mxu0 %v549
    %1635 = vmatprep.subr.mxu0 %v544
    %1636 = vmatpush1.msra.mxu0 %v543
    %1637 = vmatprep.subr.mxu0 %v730
    %1638 = vmatpush2.msra.mxu0 %v729
    %1639 = vmatprep.subr.mxu0 %v724
    %1640 = vmatpush2.msra.mxu0 %v723
    %1641 = vmatprep.subr.mxu0 %v718
    %1642 = vmatpush2.msra.mxu0 %v717
    %1643 = vmatprep.subr.mxu0 %v712
    %1644 = vmatpush2.msra.mxu0 %v711
    %1645 = vmatprep.subr.mxu0 %v706
    %1646 = vmatpush2.msra.mxu0 %v705
    %1647 = vmatprep.subr.mxu0 %v700
    %1648 = vmatpush2.msra.mxu0 %v699
    %1649 = vmatprep.subr.mxu0 %v694
    %1650 = vmatpush2.msra.mxu0 %v693
    %1651 = vmatprep.subr.mxu0 %v688
    %1652 = vmatpush2.msra.mxu0 %v687
    %1653 = vmatprep.subr.mxu0 %v682
    %1654 = vmatpush2.msra.mxu0 %v681
    %1655 = vmatprep.subr.mxu0 %v676
    %1656 = vmatpush2.msra.mxu0 %v675
    %1657 = vmatprep.subr.mxu0 %v670
    %1658 = vmatpush2.msra.mxu0 %v669
    %1659 = vmatprep.subr.mxu0 %v664
    %1660 = vmatpush2.msra.mxu0 %v663
    %1661 = vmatprep.subr.mxu0 %v658
    %1662 = vmatpush2.msra.mxu0 %v657
    %1663 = vmatprep.subr.mxu0 %v652
    %1664 = vmatpush2.msra.mxu0 %v651
    %1665 = vmatprep.subr.mxu0 %v646
    %1666 = vmatpush2.msra.mxu0 %v645
    %1667 = vmatprep.subr.mxu0 %v640
    %1668 = vmatpush2.msra.mxu0 %v639
    %1669 = vmatprep.mubr.f32.mxu0 %v1588
    %1670 = vmatmul.mubr.f32.gmra.mxu0 %v1584
    %v1671 = vpop.f32.mrf.mxu0
    %v1672 = vadd.f32 0.0, %v1671
    %v1673 = vpop.f32.mrf.mxu0
    %v1674 = vadd.f32 0.0, %v1673
    %1675 = vdwg.mxu0
    %1676 = vmatprep.subr.mxu0 %v636
    %1677 = vmatpush1.msra.mxu0 %v635
    %1678 = vmatprep.subr.mxu0 %v630
    %1679 = vmatpush1.msra.mxu0 %v629
    %1680 = vmatprep.subr.mxu0 %v624
    %1681 = vmatpush1.msra.mxu0 %v623
    %1682 = vmatprep.subr.mxu0 %v618
    %1683 = vmatpush1.msra.mxu0 %v617
    %1684 = vmatprep.subr.mxu0 %v612
    %1685 = vmatpush1.msra.mxu0 %v611
    %1686 = vmatprep.subr.mxu0 %v606
    %1687 = vmatpush1.msra.mxu0 %v605
    %1688 = vmatprep.subr.mxu0 %v600
    %1689 = vmatpush1.msra.mxu0 %v599
    %1690 = vmatprep.subr.mxu0 %v594
    %1691 = vmatpush1.msra.mxu0 %v593
    %1692 = vmatprep.subr.mxu0 %v588
    %1693 = vmatpush1.msra.mxu0 %v587
    %1694 = vmatprep.subr.mxu0 %v582
    %1695 = vmatpush1.msra.mxu0 %v581
    %1696 = vmatprep.subr.mxu0 %v576
    %1697 = vmatpush1.msra.mxu0 %v575
    %1698 = vmatprep.subr.mxu0 %v570
    %1699 = vmatpush1.msra.mxu0 %v569
    %1700 = vmatprep.subr.mxu0 %v564
    %1701 = vmatpush1.msra.mxu0 %v563
    %1702 = vmatprep.subr.mxu0 %v558
    %1703 = vmatpush1.msra.mxu0 %v557
    %1704 = vmatprep.subr.mxu0 %v552
    %1705 = vmatpush1.msra.mxu0 %v551
    %1706 = vmatprep.subr.mxu0 %v546
    %1707 = vmatpush1.msra.mxu0 %v545
    %1708 = vmatprep.subr.mxu0 %v732
    %1709 = vmatpush2.msra.mxu0 %v731
    %1710 = vmatprep.subr.mxu0 %v726
    %1711 = vmatpush2.msra.mxu0 %v725
    %1712 = vmatprep.subr.mxu0 %v720
    %1713 = vmatpush2.msra.mxu0 %v719
    %1714 = vmatprep.subr.mxu0 %v714
    %1715 = vmatpush2.msra.mxu0 %v713
    %1716 = vmatprep.subr.mxu0 %v708
    %1717 = vmatpush2.msra.mxu0 %v707
    %1718 = vmatprep.subr.mxu0 %v702
    %1719 = vmatpush2.msra.mxu0 %v701
    %1720 = vmatprep.subr.mxu0 %v696
    %1721 = vmatpush2.msra.mxu0 %v695
    %1722 = vmatprep.subr.mxu0 %v690
    %1723 = vmatpush2.msra.mxu0 %v689
    %1724 = vmatprep.subr.mxu0 %v684
    %1725 = vmatpush2.msra.mxu0 %v683
    %1726 = vmatprep.subr.mxu0 %v678
    %1727 = vmatpush2.msra.mxu0 %v677
    %1728 = vmatprep.subr.mxu0 %v672
    %1729 = vmatpush2.msra.mxu0 %v671
    %1730 = vmatprep.subr.mxu0 %v666
    %1731 = vmatpush2.msra.mxu0 %v665
    %1732 = vmatprep.subr.mxu0 %v660
    %1733 = vmatpush2.msra.mxu0 %v659
    %1734 = vmatprep.subr.mxu0 %v654
    %1735 = vmatpush2.msra.mxu0 %v653
    %1736 = vmatprep.subr.mxu0 %v648
    %1737 = vmatpush2.msra.mxu0 %v647
    %1738 = vmatprep.subr.mxu0 %v642
    %1739 = vmatpush2.msra.mxu0 %v641
    %1740 = vmatprep.mubr.f32.mxu0 %v1588
    %1741 = vmatmul.mubr.f32.gmra.mxu0 %v1584
    %v1742 = vpop.f32.mrf.mxu0
    %v1743 = vadd.f32 0.0, %v1742
    %v1744 = vpop.f32.mrf.mxu0
    %v1745 = vadd.f32 0.0, %v1744
    %1746 = vdwg.mxu0
    %1747 = vmatprep.subr.mxu0 %v638
    %1748 = vmatpush1.msra.mxu0 %v637
    %1749 = vmatprep.subr.mxu0 %v632
    %1750 = vmatpush1.msra.mxu0 %v631
    %1751 = vmatprep.subr.mxu0 %v626
    %1752 = vmatpush1.msra.mxu0 %v625
    %1753 = vmatprep.subr.mxu0 %v620
    %1754 = vmatpush1.msra.mxu0 %v619
    %1755 = vmatprep.subr.mxu0 %v614
    %1756 = vmatpush1.msra.mxu0 %v613
    %1757 = vmatprep.subr.mxu0 %v608
    %1758 = vmatpush1.msra.mxu0 %v607
    %1759 = vmatprep.subr.mxu0 %v602
    %1760 = vmatpush1.msra.mxu0 %v601
    %1761 = vmatprep.subr.mxu0 %v596
    %1762 = vmatpush1.msra.mxu0 %v595
    %1763 = vmatprep.subr.mxu0 %v590
    %1764 = vmatpush1.msra.mxu0 %v589
    %1765 = vmatprep.subr.mxu0 %v584
    %1766 = vmatpush1.msra.mxu0 %v583
    %1767 = vmatprep.subr.mxu0 %v578
    %1768 = vmatpush1.msra.mxu0 %v577
    %1769 = vmatprep.subr.mxu0 %v572
    %1770 = vmatpush1.msra.mxu0 %v571
    %1771 = vmatprep.subr.mxu0 %v566
    %1772 = vmatpush1.msra.mxu0 %v565
    %1773 = vmatprep.subr.mxu0 %v560
    %1774 = vmatpush1.msra.mxu0 %v559
    %1775 = vmatprep.subr.mxu0 %v554
    %1776 = vmatpush1.msra.mxu0 %v553
    %1777 = vmatprep.subr.mxu0 %v548
    %1778 = vmatpush1.msra.mxu0 %v547
    %1779 = vmatprep.subr.mxu0 %v734
    %1780 = vmatpush2.msra.mxu0 %v733
    %1781 = vmatprep.subr.mxu0 %v728
    %1782 = vmatpush2.msra.mxu0 %v727
    %1783 = vmatprep.subr.mxu0 %v722
    %1784 = vmatpush2.msra.mxu0 %v721
    %1785 = vmatprep.subr.mxu0 %v716
    %1786 = vmatpush2.msra.mxu0 %v715
    %1787 = vmatprep.subr.mxu0 %v710
    %1788 = vmatpush2.msra.mxu0 %v709
    %1789 = vmatprep.subr.mxu0 %v704
    %1790 = vmatpush2.msra.mxu0 %v703
    %1791 = vmatprep.subr.mxu0 %v698
    %1792 = vmatpush2.msra.mxu0 %v697
    %1793 = vmatprep.subr.mxu0 %v692
    %1794 = vmatpush2.msra.mxu0 %v691
    %1795 = vmatprep.subr.mxu0 %v686
    %1796 = vmatpush2.msra.mxu0 %v685
    %1797 = vmatprep.subr.mxu0 %v680
    %1798 = vmatpush2.msra.mxu0 %v679
    %1799 = vmatprep.subr.mxu0 %v674
    %1800 = vmatpush2.msra.mxu0 %v673
    %1801 = vmatprep.subr.mxu0 %v668
    %1802 = vmatpush2.msra.mxu0 %v667
    %1803 = vmatprep.subr.mxu0 %v662
    %1804 = vmatpush2.msra.mxu0 %v661
    %1805 = vmatprep.subr.mxu0 %v656
    %1806 = vmatpush2.msra.mxu0 %v655
    %1807 = vmatprep.subr.mxu0 %v650
    %1808 = vmatpush2.msra.mxu0 %v649
    %1809 = vmatprep.subr.mxu0 %v644
    %1810 = vmatpush2.msra.mxu0 %v643
    %1811 = vmatprep.mubr.f32.mxu0 %v1588
    %1812 = vmatmul.mubr.f32.gmra.mxu0 %v1584
    %v1813 = vpop.f32.mrf.mxu0
    %v1814 = vadd.f32 0.0, %v1813
    %v1815 = vpop.f32.mrf.mxu0
    %v1816 = vadd.f32 0.0, %v1815
    %1817 = vdwg.mxu0
    %v1818 = vadd.f32 %v1592, %v1672
    %v1819 = vxor.u32 %v1818, 2147483648
    %v1820 = vmul.f32 %v1819, 1.442695
    %v1821 = vpow.pop %v1820
    %v1822 = vadd.f32 %v1821, 1.0
    %v1823 = vrcp.pop %v1822
    %v1824 = vmul.f32 1.0, %v1823
    %v1825 = vadd.f32 %v1593, %v1674
    %v1826 = vxor.u32 %v1825, 2147483648
    %v1827 = vmul.f32 %v1826, 1.442695
    %v1828 = vpow.pop %v1827
    %v1829 = vadd.f32 %v1828, 1.0
    %v1830 = vrcp.pop %v1829
    %v1831 = vmul.f32 1.0, %v1830
    %v1832 = vadd.f32 %v1743, %v981
    %v1833 = vmul.f32 %v1824, %v1832
    %v1834 = vadd.f32 %v1594, %v1833
    %v1835 = vtanh.pop %v1834
    %v1836 = vsub.f32 1.0, %v1831
    %v1837 = vmul.f32 %v1836, %v1835
    %v1838 = vmul.f32 %v1831, %v1584
    %v1839 = vadd.f32 %v1837, %v1838
    %v1840 = vadd.f32 %v1598, %v1745
    %v1841 = vxor.u32 %v1840, 2147483648
    %v1842 = vmul.f32 %v1841, 1.442695
    %v1843 = vpow.pop %v1842
    %v1844 = vadd.f32 %v1843, 1.0
    %v1845 = vrcp.pop %v1844
    %v1846 = vmul.f32 1.0, %v1845
    %v1847 = vadd.f32 %v1599, %v1814
    %v1848 = vxor.u32 %v1847, 2147483648
    %v1849 = vmul.f32 %v1848, 1.442695
    %v1850 = vpow.pop %v1849
    %v1851 = vadd.f32 %v1850, 1.0
    %v1852 = vrcp.pop %v1851
    %v1853 = vmul.f32 1.0, %v1852
    %v1854 = vadd.f32 %v1816, %v1009
    %v1855 = vmul.f32 %v1846, %v1854
    %v1856 = vadd.f32 %v1600, %v1855
    %v1857 = vtanh.pop %v1856
    %v1858 = vsub.f32 1.0, %v1853
    %v1859 = vmul.f32 %v1858, %v1857
    %v1860 = vmul.f32 %v1853, %v1588
    %v1861 = vadd.f32 %v1859, %v1860
    %v1862 = vmul.f32 %v1602, %v1839
    %v1863 = vsub.f32 1.0, %v1602
    %v1864 = vmul.f32 %v1863, %v1584
    %v1865 = vadd.f32 %v1862, %v1864
    %v1866 = vmul.f32 %v1604, %v1861
    %v1867 = vsub.f32 1.0, %v1604
    %v1868 = vmul.f32 %v1867, %v1588
    %v1869 = vadd.f32 %v1866, %v1868
    %v1870 = vld [vmem:[%s1597] sm:$0xff]
    %v1871 = vld [vmem:[%s1597 + $0x8] sm:$0xff]
    %v1872 = vld [vmem:[%s1597 + $0x10] sm:$0xff]
    %v1873 = vld [vmem:[%s1591 + $0x18] sm:$0xff]
    %v1874 = vld [vmem:[%s1591 + $0x20] sm:$0xff]
    %v1875 = vld [vmem:[%s1591 + $0x28] sm:$0xff]
    %1876 = vmatprep.subr.mxu0 %v634
    %1877 = vmatpush1.msra.mxu0 %v633
    %1878 = vmatprep.subr.mxu0 %v628
    %1879 = vmatpush1.msra.mxu0 %v627
    %1880 = vmatprep.subr.mxu0 %v622
    %1881 = vmatpush1.msra.mxu0 %v621
    %1882 = vmatprep.subr.mxu0 %v616
    %1883 = vmatpush1.msra.mxu0 %v615
    %1884 = vmatprep.subr.mxu0 %v610
    %1885 = vmatpush1.msra.mxu0 %v609
    %1886 = vmatprep.subr.mxu0 %v604
    %1887 = vmatpush1.msra.mxu0 %v603
    %1888 = vmatprep.subr.mxu0 %v598
    %1889 = vmatpush1.msra.mxu0 %v597
    %1890 = vmatprep.subr.mxu0 %v592
    %1891 = vmatpush1.msra.mxu0 %v591
    %1892 = vmatprep.subr.mxu0 %v586
    %1893 = vmatpush1.msra.mxu0 %v585
    %1894 = vmatprep.subr.mxu0 %v580
    %1895 = vmatpush1.msra.mxu0 %v579
    %1896 = vmatprep.subr.mxu0 %v574
    %1897 = vmatpush1.msra.mxu0 %v573
    %1898 = vmatprep.subr.mxu0 %v568
    %1899 = vmatpush1.msra.mxu0 %v567
    %1900 = vmatprep.subr.mxu0 %v562
    %1901 = vmatpush1.msra.mxu0 %v561
    %1902 = vmatprep.subr.mxu0 %v556
    %1903 = vmatpush1.msra.mxu0 %v555
    %1904 = vmatprep.subr.mxu0 %v550
    %1905 = vmatpush1.msra.mxu0 %v549
    %1906 = vmatprep.subr.mxu0 %v544
    %1907 = vmatpush1.msra.mxu0 %v543
    %1908 = vmatprep.subr.mxu0 %v730
    %1909 = vmatpush2.msra.mxu0 %v729
    %1910 = vmatprep.subr.mxu0 %v724
    %1911 = vmatpush2.msra.mxu0 %v723
    %1912 = vmatprep.subr.mxu0 %v718
    %1913 = vmatpush2.msra.mxu0 %v717
    %1914 = vmatprep.subr.mxu0 %v712
    %1915 = vmatpush2.msra.mxu0 %v711
    %1916 = vmatprep.subr.mxu0 %v706
    %1917 = vmatpush2.msra.mxu0 %v705
    %1918 = vmatprep.subr.mxu0 %v700
    %1919 = vmatpush2.msra.mxu0 %v699
    %1920 = vmatprep.subr.mxu0 %v694
    %1921 = vmatpush2.msra.mxu0 %v693
    %1922 = vmatprep.subr.mxu0 %v688
    %1923 = vmatpush2.msra.mxu0 %v687
    %1924 = vmatprep.subr.mxu0 %v682
    %1925 = vmatpush2.msra.mxu0 %v681
    %1926 = vmatprep.subr.mxu0 %v676
    %1927 = vmatpush2.msra.mxu0 %v675
    %1928 = vmatprep.subr.mxu0 %v670
    %1929 = vmatpush2.msra.mxu0 %v669
    %1930 = vmatprep.subr.mxu0 %v664
    %1931 = vmatpush2.msra.mxu0 %v663
    %1932 = vmatprep.subr.mxu0 %v658
    %1933 = vmatpush2.msra.mxu0 %v657
    %1934 = vmatprep.subr.mxu0 %v652
    %1935 = vmatpush2.msra.mxu0 %v651
    %1936 = vmatprep.subr.mxu0 %v646
    %1937 = vmatpush2.msra.mxu0 %v645
    %1938 = vmatprep.subr.mxu0 %v640
    %1939 = vmatpush2.msra.mxu0 %v639
    %1940 = vmatprep.mubr.f32.mxu0 %v1869
    %1941 = vmatmul.mubr.f32.gmra.mxu0 %v1865
    %v1942 = vpop.f32.mrf.mxu0
    %v1943 = vadd.f32 0.0, %v1942
    %v1944 = vpop.f32.mrf.mxu0
    %v1945 = vadd.f32 0.0, %v1944
    %1946 = vdwg.mxu0
    %1947 = vmatprep.subr.mxu0 %v636
    %1948 = vmatpush1.msra.mxu0 %v635
    %1949 = vmatprep.subr.mxu0 %v630
    %1950 = vmatpush1.msra.mxu0 %v629
    %1951 = vmatprep.subr.mxu0 %v624
    %1952 = vmatpush1.msra.mxu0 %v623
    %1953 = vmatprep.subr.mxu0 %v618
    %1954 = vmatpush1.msra.mxu0 %v617
    %1955 = vmatprep.subr.mxu0 %v612
    %1956 = vmatpush1.msra.mxu0 %v611
    %1957 = vmatprep.subr.mxu0 %v606
    %1958 = vmatpush1.msra.mxu0 %v605
    %1959 = vmatprep.subr.mxu0 %v600
    %1960 = vmatpush1.msra.mxu0 %v599
    %1961 = vmatprep.subr.mxu0 %v594
    %1962 = vmatpush1.msra.mxu0 %v593
    %1963 = vmatprep.subr.mxu0 %v588
    %1964 = vmatpush1.msra.mxu0 %v587
    %1965 = vmatprep.subr.mxu0 %v582
    %1966 = vmatpush1.msra.mxu0 %v581
    %1967 = vmatprep.subr.mxu0 %v576
    %1968 = vmatpush1.msra.mxu0 %v575
    %1969 = vmatprep.subr.mxu0 %v570
    %1970 = vmatpush1.msra.mxu0 %v569
    %1971 = vmatprep.subr.mxu0 %v564
    %1972 = vmatpush1.msra.mxu0 %v563
    %1973 = vmatprep.subr.mxu0 %v558
    %1974 = vmatpush1.msra.mxu0 %v557
    %1975 = vmatprep.subr.mxu0 %v552
    %1976 = vmatpush1.msra.mxu0 %v551
    %1977 = vmatprep.subr.mxu0 %v546
    %1978 = vmatpush1.msra.mxu0 %v545
    %1979 = vmatprep.subr.mxu0 %v732
    %1980 = vmatpush2.msra.mxu0 %v731
    %1981 = vmatprep.subr.mxu0 %v726
    %1982 = vmatpush2.msra.mxu0 %v725
    %1983 = vmatprep.subr.mxu0 %v720
    %1984 = vmatpush2.msra.mxu0 %v719
    %1985 = vmatprep.subr.mxu0 %v714
    %1986 = vmatpush2.msra.mxu0 %v713
    %1987 = vmatprep.subr.mxu0 %v708
    %1988 = vmatpush2.msra.mxu0 %v707
    %1989 = vmatprep.subr.mxu0 %v702
    %1990 = vmatpush2.msra.mxu0 %v701
    %1991 = vmatprep.subr.mxu0 %v696
    %1992 = vmatpush2.msra.mxu0 %v695
    %1993 = vmatprep.subr.mxu0 %v690
    %1994 = vmatpush2.msra.mxu0 %v689
    %1995 = vmatprep.subr.mxu0 %v684
    %1996 = vmatpush2.msra.mxu0 %v683
    %1997 = vmatprep.subr.mxu0 %v678
    %1998 = vmatpush2.msra.mxu0 %v677
    %1999 = vmatprep.subr.mxu0 %v672
    %2000 = vmatpush2.msra.mxu0 %v671
    %2001 = vmatprep.subr.mxu0 %v666
    %2002 = vmatpush2.msra.mxu0 %v665
    %2003 = vmatprep.subr.mxu0 %v660
    %2004 = vmatpush2.msra.mxu0 %v659
    %2005 = vmatprep.subr.mxu0 %v654
    %2006 = vmatpush2.msra.mxu0 %v653
    %2007 = vmatprep.subr.mxu0 %v648
    %2008 = vmatpush2.msra.mxu0 %v647
    %2009 = vmatprep.subr.mxu0 %v642
    %2010 = vmatpush2.msra.mxu0 %v641
    %2011 = vmatprep.mubr.f32.mxu0 %v1869
    %2012 = vmatmul.mubr.f32.gmra.mxu0 %v1865
    %v2013 = vpop.f32.mrf.mxu0
    %v2014 = vadd.f32 0.0, %v2013
    %v2015 = vpop.f32.mrf.mxu0
    %v2016 = vadd.f32 0.0, %v2015
    %2017 = vdwg.mxu0
    %2018 = vmatprep.subr.mxu0 %v638
    %2019 = vmatpush1.msra.mxu0 %v637
    %2020 = vmatprep.subr.mxu0 %v632
    %2021 = vmatpush1.msra.mxu0 %v631
    %2022 = vmatprep.subr.mxu0 %v626
    %2023 = vmatpush1.msra.mxu0 %v625
    %2024 = vmatprep.subr.mxu0 %v620
    %2025 = vmatpush1.msra.mxu0 %v619
    %2026 = vmatprep.subr.mxu0 %v614
    %2027 = vmatpush1.msra.mxu0 %v613
    %2028 = vmatprep.subr.mxu0 %v608
    %2029 = vmatpush1.msra.mxu0 %v607
    %2030 = vmatprep.subr.mxu0 %v602
    %2031 = vmatpush1.msra.mxu0 %v601
    %2032 = vmatprep.subr.mxu0 %v596
    %2033 = vmatpush1.msra.mxu0 %v595
    %2034 = vmatprep.subr.mxu0 %v590
    %2035 = vmatpush1.msra.mxu0 %v589
    %2036 = vmatprep.subr.mxu0 %v584
    %2037 = vmatpush1.msra.mxu0 %v583
    %2038 = vmatprep.subr.mxu0 %v578
    %2039 = vmatpush1.msra.mxu0 %v577
    %2040 = vmatprep.subr.mxu0 %v572
    %2041 = vmatpush1.msra.mxu0 %v571
    %2042 = vmatprep.subr.mxu0 %v566
    %2043 = vmatpush1.msra.mxu0 %v565
    %2044 = vmatprep.subr.mxu0 %v560
    %2045 = vmatpush1.msra.mxu0 %v559
    %2046 = vmatprep.subr.mxu0 %v554
    %2047 = vmatpush1.msra.mxu0 %v553
    %2048 = vmatprep.subr.mxu0 %v548
    %2049 = vmatpush1.msra.mxu0 %v547
    %2050 = vmatprep.subr.mxu0 %v734
    %2051 = vmatpush2.msra.mxu0 %v733
    %2052 = vmatprep.subr.mxu0 %v728
    %2053 = vmatpush2.msra.mxu0 %v727
    %2054 = vmatprep.subr.mxu0 %v722
    %2055 = vmatpush2.msra.mxu0 %v721
    %2056 = vmatprep.subr.mxu0 %v716
    %2057 = vmatpush2.msra.mxu0 %v715
    %2058 = vmatprep.subr.mxu0 %v710
    %2059 = vmatpush2.msra.mxu0 %v709
    %2060 = vmatprep.subr.mxu0 %v704
    %2061 = vmatpush2.msra.mxu0 %v703
    %2062 = vmatprep.subr.mxu0 %v698
    %2063 = vmatpush2.msra.mxu0 %v697
    %2064 = vmatprep.subr.mxu0 %v692
    %2065 = vmatpush2.msra.mxu0 %v691
    %2066 = vmatprep.subr.mxu0 %v686
    %2067 = vmatpush2.msra.mxu0 %v685
    %2068 = vmatprep.subr.mxu0 %v680
    %2069 = vmatpush2.msra.mxu0 %v679
    %2070 = vmatprep.subr.mxu0 %v674
    %2071 = vmatpush2.msra.mxu0 %v673
    %2072 = vmatprep.subr.mxu0 %v668
    %2073 = vmatpush2.msra.mxu0 %v667
    %2074 = vmatprep.subr.mxu0 %v662
    %2075 = vmatpush2.msra.mxu0 %v661
    %2076 = vmatprep.subr.mxu0 %v656
    %2077 = vmatpush2.msra.mxu0 %v655
    %2078 = vmatprep.subr.mxu0 %v650
    %2079 = vmatpush2.msra.mxu0 %v649
    %2080 = vmatprep.subr.mxu0 %v644
    %2081 = vmatpush2.msra.mxu0 %v643
    %2082 = vmatprep.mubr.f32.mxu0 %v1869
    %2083 = vmatmul.mubr.f32.gmra.mxu0 %v1865
    %v2084 = vpop.f32.mrf.mxu0
    %v2085 = vadd.f32 0.0, %v2084
    %v2086 = vpop.f32.mrf.mxu0
    %v2087 = vadd.f32 0.0, %v2086
    %2088 = vdwg.mxu0
    %v2089 = vadd.f32 %v1870, %v1943
    %v2090 = vxor.u32 %v2089, 2147483648
    %v2091 = vmul.f32 %v2090, 1.442695
    %v2092 = vpow.pop %v2091
    %v2093 = vadd.f32 %v2092, 1.0
    %v2094 = vrcp.pop %v2093
    %v2095 = vmul.f32 1.0, %v2094
    %v2096 = vadd.f32 %v1871, %v1945
    %v2097 = vxor.u32 %v2096, 2147483648
    %v2098 = vmul.f32 %v2097, 1.442695
    %v2099 = vpow.pop %v2098
    %v2100 = vadd.f32 %v2099, 1.0
    %v2101 = vrcp.pop %v2100
    %v2102 = vmul.f32 1.0, %v2101
    %v2103 = vadd.f32 %v2014, %v981
    %v2104 = vmul.f32 %v2095, %v2103
    %v2105 = vadd.f32 %v1872, %v2104
    %v2106 = vtanh.pop %v2105
    %v2107 = vsub.f32 1.0, %v2102
    %v2108 = vmul.f32 %v2107, %v2106
    %v2109 = vmul.f32 %v2102, %v1865
    %v2110 = vadd.f32 %v2108, %v2109
    %v2111 = vadd.f32 %v1873, %v2016
    %v2112 = vxor.u32 %v2111, 2147483648
    %v2113 = vmul.f32 %v2112, 1.442695
    %v2114 = vpow.pop %v2113
    %v2115 = vadd.f32 %v2114, 1.0
    %v2116 = vrcp.pop %v2115
    %v2117 = vmul.f32 1.0, %v2116
    %v2118 = vadd.f32 %v1874, %v2085
    %v2119 = vxor.u32 %v2118, 2147483648
    %v2120 = vmul.f32 %v2119, 1.442695
    %v2121 = vpow.pop %v2120
    %v2122 = vadd.f32 %v2121, 1.0
    %v2123 = vrcp.pop %v2122
    %v2124 = vmul.f32 1.0, %v2123
    %v2125 = vadd.f32 %v2087, %v1009
    %v2126 = vmul.f32 %v2117, %v2125
    %v2127 = vadd.f32 %v1875, %v2126
    %v2128 = vtanh.pop %v2127
    %v2129 = vsub.f32 1.0, %v2124
    %v2130 = vmul.f32 %v2129, %v2128
    %v2131 = vmul.f32 %v2124, %v1869
    %v2132 = vadd.f32 %v2130, %v2131
    %v2133 = vmul.f32 %v1604, %v2110
    %v2134 = vmul.f32 %v1867, %v1865
    %v2135 = vadd.f32 %v2133, %v2134
    %v2136 = vmul.f32 %v1602, %v2132
    %v2137 = vmul.f32 %v1863, %v1869
    %v2138 = vadd.f32 %v2136, %v2137
    %v2139 = vld [vmem:[%s1316] sm:$0xff]
    %v2140 = vld [vmem:[%s1316 + $0x8] sm:$0xff]
    %v2141 = vld [vmem:[%s1316 + $0x10] sm:$0xff]
    %v2142 = vld [vmem:[%s1310 + $0x18] sm:$0xff]
    %v2143 = vld [vmem:[%s1310 + $0x20] sm:$0xff]
    %v2144 = vld [vmem:[%s1310 + $0x28] sm:$0xff]
    %2145 = vmatprep.subr.mxu0 %v634
    %2146 = vmatpush1.msra.mxu0 %v633
    %2147 = vmatprep.subr.mxu0 %v628
    %2148 = vmatpush1.msra.mxu0 %v627
    %2149 = vmatprep.subr.mxu0 %v622
    %2150 = vmatpush1.msra.mxu0 %v621
    %2151 = vmatprep.subr.mxu0 %v616
    %2152 = vmatpush1.msra.mxu0 %v615
    %2153 = vmatprep.subr.mxu0 %v610
    %2154 = vmatpush1.msra.mxu0 %v609
    %2155 = vmatprep.subr.mxu0 %v604
    %2156 = vmatpush1.msra.mxu0 %v603
    %2157 = vmatprep.subr.mxu0 %v598
    %2158 = vmatpush1.msra.mxu0 %v597
    %2159 = vmatprep.subr.mxu0 %v592
    %2160 = vmatpush1.msra.mxu0 %v591
    %2161 = vmatprep.subr.mxu0 %v586
    %2162 = vmatpush1.msra.mxu0 %v585
    %2163 = vmatprep.subr.mxu0 %v580
    %2164 = vmatpush1.msra.mxu0 %v579
    %2165 = vmatprep.subr.mxu0 %v574
    %2166 = vmatpush1.msra.mxu0 %v573
    %2167 = vmatprep.subr.mxu0 %v568
    %2168 = vmatpush1.msra.mxu0 %v567
    %2169 = vmatprep.subr.mxu0 %v562
    %2170 = vmatpush1.msra.mxu0 %v561
    %2171 = vmatprep.subr.mxu0 %v556
    %2172 = vmatpush1.msra.mxu0 %v555
    %2173 = vmatprep.subr.mxu0 %v550
    %2174 = vmatpush1.msra.mxu0 %v549
    %2175 = vmatprep.subr.mxu0 %v544
    %2176 = vmatpush1.msra.mxu0 %v543
    %2177 = vmatprep.subr.mxu0 %v730
    %2178 = vmatpush2.msra.mxu0 %v729
    %2179 = vmatprep.subr.mxu0 %v724
    %2180 = vmatpush2.msra.mxu0 %v723
    %2181 = vmatprep.subr.mxu0 %v718
    %2182 = vmatpush2.msra.mxu0 %v717
    %2183 = vmatprep.subr.mxu0 %v712
    %2184 = vmatpush2.msra.mxu0 %v711
    %2185 = vmatprep.subr.mxu0 %v706
    %2186 = vmatpush2.msra.mxu0 %v705
    %2187 = vmatprep.subr.mxu0 %v700
    %2188 = vmatpush2.msra.mxu0 %v699
    %2189 = vmatprep.subr.mxu0 %v694
    %2190 = vmatpush2.msra.mxu0 %v693
    %2191 = vmatprep.subr.mxu0 %v688
    %2192 = vmatpush2.msra.mxu0 %v687
    %2193 = vmatprep.subr.mxu0 %v682
    %2194 = vmatpush2.msra.mxu0 %v681
    %2195 = vmatprep.subr.mxu0 %v676
    %2196 = vmatpush2.msra.mxu0 %v675
    %2197 = vmatprep.subr.mxu0 %v670
    %2198 = vmatpush2.msra.mxu0 %v669
    %2199 = vmatprep.subr.mxu0 %v664
    %2200 = vmatpush2.msra.mxu0 %v663
    %2201 = vmatprep.subr.mxu0 %v658
    %2202 = vmatpush2.msra.mxu0 %v657
    %2203 = vmatprep.subr.mxu0 %v652
    %2204 = vmatpush2.msra.mxu0 %v651
    %2205 = vmatprep.subr.mxu0 %v646
    %2206 = vmatpush2.msra.mxu0 %v645
    %2207 = vmatprep.subr.mxu0 %v640
    %2208 = vmatpush2.msra.mxu0 %v639
    %2209 = vmatprep.mubr.f32.mxu0 %v2138
    %2210 = vmatmul.mubr.f32.gmra.mxu0 %v2135
    %v2211 = vpop.f32.mrf.mxu0
    %v2212 = vadd.f32 0.0, %v2211
    %v2213 = vpop.f32.mrf.mxu0
    %v2214 = vadd.f32 0.0, %v2213
    %2215 = vdwg.mxu0
    %2216 = vmatprep.subr.mxu0 %v636
    %2217 = vmatpush1.msra.mxu0 %v635
    %2218 = vmatprep.subr.mxu0 %v630
    %2219 = vmatpush1.msra.mxu0 %v629
    %2220 = vmatprep.subr.mxu0 %v624
    %2221 = vmatpush1.msra.mxu0 %v623
    %2222 = vmatprep.subr.mxu0 %v618
    %2223 = vmatpush1.msra.mxu0 %v617
    %2224 = vmatprep.subr.mxu0 %v612
    %2225 = vmatpush1.msra.mxu0 %v611
    %2226 = vmatprep.subr.mxu0 %v606
    %2227 = vmatpush1.msra.mxu0 %v605
    %2228 = vmatprep.subr.mxu0 %v600
    %2229 = vmatpush1.msra.mxu0 %v599
    %2230 = vmatprep.subr.mxu0 %v594
    %2231 = vmatpush1.msra.mxu0 %v593
    %2232 = vmatprep.subr.mxu0 %v588
    %2233 = vmatpush1.msra.mxu0 %v587
    %2234 = vmatprep.subr.mxu0 %v582
    %2235 = vmatpush1.msra.mxu0 %v581
    %2236 = vmatprep.subr.mxu0 %v576
    %2237 = vmatpush1.msra.mxu0 %v575
    %2238 = vmatprep.subr.mxu0 %v570
    %2239 = vmatpush1.msra.mxu0 %v569
    %2240 = vmatprep.subr.mxu0 %v564
    %2241 = vmatpush1.msra.mxu0 %v563
    %2242 = vmatprep.subr.mxu0 %v558
    %2243 = vmatpush1.msra.mxu0 %v557
    %2244 = vmatprep.subr.mxu0 %v552
    %2245 = vmatpush1.msra.mxu0 %v551
    %2246 = vmatprep.subr.mxu0 %v546
    %2247 = vmatpush1.msra.mxu0 %v545
    %2248 = vmatprep.subr.mxu0 %v732
    %2249 = vmatpush2.msra.mxu0 %v731
    %2250 = vmatprep.subr.mxu0 %v726
    %2251 = vmatpush2.msra.mxu0 %v725
    %2252 = vmatprep.subr.mxu0 %v720
    %2253 = vmatpush2.msra.mxu0 %v719
    %2254 = vmatprep.subr.mxu0 %v714
    %2255 = vmatpush2.msra.mxu0 %v713
    %2256 = vmatprep.subr.mxu0 %v708
    %2257 = vmatpush2.msra.mxu0 %v707
    %2258 = vmatprep.subr.mxu0 %v702
    %2259 = vmatpush2.msra.mxu0 %v701
    %2260 = vmatprep.subr.mxu0 %v696
    %2261 = vmatpush2.msra.mxu0 %v695
    %2262 = vmatprep.subr.mxu0 %v690
    %2263 = vmatpush2.msra.mxu0 %v689
    %2264 = vmatprep.subr.mxu0 %v684
    %2265 = vmatpush2.msra.mxu0 %v683
    %2266 = vmatprep.subr.mxu0 %v678
    %2267 = vmatpush2.msra.mxu0 %v677
    %2268 = vmatprep.subr.mxu0 %v672
    %2269 = vmatpush2.msra.mxu0 %v671
    %2270 = vmatprep.subr.mxu0 %v666
    %2271 = vmatpush2.msra.mxu0 %v665
    %2272 = vmatprep.subr.mxu0 %v660
    %2273 = vmatpush2.msra.mxu0 %v659
    %2274 = vmatprep.subr.mxu0 %v654
    %2275 = vmatpush2.msra.mxu0 %v653
    %2276 = vmatprep.subr.mxu0 %v648
    %2277 = vmatpush2.msra.mxu0 %v647
    %2278 = vmatprep.subr.mxu0 %v642
    %2279 = vmatpush2.msra.mxu0 %v641
    %2280 = vmatprep.mubr.f32.mxu0 %v2138
    %2281 = vmatmul.mubr.f32.gmra.mxu0 %v2135
    %v2282 = vpop.f32.mrf.mxu0
    %v2283 = vadd.f32 0.0, %v2282
    %v2284 = vpop.f32.mrf.mxu0
    %v2285 = vadd.f32 0.0, %v2284
    %2286 = vdwg.mxu0
    %2287 = vmatprep.subr.mxu0 %v638
    %2288 = vmatpush1.msra.mxu0 %v637
    %2289 = vmatprep.subr.mxu0 %v632
    %2290 = vmatpush1.msra.mxu0 %v631
    %2291 = vmatprep.subr.mxu0 %v626
    %2292 = vmatpush1.msra.mxu0 %v625
    %2293 = vmatprep.subr.mxu0 %v620
    %2294 = vmatpush1.msra.mxu0 %v619
    %2295 = vmatprep.subr.mxu0 %v614
    %2296 = vmatpush1.msra.mxu0 %v613
    %2297 = vmatprep.subr.mxu0 %v608
    %2298 = vmatpush1.msra.mxu0 %v607
    %2299 = vmatprep.subr.mxu0 %v602
    %2300 = vmatpush1.msra.mxu0 %v601
    %2301 = vmatprep.subr.mxu0 %v596
    %2302 = vmatpush1.msra.mxu0 %v595
    %2303 = vmatprep.subr.mxu0 %v590
    %2304 = vmatpush1.msra.mxu0 %v589
    %2305 = vmatprep.subr.mxu0 %v584
    %2306 = vmatpush1.msra.mxu0 %v583
    %2307 = vmatprep.subr.mxu0 %v578
    %2308 = vmatpush1.msra.mxu0 %v577
    %2309 = vmatprep.subr.mxu0 %v572
    %2310 = vmatpush1.msra.mxu0 %v571
    %2311 = vmatprep.subr.mxu0 %v566
    %2312 = vmatpush1.msra.mxu0 %v565
    %2313 = vmatprep.subr.mxu0 %v560
    %2314 = vmatpush1.msra.mxu0 %v559
    %2315 = vmatprep.subr.mxu0 %v554
    %2316 = vmatpush1.msra.mxu0 %v553
    %2317 = vmatprep.subr.mxu0 %v548
    %2318 = vmatpush1.msra.mxu0 %v547
    %2319 = vmatprep.subr.mxu0 %v734
    %2320 = vmatpush2.msra.mxu0 %v733
    %2321 = vmatprep.subr.mxu0 %v728
    %2322 = vmatpush2.msra.mxu0 %v727
    %2323 = vmatprep.subr.mxu0 %v722
    %2324 = vmatpush2.msra.mxu0 %v721
    %2325 = vmatprep.subr.mxu0 %v716
    %2326 = vmatpush2.msra.mxu0 %v715
    %2327 = vmatprep.subr.mxu0 %v710
    %2328 = vmatpush2.msra.mxu0 %v709
    %2329 = vmatprep.subr.mxu0 %v704
    %2330 = vmatpush2.msra.mxu0 %v703
    %2331 = vmatprep.subr.mxu0 %v698
    %2332 = vmatpush2.msra.mxu0 %v697
    %2333 = vmatprep.subr.mxu0 %v692
    %2334 = vmatpush2.msra.mxu0 %v691
    %2335 = vmatprep.subr.mxu0 %v686
    %2336 = vmatpush2.msra.mxu0 %v685
    %2337 = vmatprep.subr.mxu0 %v680
    %2338 = vmatpush2.msra.mxu0 %v679
    %2339 = vmatprep.subr.mxu0 %v674
    %2340 = vmatpush2.msra.mxu0 %v673
    %2341 = vmatprep.subr.mxu0 %v668
    %2342 = vmatpush2.msra.mxu0 %v667
    %2343 = vmatprep.subr.mxu0 %v662
    %2344 = vmatpush2.msra.mxu0 %v661
    %2345 = vmatprep.subr.mxu0 %v656
    %2346 = vmatpush2.msra.mxu0 %v655
    %2347 = vmatprep.subr.mxu0 %v650
    %2348 = vmatpush2.msra.mxu0 %v649
    %2349 = vmatprep.subr.mxu0 %v644
    %2350 = vmatpush2.msra.mxu0 %v643
    %2351 = vmatprep.mubr.f32.mxu0 %v2138
    %2352 = vmatmul.mubr.f32.gmra.mxu0 %v2135
    %v2353 = vpop.f32.mrf.mxu0
    %v2354 = vadd.f32 0.0, %v2353
    %v2355 = vpop.f32.mrf.mxu0
    %v2356 = vadd.f32 0.0, %v2355
    %2357 = vdwg.mxu0
    %v2358 = vadd.f32 %v2139, %v2212
    %v2359 = vxor.u32 %v2358, 2147483648
    %v2360 = vmul.f32 %v2359, 1.442695
    %v2361 = vpow.pop %v2360
    %v2362 = vadd.f32 %v2361, 1.0
    %v2363 = vrcp.pop %v2362
    %v2364 = vmul.f32 1.0, %v2363
    %v2365 = vadd.f32 %v2140, %v2214
    %v2366 = vxor.u32 %v2365, 2147483648
    %v2367 = vmul.f32 %v2366, 1.442695
    %v2368 = vpow.pop %v2367
    %v2369 = vadd.f32 %v2368, 1.0
    %v2370 = vrcp.pop %v2369
    %v2371 = vmul.f32 1.0, %v2370
    %v2372 = vadd.f32 %v2283, %v981
    %v2373 = vmul.f32 %v2364, %v2372
    %v2374 = vadd.f32 %v2141, %v2373
    %v2375 = vtanh.pop %v2374
    %v2376 = vsub.f32 1.0, %v2371
    %v2377 = vmul.f32 %v2376, %v2375
    %v2378 = vmul.f32 %v2371, %v2135
    %v2379 = vadd.f32 %v2377, %v2378
    %v2380 = vadd.f32 %v2142, %v2285
    %v2381 = vxor.u32 %v2380, 2147483648
    %v2382 = vmul.f32 %v2381, 1.442695
    %v2383 = vpow.pop %v2382
    %v2384 = vadd.f32 %v2383, 1.0
    %v2385 = vrcp.pop %v2384
    %v2386 = vmul.f32 1.0, %v2385
    %v2387 = vadd.f32 %v2143, %v2354
    %v2388 = vxor.u32 %v2387, 2147483648
    %v2389 = vmul.f32 %v2388, 1.442695
    %v2390 = vpow.pop %v2389
    %v2391 = vadd.f32 %v2390, 1.0
    %v2392 = vrcp.pop %v2391
    %v2393 = vmul.f32 1.0, %v2392
    %v2394 = vadd.f32 %v2356, %v1009
    %v2395 = vmul.f32 %v2386, %v2394
    %v2396 = vadd.f32 %v2144, %v2395
    %v2397 = vtanh.pop %v2396
    %v2398 = vsub.f32 1.0, %v2393
    %v2399 = vmul.f32 %v2398, %v2397
    %v2400 = vmul.f32 %v2393, %v2138
    %v2401 = vadd.f32 %v2399, %v2400
    %v2402 = vmul.f32 %v1323, %v2379
    %v2403 = vmul.f32 %v1586, %v2135
    %v2404 = vadd.f32 %v2402, %v2403
    %v2405 = vmul.f32 %v1321, %v2401
    %v2406 = vmul.f32 %v1582, %v2138
    %v2407 = vadd.f32 %v2405, %v2406
    %v2408 = vld [vmem:[%s1035] sm:$0xff]
    %v2409 = vld [vmem:[%s1035 + $0x8] sm:$0xff]
    %v2410 = vld [vmem:[%s1035 + $0x10] sm:$0xff]
    %v2411 = vld [vmem:[%s1029 + $0x18] sm:$0xff]
    %v2412 = vld [vmem:[%s1029 + $0x20] sm:$0xff]
    %v2413 = vld [vmem:[%s1029 + $0x28] sm:$0xff]
    %2414 = vmatprep.subr.mxu0 %v634
    %2415 = vmatpush1.msra.mxu0 %v633
    %2416 = vmatprep.subr.mxu0 %v628
    %2417 = vmatpush1.msra.mxu0 %v627
    %2418 = vmatprep.subr.mxu0 %v622
    %2419 = vmatpush1.msra.mxu0 %v621
    %2420 = vmatprep.subr.mxu0 %v616
    %2421 = vmatpush1.msra.mxu0 %v615
    %2422 = vmatprep.subr.mxu0 %v610
    %2423 = vmatpush1.msra.mxu0 %v609
    %2424 = vmatprep.subr.mxu0 %v604
    %2425 = vmatpush1.msra.mxu0 %v603
    %2426 = vmatprep.subr.mxu0 %v598
    %2427 = vmatpush1.msra.mxu0 %v597
    %2428 = vmatprep.subr.mxu0 %v592
    %2429 = vmatpush1.msra.mxu0 %v591
    %2430 = vmatprep.subr.mxu0 %v586
    %2431 = vmatpush1.msra.mxu0 %v585
    %2432 = vmatprep.subr.mxu0 %v580
    %2433 = vmatpush1.msra.mxu0 %v579
    %2434 = vmatprep.subr.mxu0 %v574
    %2435 = vmatpush1.msra.mxu0 %v573
    %2436 = vmatprep.subr.mxu0 %v568
    %2437 = vmatpush1.msra.mxu0 %v567
    %2438 = vmatprep.subr.mxu0 %v562
    %2439 = vmatpush1.msra.mxu0 %v561
    %2440 = vmatprep.subr.mxu0 %v556
    %2441 = vmatpush1.msra.mxu0 %v555
    %2442 = vmatprep.subr.mxu0 %v550
    %2443 = vmatpush1.msra.mxu0 %v549
    %2444 = vmatprep.subr.mxu0 %v544
    %2445 = vmatpush1.msra.mxu0 %v543
    %2446 = vmatprep.subr.mxu0 %v730
    %2447 = vmatpush2.msra.mxu0 %v729
    %2448 = vmatprep.subr.mxu0 %v724
    %2449 = vmatpush2.msra.mxu0 %v723
    %2450 = vmatprep.subr.mxu0 %v718
    %2451 = vmatpush2.msra.mxu0 %v717
    %2452 = vmatprep.subr.mxu0 %v712
    %2453 = vmatpush2.msra.mxu0 %v711
    %2454 = vmatprep.subr.mxu0 %v706
    %2455 = vmatpush2.msra.mxu0 %v705
    %2456 = vmatprep.subr.mxu0 %v700
    %2457 = vmatpush2.msra.mxu0 %v699
    %2458 = vmatprep.subr.mxu0 %v694
    %2459 = vmatpush2.msra.mxu0 %v693
    %2460 = vmatprep.subr.mxu0 %v688
    %2461 = vmatpush2.msra.mxu0 %v687
    %2462 = vmatprep.subr.mxu0 %v682
    %2463 = vmatpush2.msra.mxu0 %v681
    %2464 = vmatprep.subr.mxu0 %v676
    %2465 = vmatpush2.msra.mxu0 %v675
    %2466 = vmatprep.subr.mxu0 %v670
    %2467 = vmatpush2.msra.mxu0 %v669
    %2468 = vmatprep.subr.mxu0 %v664
    %2469 = vmatpush2.msra.mxu0 %v663
    %2470 = vmatprep.subr.mxu0 %v658
    %2471 = vmatpush2.msra.mxu0 %v657
    %2472 = vmatprep.subr.mxu0 %v652
    %2473 = vmatpush2.msra.mxu0 %v651
    %2474 = vmatprep.subr.mxu0 %v646
    %2475 = vmatpush2.msra.mxu0 %v645
    %2476 = vmatprep.subr.mxu0 %v640
    %2477 = vmatpush2.msra.mxu0 %v639
    %2478 = vmatprep.mubr.f32.mxu0 %v2407
    %2479 = vmatmul.mubr.f32.gmra.mxu0 %v2404
    %v2480 = vpop.f32.mrf.mxu0
    %v2481 = vadd.f32 0.0, %v2480
    %v2482 = vpop.f32.mrf.mxu0
    %v2483 = vadd.f32 0.0, %v2482
    %2484 = vdwg.mxu0
    %2485 = vmatprep.subr.mxu0 %v636
    %2486 = vmatpush1.msra.mxu0 %v635
    %2487 = vmatprep.subr.mxu0 %v630
    %2488 = vmatpush1.msra.mxu0 %v629
    %2489 = vmatprep.subr.mxu0 %v624
    %2490 = vmatpush1.msra.mxu0 %v623
    %2491 = vmatprep.subr.mxu0 %v618
    %2492 = vmatpush1.msra.mxu0 %v617
    %2493 = vmatprep.subr.mxu0 %v612
    %2494 = vmatpush1.msra.mxu0 %v611
    %2495 = vmatprep.subr.mxu0 %v606
    %2496 = vmatpush1.msra.mxu0 %v605
    %2497 = vmatprep.subr.mxu0 %v600
    %2498 = vmatpush1.msra.mxu0 %v599
    %2499 = vmatprep.subr.mxu0 %v594
    %2500 = vmatpush1.msra.mxu0 %v593
    %2501 = vmatprep.subr.mxu0 %v588
    %2502 = vmatpush1.msra.mxu0 %v587
    %2503 = vmatprep.subr.mxu0 %v582
    %2504 = vmatpush1.msra.mxu0 %v581
    %2505 = vmatprep.subr.mxu0 %v576
    %2506 = vmatpush1.msra.mxu0 %v575
    %2507 = vmatprep.subr.mxu0 %v570
    %2508 = vmatpush1.msra.mxu0 %v569
    %2509 = vmatprep.subr.mxu0 %v564
    %2510 = vmatpush1.msra.mxu0 %v563
    %2511 = vmatprep.subr.mxu0 %v558
    %2512 = vmatpush1.msra.mxu0 %v557
    %2513 = vmatprep.subr.mxu0 %v552
    %2514 = vmatpush1.msra.mxu0 %v551
    %2515 = vmatprep.subr.mxu0 %v546
    %2516 = vmatpush1.msra.mxu0 %v545
    %2517 = vmatprep.subr.mxu0 %v732
    %2518 = vmatpush2.msra.mxu0 %v731
    %2519 = vmatprep.subr.mxu0 %v726
    %2520 = vmatpush2.msra.mxu0 %v725
    %2521 = vmatprep.subr.mxu0 %v720
    %2522 = vmatpush2.msra.mxu0 %v719
    %2523 = vmatprep.subr.mxu0 %v714
    %2524 = vmatpush2.msra.mxu0 %v713
    %2525 = vmatprep.subr.mxu0 %v708
    %2526 = vmatpush2.msra.mxu0 %v707
    %2527 = vmatprep.subr.mxu0 %v702
    %2528 = vmatpush2.msra.mxu0 %v701
    %2529 = vmatprep.subr.mxu0 %v696
    %2530 = vmatpush2.msra.mxu0 %v695
    %2531 = vmatprep.subr.mxu0 %v690
    %2532 = vmatpush2.msra.mxu0 %v689
    %2533 = vmatprep.subr.mxu0 %v684
    %2534 = vmatpush2.msra.mxu0 %v683
    %2535 = vmatprep.subr.mxu0 %v678
    %2536 = vmatpush2.msra.mxu0 %v677
    %2537 = vmatprep.subr.mxu0 %v672
    %2538 = vmatpush2.msra.mxu0 %v671
    %2539 = vmatprep.subr.mxu0 %v666
    %2540 = vmatpush2.msra.mxu0 %v665
    %2541 = vmatprep.subr.mxu0 %v660
    %2542 = vmatpush2.msra.mxu0 %v659
    %2543 = vmatprep.subr.mxu0 %v654
    %2544 = vmatpush2.msra.mxu0 %v653
    %2545 = vmatprep.subr.mxu0 %v648
    %2546 = vmatpush2.msra.mxu0 %v647
    %2547 = vmatprep.subr.mxu0 %v642
    %2548 = vmatpush2.msra.mxu0 %v641
    %2549 = vmatprep.mubr.f32.mxu0 %v2407
    %2550 = vmatmul.mubr.f32.gmra.mxu0 %v2404
    %v2551 = vpop.f32.mrf.mxu0
    %v2552 = vadd.f32 0.0, %v2551
    %v2553 = vpop.f32.mrf.mxu0
    %v2554 = vadd.f32 0.0, %v2553
    %2555 = vdwg.mxu0
    %2556 = vmatprep.subr.mxu0 %v638
    %2557 = vmatpush1.msra.mxu0 %v637
    %2558 = vmatprep.subr.mxu0 %v632
    %2559 = vmatpush1.msra.mxu0 %v631
    %2560 = vmatprep.subr.mxu0 %v626
    %2561 = vmatpush1.msra.mxu0 %v625
    %2562 = vmatprep.subr.mxu0 %v620
    %2563 = vmatpush1.msra.mxu0 %v619
    %2564 = vmatprep.subr.mxu0 %v614
    %2565 = vmatpush1.msra.mxu0 %v613
    %2566 = vmatprep.subr.mxu0 %v608
    %2567 = vmatpush1.msra.mxu0 %v607
    %2568 = vmatprep.subr.mxu0 %v602
    %2569 = vmatpush1.msra.mxu0 %v601
    %2570 = vmatprep.subr.mxu0 %v596
    %2571 = vmatpush1.msra.mxu0 %v595
    %2572 = vmatprep.subr.mxu0 %v590
    %2573 = vmatpush1.msra.mxu0 %v589
    %2574 = vmatprep.subr.mxu0 %v584
    %2575 = vmatpush1.msra.mxu0 %v583
    %2576 = vmatprep.subr.mxu0 %v578
    %2577 = vmatpush1.msra.mxu0 %v577
    %2578 = vmatprep.subr.mxu0 %v572
    %2579 = vmatpush1.msra.mxu0 %v571
    %2580 = vmatprep.subr.mxu0 %v566
    %2581 = vmatpush1.msra.mxu0 %v565
    %2582 = vmatprep.subr.mxu0 %v560
    %2583 = vmatpush1.msra.mxu0 %v559
    %2584 = vmatprep.subr.mxu0 %v554
    %2585 = vmatpush1.msra.mxu0 %v553
    %2586 = vmatprep.subr.mxu0 %v548
    %2587 = vmatpush1.msra.mxu0 %v547
    %2588 = vmatprep.subr.mxu0 %v734
    %2589 = vmatpush2.msra.mxu0 %v733
    %2590 = vmatprep.subr.mxu0 %v728
    %2591 = vmatpush2.msra.mxu0 %v727
    %2592 = vmatprep.subr.mxu0 %v722
    %2593 = vmatpush2.msra.mxu0 %v721
    %2594 = vmatprep.subr.mxu0 %v716
    %2595 = vmatpush2.msra.mxu0 %v715
    %2596 = vmatprep.subr.mxu0 %v710
    %2597 = vmatpush2.msra.mxu0 %v709
    %2598 = vmatprep.subr.mxu0 %v704
    %2599 = vmatpush2.msra.mxu0 %v703
    %2600 = vmatprep.subr.mxu0 %v698
    %2601 = vmatpush2.msra.mxu0 %v697
    %2602 = vmatprep.subr.mxu0 %v692
    %2603 = vmatpush2.msra.mxu0 %v691
    %2604 = vmatprep.subr.mxu0 %v686
    %2605 = vmatpush2.msra.mxu0 %v685
    %2606 = vmatprep.subr.mxu0 %v680
    %2607 = vmatpush2.msra.mxu0 %v679
    %2608 = vmatprep.subr.mxu0 %v674
    %2609 = vmatpush2.msra.mxu0 %v673
    %2610 = vmatprep.subr.mxu0 %v668
    %2611 = vmatpush2.msra.mxu0 %v667
    %2612 = vmatprep.subr.mxu0 %v662
    %2613 = vmatpush2.msra.mxu0 %v661
    %2614 = vmatprep.subr.mxu0 %v656
    %2615 = vmatpush2.msra.mxu0 %v655
    %2616 = vmatprep.subr.mxu0 %v650
    %2617 = vmatpush2.msra.mxu0 %v649
    %2618 = vmatprep.subr.mxu0 %v644
    %2619 = vmatpush2.msra.mxu0 %v643
    %2620 = vmatprep.mubr.f32.mxu0 %v2407
    %2621 = vmatmul.mubr.f32.gmra.mxu0 %v2404
    %v2622 = vpop.f32.mrf.mxu0
    %v2623 = vadd.f32 0.0, %v2622
    %v2624 = vpop.f32.mrf.mxu0
    %v2625 = vadd.f32 0.0, %v2624
    %2626 = vdwg.mxu0
    %v2627 = vadd.f32 %v2408, %v2481
    %v2628 = vxor.u32 %v2627, 2147483648
    %v2629 = vmul.f32 %v2628, 1.442695
    %v2630 = vpow.pop %v2629
    %v2631 = vadd.f32 %v2630, 1.0
    %v2632 = vrcp.pop %v2631
    %v2633 = vmul.f32 1.0, %v2632
    %v2634 = vadd.f32 %v2409, %v2483
    %v2635 = vxor.u32 %v2634, 2147483648
    %v2636 = vmul.f32 %v2635, 1.442695
    %v2637 = vpow.pop %v2636
    %v2638 = vadd.f32 %v2637, 1.0
    %v2639 = vrcp.pop %v2638
    %v2640 = vmul.f32 1.0, %v2639
    %v2641 = vadd.f32 %v2552, %v981
    %v2642 = vmul.f32 %v2633, %v2641
    %v2643 = vadd.f32 %v2410, %v2642
    %v2644 = vtanh.pop %v2643
    %v2645 = vsub.f32 1.0, %v2640
    %v2646 = vmul.f32 %v2645, %v2644
    %v2647 = vmul.f32 %v2640, %v2404
    %v2648 = vadd.f32 %v2646, %v2647
    %v2649 = vadd.f32 %v2411, %v2554
    %v2650 = vxor.u32 %v2649, 2147483648
    %v2651 = vmul.f32 %v2650, 1.442695
    %v2652 = vpow.pop %v2651
    %v2653 = vadd.f32 %v2652, 1.0
    %v2654 = vrcp.pop %v2653
    %v2655 = vmul.f32 1.0, %v2654
    %v2656 = vadd.f32 %v2412, %v2623
    %v2657 = vxor.u32 %v2656, 2147483648
    %v2658 = vmul.f32 %v2657, 1.442695
    %v2659 = vpow.pop %v2658
    %v2660 = vadd.f32 %v2659, 1.0
    %v2661 = vrcp.pop %v2660
    %v2662 = vmul.f32 1.0, %v2661
    %v2663 = vadd.f32 %v2625, %v1009
    %v2664 = vmul.f32 %v2655, %v2663
    %v2665 = vadd.f32 %v2413, %v2664
    %v2666 = vtanh.pop %v2665
    %v2667 = vsub.f32 1.0, %v2662
    %v2668 = vmul.f32 %v2667, %v2666
    %v2669 = vmul.f32 %v2662, %v2407
    %v2670 = vadd.f32 %v2668, %v2669
    %v2671 = vmul.f32 %v1042, %v2648
    %v2672 = vmul.f32 %v1305, %v2404
    %v2673 = vadd.f32 %v2671, %v2672
    %v2674 = vmul.f32 %v1040, %v2670
    %v2675 = vmul.f32 %v1301, %v2407
    %v2676 = vadd.f32 %v2674, %v2675
    %v2677 = vld [vmem:[%s743] sm:$0xff]
    %v2678 = vld [vmem:[%s743 + $0x8] sm:$0xff]
    %v2679 = vld [vmem:[%s743 + $0x10] sm:$0xff]
    %v2680 = vld [vmem:[%s737 + $0x18] sm:$0xff]
    %v2681 = vld [vmem:[%s737 + $0x20] sm:$0xff]
    %v2682 = vld [vmem:[%s737 + $0x28] sm:$0xff]
    %2683 = vmatprep.subr.mxu0 %v634
    %2684 = vmatpush1.msra.mxu0 %v633
    %2685 = vmatprep.subr.mxu0 %v628
    %2686 = vmatpush1.msra.mxu0 %v627
    %2687 = vmatprep.subr.mxu0 %v622
    %2688 = vmatpush1.msra.mxu0 %v621
    %2689 = vmatprep.subr.mxu0 %v616
    %2690 = vmatpush1.msra.mxu0 %v615
    %2691 = vmatprep.subr.mxu0 %v610
    %2692 = vmatpush1.msra.mxu0 %v609
    %2693 = vmatprep.subr.mxu0 %v604
    %2694 = vmatpush1.msra.mxu0 %v603
    %2695 = vmatprep.subr.mxu0 %v598
    %2696 = vmatpush1.msra.mxu0 %v597
    %2697 = vmatprep.subr.mxu0 %v592
    %2698 = vmatpush1.msra.mxu0 %v591
    %2699 = vmatprep.subr.mxu0 %v586
    %2700 = vmatpush1.msra.mxu0 %v585
    %2701 = vmatprep.subr.mxu0 %v580
    %2702 = vmatpush1.msra.mxu0 %v579
    %2703 = vmatprep.subr.mxu0 %v574
    %2704 = vmatpush1.msra.mxu0 %v573
    %2705 = vmatprep.subr.mxu0 %v568
    %2706 = vmatpush1.msra.mxu0 %v567
    %2707 = vmatprep.subr.mxu0 %v562
    %2708 = vmatpush1.msra.mxu0 %v561
    %2709 = vmatprep.subr.mxu0 %v556
    %2710 = vmatpush1.msra.mxu0 %v555
    %2711 = vmatprep.subr.mxu0 %v550
    %2712 = vmatpush1.msra.mxu0 %v549
    %2713 = vmatprep.subr.mxu0 %v544
    %2714 = vmatpush1.msra.mxu0 %v543
    %2715 = vmatprep.subr.mxu0 %v730
    %2716 = vmatpush2.msra.mxu0 %v729
    %2717 = vmatprep.subr.mxu0 %v724
    %2718 = vmatpush2.msra.mxu0 %v723
    %2719 = vmatprep.subr.mxu0 %v718
    %2720 = vmatpush2.msra.mxu0 %v717
    %2721 = vmatprep.subr.mxu0 %v712
    %2722 = vmatpush2.msra.mxu0 %v711
    %2723 = vmatprep.subr.mxu0 %v706
    %2724 = vmatpush2.msra.mxu0 %v705
    %2725 = vmatprep.subr.mxu0 %v700
    %2726 = vmatpush2.msra.mxu0 %v699
    %2727 = vmatprep.subr.mxu0 %v694
    %2728 = vmatpush2.msra.mxu0 %v693
    %2729 = vmatprep.subr.mxu0 %v688
    %2730 = vmatpush2.msra.mxu0 %v687
    %2731 = vmatprep.subr.mxu0 %v682
    %2732 = vmatpush2.msra.mxu0 %v681
    %2733 = vmatprep.subr.mxu0 %v676
    %2734 = vmatpush2.msra.mxu0 %v675
    %2735 = vmatprep.subr.mxu0 %v670
    %2736 = vmatpush2.msra.mxu0 %v669
    %2737 = vmatprep.subr.mxu0 %v664
    %2738 = vmatpush2.msra.mxu0 %v663
    %2739 = vmatprep.subr.mxu0 %v658
    %2740 = vmatpush2.msra.mxu0 %v657
    %2741 = vmatprep.subr.mxu0 %v652
    %2742 = vmatpush2.msra.mxu0 %v651
    %2743 = vmatprep.subr.mxu0 %v646
    %2744 = vmatpush2.msra.mxu0 %v645
    %2745 = vmatprep.subr.mxu0 %v640
    %2746 = vmatpush2.msra.mxu0 %v639
    %2747 = vmatprep.mubr.f32.mxu0 %v2676
    %2748 = vmatmul.mubr.f32.gmra.mxu0 %v2673
    %v2749 = vpop.f32.mrf.mxu0
    %v2750 = vadd.f32 0.0, %v2749
    %v2751 = vpop.f32.mrf.mxu0
    %v2752 = vadd.f32 0.0, %v2751
    %2753 = vdwg.mxu0
    %2754 = vmatprep.subr.mxu0 %v636
    %2755 = vmatpush1.msra.mxu0 %v635
    %2756 = vmatprep.subr.mxu0 %v630
    %2757 = vmatpush1.msra.mxu0 %v629
    %2758 = vmatprep.subr.mxu0 %v624
    %2759 = vmatpush1.msra.mxu0 %v623
    %2760 = vmatprep.subr.mxu0 %v618
    %2761 = vmatpush1.msra.mxu0 %v617
    %2762 = vmatprep.subr.mxu0 %v612
    %2763 = vmatpush1.msra.mxu0 %v611
    %2764 = vmatprep.subr.mxu0 %v606
    %2765 = vmatpush1.msra.mxu0 %v605
    %2766 = vmatprep.subr.mxu0 %v600
    %2767 = vmatpush1.msra.mxu0 %v599
    %2768 = vmatprep.subr.mxu0 %v594
    %2769 = vmatpush1.msra.mxu0 %v593
    %2770 = vmatprep.subr.mxu0 %v588
    %2771 = vmatpush1.msra.mxu0 %v587
    %2772 = vmatprep.subr.mxu0 %v582
    %2773 = vmatpush1.msra.mxu0 %v581
    %2774 = vmatprep.subr.mxu0 %v576
    %2775 = vmatpush1.msra.mxu0 %v575
    %2776 = vmatprep.subr.mxu0 %v570
    %2777 = vmatpush1.msra.mxu0 %v569
    %2778 = vmatprep.subr.mxu0 %v564
    %2779 = vmatpush1.msra.mxu0 %v563
    %2780 = vmatprep.subr.mxu0 %v558
    %2781 = vmatpush1.msra.mxu0 %v557
    %2782 = vmatprep.subr.mxu0 %v552
    %2783 = vmatpush1.msra.mxu0 %v551
    %2784 = vmatprep.subr.mxu0 %v546
    %2785 = vmatpush1.msra.mxu0 %v545
    %2786 = vmatprep.subr.mxu0 %v732
    %2787 = vmatpush2.msra.mxu0 %v731
    %2788 = vmatprep.subr.mxu0 %v726
    %2789 = vmatpush2.msra.mxu0 %v725
    %2790 = vmatprep.subr.mxu0 %v720
    %2791 = vmatpush2.msra.mxu0 %v719
    %2792 = vmatprep.subr.mxu0 %v714
    %2793 = vmatpush2.msra.mxu0 %v713
    %2794 = vmatprep.subr.mxu0 %v708
    %2795 = vmatpush2.msra.mxu0 %v707
    %2796 = vmatprep.subr.mxu0 %v702
    %2797 = vmatpush2.msra.mxu0 %v701
    %2798 = vmatprep.subr.mxu0 %v696
    %2799 = vmatpush2.msra.mxu0 %v695
    %2800 = vmatprep.subr.mxu0 %v690
    %2801 = vmatpush2.msra.mxu0 %v689
    %2802 = vmatprep.subr.mxu0 %v684
    %2803 = vmatpush2.msra.mxu0 %v683
    %2804 = vmatprep.subr.mxu0 %v678
    %2805 = vmatpush2.msra.mxu0 %v677
    %2806 = vmatprep.subr.mxu0 %v672
    %2807 = vmatpush2.msra.mxu0 %v671
    %2808 = vmatprep.subr.mxu0 %v666
    %2809 = vmatpush2.msra.mxu0 %v665
    %2810 = vmatprep.subr.mxu0 %v660
    %2811 = vmatpush2.msra.mxu0 %v659
    %2812 = vmatprep.subr.mxu0 %v654
    %2813 = vmatpush2.msra.mxu0 %v653
    %2814 = vmatprep.subr.mxu0 %v648
    %2815 = vmatpush2.msra.mxu0 %v647
    %2816 = vmatprep.subr.mxu0 %v642
    %2817 = vmatpush2.msra.mxu0 %v641
    %2818 = vmatprep.mubr.f32.mxu0 %v2676
    %2819 = vmatmul.mubr.f32.gmra.mxu0 %v2673
    %v2820 = vpop.f32.mrf.mxu0
    %v2821 = vadd.f32 0.0, %v2820
    %v2822 = vpop.f32.mrf.mxu0
    %v2823 = vadd.f32 0.0, %v2822
    %2824 = vdwg.mxu0
    %2825 = vmatprep.subr.mxu0 %v638
    %2826 = vmatpush1.msra.mxu0 %v637
    %2827 = vmatprep.subr.mxu0 %v632
    %2828 = vmatpush1.msra.mxu0 %v631
    %2829 = vmatprep.subr.mxu0 %v626
    %2830 = vmatpush1.msra.mxu0 %v625
    %2831 = vmatprep.subr.mxu0 %v620
    %2832 = vmatpush1.msra.mxu0 %v619
    %2833 = vmatprep.subr.mxu0 %v614
    %2834 = vmatpush1.msra.mxu0 %v613
    %2835 = vmatprep.subr.mxu0 %v608
    %2836 = vmatpush1.msra.mxu0 %v607
    %2837 = vmatprep.subr.mxu0 %v602
    %2838 = vmatpush1.msra.mxu0 %v601
    %2839 = vmatprep.subr.mxu0 %v596
    %2840 = vmatpush1.msra.mxu0 %v595
    %2841 = vmatprep.subr.mxu0 %v590
    %2842 = vmatpush1.msra.mxu0 %v589
    %2843 = vmatprep.subr.mxu0 %v584
    %2844 = vmatpush1.msra.mxu0 %v583
    %2845 = vmatprep.subr.mxu0 %v578
    %2846 = vmatpush1.msra.mxu0 %v577
    %2847 = vmatprep.subr.mxu0 %v572
    %2848 = vmatpush1.msra.mxu0 %v571
    %2849 = vmatprep.subr.mxu0 %v566
    %2850 = vmatpush1.msra.mxu0 %v565
    %2851 = vmatprep.subr.mxu0 %v560
    %2852 = vmatpush1.msra.mxu0 %v559
    %2853 = vmatprep.subr.mxu0 %v554
    %2854 = vmatpush1.msra.mxu0 %v553
    %2855 = vmatprep.subr.mxu0 %v548
    %2856 = vmatpush1.msra.mxu0 %v547
    %2857 = vmatprep.subr.mxu0 %v734
    %2858 = vmatpush2.msra.mxu0 %v733
    %2859 = vmatprep.subr.mxu0 %v728
    %2860 = vmatpush2.msra.mxu0 %v727
    %2861 = vmatprep.subr.mxu0 %v722
    %2862 = vmatpush2.msra.mxu0 %v721
    %2863 = vmatprep.subr.mxu0 %v716
    %2864 = vmatpush2.msra.mxu0 %v715
    %2865 = vmatprep.subr.mxu0 %v710
    %2866 = vmatpush2.msra.mxu0 %v709
    %2867 = vmatprep.subr.mxu0 %v704
    %2868 = vmatpush2.msra.mxu0 %v703
    %2869 = vmatprep.subr.mxu0 %v698
    %2870 = vmatpush2.msra.mxu0 %v697
    %2871 = vmatprep.subr.mxu0 %v692
    %2872 = vmatpush2.msra.mxu0 %v691
    %2873 = vmatprep.subr.mxu0 %v686
    %2874 = vmatpush2.msra.mxu0 %v685
    %2875 = vmatprep.subr.mxu0 %v680
    %2876 = vmatpush2.msra.mxu0 %v679
    %2877 = vmatprep.subr.mxu0 %v674
    %2878 = vmatpush2.msra.mxu0 %v673
    %2879 = vmatprep.subr.mxu0 %v668
    %2880 = vmatpush2.msra.mxu0 %v667
    %2881 = vmatprep.subr.mxu0 %v662
    %2882 = vmatpush2.msra.mxu0 %v661
    %2883 = vmatprep.subr.mxu0 %v656
    %2884 = vmatpush2.msra.mxu0 %v655
    %2885 = vmatprep.subr.mxu0 %v650
    %2886 = vmatpush2.msra.mxu0 %v649
    %2887 = vmatprep.subr.mxu0 %v644
    %2888 = vmatpush2.msra.mxu0 %v643
    %2889 = vmatprep.mubr.f32.mxu0 %v2676
    %2890 = vmatmul.mubr.f32.gmra.mxu0 %v2673
    %v2891 = vpop.f32.mrf.mxu0
    %v2892 = vadd.f32 0.0, %v2891
    %v2893 = vpop.f32.mrf.mxu0
    %v2894 = vadd.f32 0.0, %v2893
    %2895 = vdwg.mxu0
    %v2896 = vadd.f32 %v2677, %v2750
    %v2897 = vxor.u32 %v2896, 2147483648
    %v2898 = vmul.f32 %v2897, 1.442695
    %v2899 = vpow.pop %v2898
    %v2900 = vadd.f32 %v2899, 1.0
    %v2901 = vrcp.pop %v2900
    %v2902 = vmul.f32 1.0, %v2901
    %v2903 = vadd.f32 %v2678, %v2752
    %v2904 = vxor.u32 %v2903, 2147483648
    %v2905 = vmul.f32 %v2904, 1.442695
    %v2906 = vpow.pop %v2905
    %v2907 = vadd.f32 %v2906, 1.0
    %v2908 = vrcp.pop %v2907
    %v2909 = vmul.f32 1.0, %v2908
    %v2910 = vadd.f32 %v2821, %v981
    %v2911 = vmul.f32 %v2902, %v2910
    %v2912 = vadd.f32 %v2679, %v2911
    %v2913 = vtanh.pop %v2912
    %v2914 = vsub.f32 1.0, %v2909
    %v2915 = vmul.f32 %v2914, %v2913
    %v2916 = vmul.f32 %v2909, %v2673
    %v2917 = vadd.f32 %v2915, %v2916
    %v2918 = vadd.f32 %v2680, %v2823
    %v2919 = vxor.u32 %v2918, 2147483648
    %v2920 = vmul.f32 %v2919, 1.442695
    %v2921 = vpow.pop %v2920
    %v2922 = vadd.f32 %v2921, 1.0
    %v2923 = vrcp.pop %v2922
    %v2924 = vmul.f32 1.0, %v2923
    %v2925 = vadd.f32 %v2681, %v2892
    %v2926 = vxor.u32 %v2925, 2147483648
    %v2927 = vmul.f32 %v2926, 1.442695
    %v2928 = vpow.pop %v2927
    %v2929 = vadd.f32 %v2928, 1.0
    %v2930 = vrcp.pop %v2929
    %v2931 = vmul.f32 1.0, %v2930
    %v2932 = vadd.f32 %v2894, %v1009
    %v2933 = vmul.f32 %v2924, %v2932
    %v2934 = vadd.f32 %v2682, %v2933
    %v2935 = vtanh.pop %v2934
    %v2936 = vsub.f32 1.0, %v2931
    %v2937 = vmul.f32 %v2936, %v2935
    %v2938 = vmul.f32 %v2931, %v2676
    %v2939 = vadd.f32 %v2937, %v2938
    %v2940 = vmul.f32 %v749, %v2917
    %v2941 = vmul.f32 %v1024, %v2673
    %v2942 = vadd.f32 %v2940, %v2941
    %v2943 = vmul.f32 %v747, %v2939
    %v2944 = vmul.f32 %v1020, %v2676
    %v2945 = vadd.f32 %v2943, %v2944
    %v2946 = vld [vmem:[%s7] sm:$0x1]
    %v2948 = vlaneseq
    %v2949 = vshrl.u32 %v2948, 7
    %v2950 = vsub.s32 0, %v2949
    %v2951 = vrot.slane %v2946, %v2950
    %v2953 = vmul.f32 %v2942, %v2951
    %2954 = vadd.xlane.f32.xlu0 %v2953
    %v2955 = vpop.xlane.xlu0 %2954
    %v2956 = vld [vmem:[%s8] sm:$0x1]
    %v2958 = vlaneseq
    %v2959 = vshrl.u32 %v2958, 7
    %v2960 = vsub.s32 0, %v2959
    %v2961 = vrot.slane %v2956, %v2960
    %v2963 = vmul.f32 %v2945, %v2961
    %2964 = vadd.xlane.f32.xlu0 %v2963
    %v2965 = vpop.xlane.xlu0 %2964
    %v2966 = vadd.f32 %v2955, %v2965
    %v2967 = vld [vmem:[#allocation3] sm:$0x1]
    %v2969 = vlaneseq
    %v2970 = vshrl.u32 %v2969, 7
    %v2971 = vsub.s32 0, %v2970
    %v2972 = vrot.slane %v2967, %v2971
    %v2974 = vadd.f32 %v2966, %v2972
    %v2975 = vxor.u32 %v2974, 2147483648
    %v2976 = vmul.f32 %v2975, 1.442695
    %v2977 = vpow.pop %v2976
    %v2978 = vadd.f32 %v2977, 1.0
    %v2979 = vrcp.pop %v2978
    %v2980 = vmul.f32 1.0, %v2979
    %vm2981 = vcmask 7168
    %2982 = vst.msk [vmem:[%s10] sm:$0xff] %vm2981, %v2980
    // Predicated region
    $region50: #{tpu_custom_call.1} parent=1 // pred_check
      _
    $region51: #{tpu_custom_call.1} parent=1 // pred_check_branch
      %2984 = sbr.rel (0) target = $region53
    $region52: #{tpu_custom_call.1} parent=1 // pred_region
      _
    $region53: #{tpu_custom_call.1} parent=1 // pred_fallthru
      _
    // Predicated region
    $region54: #{tpu_custom_call.1} parent=1 // pred_check
      _
    $region55: #{tpu_custom_call.1} parent=1 // pred_check_branch
      %2986 = sbr.rel (0) target = $region57
    $region56: #{tpu_custom_call.1} parent=1 // pred_region
      _
    $region57: #{tpu_custom_call.1} parent=1 // pred_fallthru
      _
    %2987 = vsyncpa [#allocation5], 1
    %2988 = vsyncpa [#allocation7], 1

</llo_original>
